<compile_context>
chip_gen: v7x
topology: tpu7x:2x2x1
jax: 0.10.0
libtpu: 0.0.40
codegen_flags: <defaults>
</compile_context>

<pallas_src>
import jax
import jax.numpy as jnp
from jax.experimental import pallas as pl
from jax.experimental.pallas import tpu as pltpu


def _silu(x):
    return x * jax.nn.sigmoid(x)


def _round_up(x, m):
    return (x + m - 1) // m * m


def _pad2(a, rows, cols):
    return jnp.pad(a, ((0, rows - a.shape[0]), (0, cols - a.shape[1])))


def _make_kernel(mlp_dtype, hp):
    md = jnp.dtype(mlp_dtype)

    def kernel(rc_ref, h_ref, coord_ref, invcnt_ref,
               wnode_ref, bnode_ref, ew1r_ref, ew2_ref, eb2_ref,
               cw1_ref, cb1_ref, cw2_ref, nw1a_ref, nw2_ref, nb2_ref,
               h_out_ref, coord_out_ref,
               gsrc_s, gdst_s, nodepre_s, seg_s):
        step = pl.program_id(0)
        last = pl.num_programs(0) - 1
        te = rc_ref.shape[0]
        n = h_ref.shape[0]

        # One-time node-side work: fused projection h @ [W_src | W_dst | W_node]
        # (+ [eb1 | 0 | nb1]); build the fused gather tables and zero the
        # fused segment-sum accumulator.
        @pl.when(step == 0)
        def _init():
            h0 = h_ref[...]
            coord = coord_ref[...]
            proj = jnp.dot(h0.astype(md), wnode_ref[...],
                           preferred_element_type=jnp.float32) + bnode_ref[...]
            gsrc_s[...] = jnp.concatenate(
                [proj[:, :hp], coord], axis=1).astype(md)        # [hs | +coord]
            gdst_s[...] = jnp.concatenate(
                [proj[:, hp:2 * hp], -coord], axis=1).astype(md)  # [hd | -coord]
            nodepre_s[...] = proj[:, 2 * hp:]                     # h@nw1_h + nb1
            seg_s[...] = jnp.zeros_like(seg_s)

        # Per-tile one-hot gather/scatter matrices in mlp_dtype (0/1 exact in
        # bf16).  Padded edges carry sentinel index n -> all-zero rows -> they
        # contribute nothing to the scatter.
        node_ids = jax.lax.broadcasted_iota(jnp.int32, (te, n), 1)
        oh_row = (rc_ref[:, 0:1] == node_ids).astype(md)          # [TE, N]
        oh_col = (rc_ref[:, 1:2] == node_ids).astype(md)          # [TE, N]

        # Fused 256-wide gather: columns [0:Hp] -> edge-MLP layer-1 partials,
        # columns [Hp:] -> coord_diff = coord[row] - coord[col].
        g = (jnp.dot(oh_row, gsrc_s[...], preferred_element_type=jnp.float32)
             + jnp.dot(oh_col, gdst_s[...], preferred_element_type=jnp.float32))
        pre1 = g[:, :hp]
        coord_diff = g[:, hp:]                                    # [TE, Cp]
        radial = jnp.sum(coord_diff * coord_diff, axis=-1, keepdims=True)

        # Edge MLP (layer-1 node parts already gathered; radial term is VPU mul).
        t = _silu(pre1 + radial * ew1r_ref[...])
        edge_feat = _silu(jnp.dot(t.astype(md), ew2_ref[...],
                                  preferred_element_type=jnp.float32)
                          + eb2_ref[...])                         # [TE, Hp]

        # Coord MLP: final 1-col projection as VPU mul + lane reduce (no MXU).
        ch = _silu(jnp.dot(edge_feat.astype(md), cw1_ref[...],
                           preferred_element_type=jnp.float32) + cb1_ref[...])
        csc = jnp.sum(ch * cw2_ref[...], axis=-1, keepdims=True)  # [TE, 1]
        trans = coord_diff * csc                                  # [TE, Cp]

        # Fused 256-wide segment-sum scatter over this tile.
        et = jnp.concatenate([edge_feat, trans], axis=1).astype(md)  # [TE,Hp+Cp]
        dn = (((0,), (0,)), ((), ()))          # contract over the edge axis
        seg_s[...] += jax.lax.dot_general(oh_row, et, dn,
                                          preferred_element_type=jnp.float32)

        # Short finalize on the last edge tile (h-term already in nodepre_s).
        @pl.when(step == last)
        def _finalize():
            seg = seg_s[...]
            coord_out_ref[...] = coord_ref[...] + seg[:, hp:] * invcnt_ref[...]
            u = _silu(nodepre_s[...]
                      + jnp.dot(seg[:, :hp].astype(md), nw1a_ref[...],
                                preferred_element_type=jnp.float32))
            out = jnp.dot(u.astype(md), nw2_ref[...],
                          preferred_element_type=jnp.float32) + nb2_ref[...]
            h_out_ref[...] = h_ref[...] + out    # residual (input_nf == output_nf)

    return kernel


def e_gcl_forward(h, coord, row, col, p, *, tile_e=256, mlp_dtype=jnp.bfloat16,
                  single_buffer_resident=True):
    """E_GCL forward. mlp_dtype=bf16 feeds the MXU natively on v5e/v6e/v7x;
    pass jnp.float32 for full-precision matmuls. tile_e=256 fills the 2x256^2
    MXU on v6e/v7x (use 128 on v5e)."""
    N, F = h.shape
    H = p["eb1"].shape[1]
    C = coord.shape[1]
    E = row.shape[0]

    LANE = 128
    Fp, Hp, Cp = _round_up(F, LANE), _round_up(H, LANE), _round_up(C, LANE)
    TE = _round_up(max(int(tile_e), 8), 8)
    Ep = _round_up(E, TE)
    pad_e = Ep - E
    md = jnp.dtype(mlp_dtype)

    # Activations, zero-padded to lane-dense shapes (padded lanes stay zero).
    h_p = _pad2(h.astype(jnp.float32), N, Fp)
    coord_p = _pad2(coord.astype(jnp.float32), N, Cp)

    # Packed edge list [Ep, 2]; padded edges use sentinel node id N (never
    # matches the node iota -> no-op edge).
    rc = jnp.stack([row.astype(jnp.int32), col.astype(jnp.int32)], axis=1)
    rc_p = jnp.concatenate([rc, jnp.full((pad_e, 2), N, jnp.int32)], axis=0)

    # Per-node 1/count for the 'mean' coord aggregation (index-only glue).
    count = jnp.zeros((N, 1), jnp.float32).at[row].add(1.0)
    invcnt = 1.0 / jnp.maximum(count, 1.0)

    # Split / fuse / pad weights.  Matmul weights go to mlp_dtype; biases and
    # VPU-side vectors stay f32.
    ew1, nw1 = p["ew1"], p["nw1"]
    wnode = jnp.concatenate([_pad2(ew1[:F], Fp, Hp),            # edge-MLP src
                             _pad2(ew1[F:2 * F], Fp, Hp),       # edge-MLP dst
                             _pad2(nw1[:F], Fp, Hp)],           # node-MLP h
                            axis=1).astype(md)                  # [Fp, 3Hp]
    bnode = jnp.concatenate([_pad2(p["eb1"], 1, Hp),
                             jnp.zeros((1, Hp), jnp.float32),
                             _pad2(p["nb1"], 1, Hp)], axis=1)   # [1, 3Hp]
    ew1r = _pad2(ew1[2 * F:2 * F + 1], 1, Hp)
    ew2 = _pad2(p["ew2"], Hp, Hp).astype(md)
    eb2 = _pad2(p["eb2"], 1, Hp)
    cw1 = _pad2(p["cw1"], Hp, Hp).astype(md)
    cb1 = _pad2(p["cb1"], 1, Hp)
    cw2 = _pad2(p["cw2"].T, 1, Hp)             # row vector for the VPU reduce
    nw1a = _pad2(nw1[F:F + H], Hp, Hp).astype(md)
    nw2 = _pad2(p["nw2"], Hp, Fp).astype(md)
    nb2 = _pad2(p["nb2"], 1, Fp)

    resident_inputs = (h_p, coord_p, invcnt, wnode, bnode, ew1r, ew2, eb2,
                       cw1, cb1, cw2, nw1a, nw2, nb2)
    inputs = (rc_p,) + resident_inputs

    kernel = _make_kernel(md, Hp)
    out_shape = (jax.ShapeDtypeStruct((N, Fp), jnp.float32),
                 jax.ShapeDtypeStruct((N, Cp), jnp.float32))
    scratch_shapes = [pltpu.VMEM((N, Hp + Cp), md),            # [hs | +coord]
                      pltpu.VMEM((N, Hp + Cp), md),            # [hd | -coord]
                      pltpu.VMEM((N, Hp), jnp.float32),        # h@nw1_h + nb1
                      pltpu.VMEM((N, Hp + Cp), jnp.float32)]   # fused seg sums

    flops = 2 * (3 * Ep * N * (Hp + Cp) + 2 * Ep * Hp * Hp
                 + N * Fp * 3 * Hp + N * Hp * Hp + N * Hp * Fp)
    cost = pl.CostEstimate(
        flops=int(flops),
        transcendentals=int(3 * Ep * Hp + N * Hp),
        bytes_accessed=int(sum(int(a.size) * a.dtype.itemsize for a in inputs)
                           + (N * Fp + N * Cp) * 4))

    def build(single_buffer):
        buf = 1 if single_buffer else 2
        res_kw = {}
        if single_buffer and hasattr(pl, "Buffered"):
            res_kw = dict(pipeline_mode=pl.Buffered(1))
        in_specs = ([pl.BlockSpec((TE, 2), lambda i: (i, 0))]
                    + [pl.BlockSpec(a.shape, lambda i: (0, 0), **res_kw)
                       for a in resident_inputs])
        out_specs = (pl.BlockSpec((N, Fp), lambda i: (0, 0), **res_kw),
                     pl.BlockSpec((N, Cp), lambda i: (0, 0), **res_kw))

        # Honest VMEM budget: what is actually resident, not HBM totals.
        resident_bytes = sum(int(a.size) * a.dtype.itemsize
                             for a in resident_inputs)
        out_bytes = (N * Fp + N * Cp) * 4
        scratch_bytes = (2 * N * (Hp + Cp) * md.itemsize
                         + (N * Hp + N * (Hp + Cp)) * 4)
        need = (buf * (resident_bytes + out_bytes)
                + 2 * TE * 2 * 4 + scratch_bytes)
        try:
            vmem_cap = int(pltpu.get_tpu_info().vmem_capacity_bytes)
        except Exception:
            vmem_cap = 64 * 1024 * 1024                      # v7x-safe default
        vmem_limit = int(min(max(int(need * 1.25) + (4 << 20), 32 << 20),
                             (vmem_cap * 7) // 8, 100 << 20))

        return pl.pallas_call(
            kernel,
            out_shape=out_shape,
            grid_spec=pltpu.PrefetchScalarGridSpec(
                num_scalar_prefetch=0,
                grid=(Ep // TE,),
                in_specs=in_specs,
                out_specs=out_specs,
                scratch_shapes=scratch_shapes),
            compiler_params=pltpu.CompilerParams(
                dimension_semantics=("arbitrary",),   # edge axis carries acc
                vmem_limit_bytes=vmem_limit),
            cost_estimate=cost,
        )

    if single_buffer_resident:
        try:
            h_out_p, coord_out_p = build(True)(*inputs)
        except Exception:
            # Older/other Pallas versions without single-buffer pipeline_mode.
            h_out_p, coord_out_p = build(False)(*inputs)
    else:
        h_out_p, coord_out_p = build(False)(*inputs)

    return h_out_p[:, :F], coord_out_p[:, :C]


def e_gcl_ref(h, coord, row, col, p):
    """Pure-JAX reference matching the PyTorch forward."""
    h_row, h_col = h[row], h[col]
    c_diff = coord[row] - coord[col]
    radial = jnp.sum(c_diff ** 2, axis=1, keepdims=True)
    edge_in = jnp.concatenate([h_row, h_col, radial], axis=1)
    t = jax.nn.silu(edge_in @ p["ew1"] + p["eb1"])
    ef = jax.nn.silu(t @ p["ew2"] + p["eb2"])
    ch = jax.nn.silu(ef @ p["cw1"] + p["cb1"])
    trans = c_diff * (ch @ p["cw2"])
    N = h.shape[0]
    seg_t = jnp.zeros((N, 3), jnp.float32).at[row].add(trans)
    cnt = jnp.zeros((N, 1), jnp.float32).at[row].add(jnp.ones((row.shape[0], 1)))
    coord_out = coord + seg_t / jnp.maximum(cnt, 1.0)
    seg_e = jnp.zeros((N, ef.shape[1]), jnp.float32).at[row].add(ef)
    agg = jnp.concatenate([h, seg_e], axis=1)
    u = jax.nn.silu(agg @ p["nw1"] + p["nb1"])
    out = u @ p["nw2"] + p["nb2"]
    return h + out, coord_out


def init_params(key, input_nf, output_nf, hidden_nf):
    ks = jax.random.split(key, 16)
    in_e = 2 * input_nf + 1  # input_edge + edge_coords_nf, edges_in_d=0

    def lin(k, fan_in, fan_out, scale=None):
        s = scale if scale is not None else (1.0 / jnp.sqrt(fan_in))
        return jax.random.uniform(k, (fan_in, fan_out), jnp.float32, -s, s)

    return dict(
        ew1=lin(ks[0], in_e, hidden_nf),
        eb1=lin(ks[1], 1, hidden_nf),
        ew2=lin(ks[2], hidden_nf, hidden_nf),
        eb2=lin(ks[3], 1, hidden_nf),
        nw1=lin(ks[4], hidden_nf + input_nf, hidden_nf),
        nb1=lin(ks[5], 1, hidden_nf),
        nw2=lin(ks[6], hidden_nf, output_nf),
        nb2=lin(ks[7], 1, output_nf),
        cw1=lin(ks[8], hidden_nf, hidden_nf),
        cb1=lin(ks[9], 1, hidden_nf),
        cw2=lin(ks[10], hidden_nf, 1, scale=0.001),  # xavier gain=0.001, no bias
    )


if __name__ == "__main__":
    N = 16                      # nodes
    F = H = 32                  # input_nf = output_nf = hidden_nf (residual)

    # Fully-connected directed graph without self loops: E = N*(N-1) = 240.
    rows, cols = [], []
    for i in range(N):
        for j in range(N):
            if i != j:
                rows.append(i)
                cols.append(j)
    row = jnp.array(rows, dtype=jnp.int32)
    col = jnp.array(cols, dtype=jnp.int32)

    key = jax.random.PRNGKey(0)
    k_h, k_c, k_p = jax.random.split(key, 3)
    h = jax.random.normal(k_h, (N, F), jnp.float32)
    coord = jax.random.normal(k_c, (N, 3), jnp.float32)
    params = init_params(k_p, F, F, H)

    h_ref, c_ref = e_gcl_ref(h, coord, row, col, params)

    # fp32 MXU path, TE=128 -> 2-step grid (exercises the accumulator carry).
    h32, c32 = e_gcl_forward(h, coord, row, col, params,
                             tile_e=128, mlp_dtype=jnp.float32)
    jax.block_until_ready((h32, c32))
    assert jnp.allclose(h32, h_ref, atol=1e-3, rtol=1e-3), "h mismatch (fp32)"
    assert jnp.allclose(c32, c_ref, atol=1e-3, rtol=1e-3), "coord mismatch (fp32)"

    # bf16 MXU path (default), TE=256 -> single step; loose tolerance per dtype.
    hbf, cbf = e_gcl_forward(h, coord, row, col, params)
    jax.block_until_ready((hbf, cbf))
    assert jnp.allclose(hbf, h_ref, atol=1e-1, rtol=1e-1), "h mismatch (bf16)"
    assert jnp.allclose(cbf, c_ref, atol=1e-1, rtol=1e-1), "coord mismatch (bf16)"

    print("KERNEL_OK")
</pallas_src>

<mosaic_0001>
module attributes {stable_mosaic.version = 11 : i64} {
  func.func @kernel(%arg0: i32, %arg1: memref<128x2xi32, #tpu.memory_space<vmem>>, %arg2: memref<16x128xf32, #tpu.memory_space<vmem>>, %arg3: memref<16x128xf32, #tpu.memory_space<vmem>>, %arg4: memref<16x1xf32, #tpu.memory_space<vmem>>, %arg5: memref<128x384xf32, #tpu.memory_space<vmem>>, %arg6: memref<1x384xf32, #tpu.memory_space<vmem>>, %arg7: memref<1x128xf32, #tpu.memory_space<vmem>>, %arg8: memref<128x128xf32, #tpu.memory_space<vmem>>, %arg9: memref<1x128xf32, #tpu.memory_space<vmem>>, %arg10: memref<128x128xf32, #tpu.memory_space<vmem>>, %arg11: memref<1x128xf32, #tpu.memory_space<vmem>>, %arg12: memref<1x128xf32, #tpu.memory_space<vmem>>, %arg13: memref<128x128xf32, #tpu.memory_space<vmem>>, %arg14: memref<128x128xf32, #tpu.memory_space<vmem>>, %arg15: memref<1x128xf32, #tpu.memory_space<vmem>>, %arg16: memref<16x128xf32, #tpu.memory_space<vmem>>, %arg17: memref<16x128xf32, #tpu.memory_space<vmem>>, %arg18: memref<16x256xf32, #tpu.memory_space<vmem>>, %arg19: memref<16x256xf32, #tpu.memory_space<vmem>>, %arg20: memref<16x128xf32, #tpu.memory_space<vmem>>, %arg21: memref<16x256xf32, #tpu.memory_space<vmem>>) attributes {dimension_semantics = [#tpu.dimension_semantics<arbitrary>], iteration_bounds = array<i64: 2>, scalar_prefetch = 0 : i64, scratch_operands = 4 : i64, tpu.core_type = #tpu.core_type<tc>, window_params = [{transform_indices = @transform_0, window_bounds = array<i64: 128, 2>}, {pipeline_mode = #tpu.pipeline_mode<synchronous>, transform_indices = @transform_1, window_bounds = array<i64: 16, 128>}, {pipeline_mode = #tpu.pipeline_mode<synchronous>, transform_indices = @transform_2, window_bounds = array<i64: 16, 128>}, {pipeline_mode = #tpu.pipeline_mode<synchronous>, transform_indices = @transform_3, window_bounds = array<i64: 16, 1>}, {pipeline_mode = #tpu.pipeline_mode<synchronous>, transform_indices = @transform_4, window_bounds = array<i64: 128, 384>}, {pipeline_mode = #tpu.pipeline_mode<synchronous>, transform_indices = @transform_5, window_bounds = array<i64: 1, 384>}, {pipeline_mode = #tpu.pipeline_mode<synchronous>, transform_indices = @transform_6, window_bounds = array<i64: 1, 128>}, {pipeline_mode = #tpu.pipeline_mode<synchronous>, transform_indices = @transform_7, window_bounds = array<i64: 128, 128>}, {pipeline_mode = #tpu.pipeline_mode<synchronous>, transform_indices = @transform_8, window_bounds = array<i64: 1, 128>}, {pipeline_mode = #tpu.pipeline_mode<synchronous>, transform_indices = @transform_9, window_bounds = array<i64: 128, 128>}, {pipeline_mode = #tpu.pipeline_mode<synchronous>, transform_indices = @transform_10, window_bounds = array<i64: 1, 128>}, {pipeline_mode = #tpu.pipeline_mode<synchronous>, transform_indices = @transform_11, window_bounds = array<i64: 1, 128>}, {pipeline_mode = #tpu.pipeline_mode<synchronous>, transform_indices = @transform_12, window_bounds = array<i64: 128, 128>}, {pipeline_mode = #tpu.pipeline_mode<synchronous>, transform_indices = @transform_13, window_bounds = array<i64: 128, 128>}, {pipeline_mode = #tpu.pipeline_mode<synchronous>, transform_indices = @transform_14, window_bounds = array<i64: 1, 128>}, {pipeline_mode = #tpu.pipeline_mode<synchronous>, transform_indices = @transform_15, window_bounds = array<i64: 16, 128>}, {pipeline_mode = #tpu.pipeline_mode<synchronous>, transform_indices = @transform_16, window_bounds = array<i64: 16, 128>}]} {
    %c0_i32 = arith.constant 0 : i32
    %0 = arith.cmpi eq, %arg0, %c0_i32 : i32
    %1 = arith.extui %0 : i1 to i32
    %c0_i32_0 = arith.constant 0 : i32
    %2 = arith.cmpi ne, %1, %c0_i32_0 : i32
    scf.if %2 {
      %c0_33 = arith.constant 0 : index
      %c0_34 = arith.constant 0 : index
      %72 = vector.load %arg2[%c0_33, %c0_34] : memref<16x128xf32, #tpu.memory_space<vmem>>, vector<16x128xf32>
      %c0_35 = arith.constant 0 : index
      %c0_36 = arith.constant 0 : index
      %73 = vector.load %arg3[%c0_35, %c0_36] : memref<16x128xf32, #tpu.memory_space<vmem>>, vector<16x128xf32>
      %c0_37 = arith.constant 0 : index
      %c0_38 = arith.constant 0 : index
      %74 = vector.load %arg5[%c0_37, %c0_38] : memref<128x384xf32, #tpu.memory_space<vmem>>, vector<128x384xf32>
      %cst_39 = arith.constant dense<0.000000e+00> : vector<16x384xf32>
      %75 = tpu.matmul %72, %74, %cst_39 {dimension_numbers = #tpu.dot_dimension_numbers<[1], [0], [0], [1], [0, 0, 1, 1], [], []>} : vector<16x128xf32>, vector<128x384xf32>, vector<16x384xf32> -> vector<16x384xf32>
      %c0_40 = arith.constant 0 : index
      %c0_41 = arith.constant 0 : index
      %76 = vector.load %arg6[%c0_40, %c0_41] : memref<1x384xf32, #tpu.memory_space<vmem>>, vector<1x384xf32>
      %77 = vector.broadcast %76 : vector<1x384xf32> to vector<16x384xf32>
      %78 = arith.addf %75, %77 : vector<16x384xf32>
      %79 = vector.extract_strided_slice %78 {offsets = [0, 0], sizes = [16, 128], strides = [1, 1]} : vector<16x384xf32> to vector<16x128xf32>
      %80 = tpu.concatenate %79, %73 in 1 : vector<16x128xf32>, vector<16x128xf32> -> vector<16x256xf32>
      %c0_42 = arith.constant 0 : index
      %c0_43 = arith.constant 0 : index
      %81 = vector.load %arg18[%c0_42, %c0_43] : memref<16x256xf32, #tpu.memory_space<vmem>>, vector<16x256xf32>
      tpu.vector_store %arg18[%c0_42, %c0_43], %80 {strides = array<i32>} : memref<16x256xf32, #tpu.memory_space<vmem>>, vector<16x256xf32>,
      %82 = vector.extract_strided_slice %78 {offsets = [0, 128], sizes = [16, 128], strides = [1, 1]} : vector<16x384xf32> to vector<16x128xf32>
      %cst_44 = arith.constant 0.000000e+00 : f32
      %83 = vector.broadcast %cst_44 : f32 to vector<16x128xf32>
      %84 = arith.subf %83, %73 : vector<16x128xf32>
      %85 = tpu.concatenate %82, %84 in 1 : vector<16x128xf32>, vector<16x128xf32> -> vector<16x256xf32>
      %c0_45 = arith.constant 0 : index
      %c0_46 = arith.constant 0 : index
      %86 = vector.load %arg19[%c0_45, %c0_46] : memref<16x256xf32, #tpu.memory_space<vmem>>, vector<16x256xf32>
      tpu.vector_store %arg19[%c0_45, %c0_46], %85 {strides = array<i32>} : memref<16x256xf32, #tpu.memory_space<vmem>>, vector<16x256xf32>,
      %87 = vector.extract_strided_slice %78 {offsets = [0, 256], sizes = [16, 128], strides = [1, 1]} : vector<16x384xf32> to vector<16x128xf32>
      %c0_47 = arith.constant 0 : index
      %c0_48 = arith.constant 0 : index
      %88 = vector.load %arg20[%c0_47, %c0_48] : memref<16x128xf32, #tpu.memory_space<vmem>>, vector<16x128xf32>
      tpu.vector_store %arg20[%c0_47, %c0_48], %87 {strides = array<i32>} : memref<16x128xf32, #tpu.memory_space<vmem>>, vector<16x128xf32>,
      %cst_49 = arith.constant 0.000000e+00 : f32
      %89 = vector.broadcast %cst_49 : f32 to vector<16x256xf32>
      %c0_50 = arith.constant 0 : index
      %c0_51 = arith.constant 0 : index
      %90 = vector.load %arg21[%c0_50, %c0_51] : memref<16x256xf32, #tpu.memory_space<vmem>>, vector<16x256xf32>
      tpu.vector_store %arg21[%c0_50, %c0_51], %89 {strides = array<i32>} : memref<16x256xf32, #tpu.memory_space<vmem>>, vector<16x256xf32>,
    } else {
    }
    %3 = tpu.iota {dimensions = array<i32: 1>} : vector<128x16xi32>
    %c0 = arith.constant 0 : index
    %c0_1 = arith.constant 0 : index
    %4 = vector.load %arg1[%c0, %c0_1] : memref<128x2xi32, #tpu.memory_space<vmem>>, vector<128x1xi32>
    %5 = vector.broadcast %4 : vector<128x1xi32> to vector<128x16xi32>
    %6 = arith.cmpi eq, %5, %3 : vector<128x16xi32>
    %7 = arith.extui %6 : vector<128x16xi1> to vector<128x16xi32>
    %8 = arith.sitofp %7 : vector<128x16xi32> to vector<128x16xf32>
    %c0_2 = arith.constant 0 : index
    %c1 = arith.constant 1 : index
    %9 = vector.load %arg1[%c0_2, %c1] : memref<128x2xi32, #tpu.memory_space<vmem>>, vector<128x1xi32>
    %10 = vector.broadcast %9 : vector<128x1xi32> to vector<128x16xi32>
    %11 = arith.cmpi eq, %10, %3 : vector<128x16xi32>
    %12 = arith.extui %11 : vector<128x16xi1> to vector<128x16xi32>
    %13 = arith.sitofp %12 : vector<128x16xi32> to vector<128x16xf32>
    %c0_3 = arith.constant 0 : index
    %c0_4 = arith.constant 0 : index
    %14 = vector.load %arg18[%c0_3, %c0_4] : memref<16x256xf32, #tpu.memory_space<vmem>>, vector<16x256xf32>
    %cst = arith.constant dense<0.000000e+00> : vector<128x256xf32>
    %15 = tpu.matmul %8, %14, %cst {dimension_numbers = #tpu.dot_dimension_numbers<[1], [0], [0], [1], [0, 0, 1, 1], [], []>} : vector<128x16xf32>, vector<16x256xf32>, vector<128x256xf32> -> vector<128x256xf32>
    %c0_5 = arith.constant 0 : index
    %c0_6 = arith.constant 0 : index
    %16 = vector.load %arg19[%c0_5, %c0_6] : memref<16x256xf32, #tpu.memory_space<vmem>>, vector<16x256xf32>
    %cst_7 = arith.constant dense<0.000000e+00> : vector<128x256xf32>
    %17 = tpu.matmul %13, %16, %cst_7 {dimension_numbers = #tpu.dot_dimension_numbers<[1], [0], [0], [1], [0, 0, 1, 1], [], []>} : vector<128x16xf32>, vector<16x256xf32>, vector<128x256xf32> -> vector<128x256xf32>
    %18 = arith.addf %15, %17 : vector<128x256xf32>
    %19 = vector.extract_strided_slice %18 {offsets = [0, 0], sizes = [128, 128], strides = [1, 1]} : vector<128x256xf32> to vector<128x128xf32>
    %20 = vector.extract_strided_slice %18 {offsets = [0, 128], sizes = [128, 128], strides = [1, 1]} : vector<128x256xf32> to vector<128x128xf32>
    %21 = arith.mulf %20, %20 : vector<128x128xf32>
    %cst_8 = arith.constant dense<0.000000e+00> : vector<128xf32>
    %22 = vector.multi_reduction <add>, %21, %cst_8 [1] : vector<128x128xf32> to vector<128xf32>
    %23 = vector.shape_cast %22 : vector<128xf32> to vector<128x1xf32>
    %c0_9 = arith.constant 0 : index
    %c0_10 = arith.constant 0 : index
    %24 = vector.load %arg7[%c0_9, %c0_10] : memref<1x128xf32, #tpu.memory_space<vmem>>, vector<1x128xf32>
    %25 = vector.broadcast %23 : vector<128x1xf32> to vector<128x128xf32>
    %26 = vector.broadcast %24 : vector<1x128xf32> to vector<128x128xf32>
    %27 = arith.mulf %25, %26 : vector<128x128xf32>
    %28 = arith.addf %19, %27 : vector<128x128xf32>
    %29 = arith.negf %28 : vector<128x128xf32>
    %30 = math.exp %29 : vector<128x128xf32>
    %cst_11 = arith.constant 1.000000e+00 : f32
    %31 = vector.broadcast %cst_11 : f32 to vector<128x128xf32>
    %32 = arith.addf %31, %30 : vector<128x128xf32>
    %33 = arith.divf %31, %32 : vector<128x128xf32>
    %34 = arith.mulf %28, %33 : vector<128x128xf32>
    %c0_12 = arith.constant 0 : index
    %c0_13 = arith.constant 0 : index
    %35 = vector.load %arg8[%c0_12, %c0_13] : memref<128x128xf32, #tpu.memory_space<vmem>>, vector<128x128xf32>
    %cst_14 = arith.constant dense<0.000000e+00> : vector<128x128xf32>
    %36 = tpu.matmul %34, %35, %cst_14 {dimension_numbers = #tpu.dot_dimension_numbers<[1], [0], [0], [1], [0, 0, 1, 1], [], []>} : vector<128x128xf32>, vector<128x128xf32>, vector<128x128xf32> -> vector<128x128xf32>
    %c0_15 = arith.constant 0 : index
    %c0_16 = arith.constant 0 : index
    %37 = vector.load %arg9[%c0_15, %c0_16] : memref<1x128xf32, #tpu.memory_space<vmem>>, vector<1x128xf32>
    %38 = vector.broadcast %37 : vector<1x128xf32> to vector<128x128xf32>
    %39 = arith.addf %36, %38 : vector<128x128xf32>
    %40 = arith.negf %39 : vector<128x128xf32>
    %41 = math.exp %40 : vector<128x128xf32>
    %cst_17 = arith.constant 1.000000e+00 : f32
    %42 = vector.broadcast %cst_17 : f32 to vector<128x128xf32>
    %43 = arith.addf %42, %41 : vector<128x128xf32>
    %44 = arith.divf %42, %43 : vector<128x128xf32>
    %45 = arith.mulf %39, %44 : vector<128x128xf32>
    %c0_18 = arith.constant 0 : index
    %c0_19 = arith.constant 0 : index
    %46 = vector.load %arg10[%c0_18, %c0_19] : memref<128x128xf32, #tpu.memory_space<vmem>>, vector<128x128xf32>
    %cst_20 = arith.constant dense<0.000000e+00> : vector<128x128xf32>
    %47 = tpu.matmul %45, %46, %cst_20 {dimension_numbers = #tpu.dot_dimension_numbers<[1], [0], [0], [1], [0, 0, 1, 1], [], []>} : vector<128x128xf32>, vector<128x128xf32>, vector<128x128xf32> -> vector<128x128xf32>
    %c0_21 = arith.constant 0 : index
    %c0_22 = arith.constant 0 : index
    %48 = vector.load %arg11[%c0_21, %c0_22] : memref<1x128xf32, #tpu.memory_space<vmem>>, vector<1x128xf32>
    %49 = vector.broadcast %48 : vector<1x128xf32> to vector<128x128xf32>
    %50 = arith.addf %47, %49 : vector<128x128xf32>
    %51 = arith.negf %50 : vector<128x128xf32>
    %52 = math.exp %51 : vector<128x128xf32>
    %cst_23 = arith.constant 1.000000e+00 : f32
    %53 = vector.broadcast %cst_23 : f32 to vector<128x128xf32>
    %54 = arith.addf %53, %52 : vector<128x128xf32>
    %55 = arith.divf %53, %54 : vector<128x128xf32>
    %56 = arith.mulf %50, %55 : vector<128x128xf32>
    %c0_24 = arith.constant 0 : index
    %c0_25 = arith.constant 0 : index
    %57 = vector.load %arg12[%c0_24, %c0_25] : memref<1x128xf32, #tpu.memory_space<vmem>>, vector<1x128xf32>
    %58 = vector.broadcast %57 : vector<1x128xf32> to vector<128x128xf32>
    %59 = arith.mulf %56, %58 : vector<128x128xf32>
    %cst_26 = arith.constant dense<0.000000e+00> : vector<128xf32>
    %60 = vector.multi_reduction <add>, %59, %cst_26 [1] : vector<128x128xf32> to vector<128xf32>
    %61 = vector.shape_cast %60 : vector<128xf32> to vector<128x1xf32>
    %62 = vector.broadcast %61 : vector<128x1xf32> to vector<128x128xf32>
    %63 = arith.mulf %20, %62 : vector<128x128xf32>
    %64 = tpu.concatenate %45, %63 in 1 : vector<128x128xf32>, vector<128x128xf32> -> vector<128x256xf32>
    %c0_27 = arith.constant 0 : index
    %c0_28 = arith.constant 0 : index
    %65 = vector.load %arg21[%c0_27, %c0_28] : memref<16x256xf32, #tpu.memory_space<vmem>>, vector<16x256xf32>
    %cst_29 = arith.constant dense<0.000000e+00> : vector<16x256xf32>
    %66 = tpu.matmul %8, %64, %cst_29 {dimension_numbers = #tpu.dot_dimension_numbers<[0], [0], [1], [1], [0, 1, 1, 1], [], []>} : vector<128x16xf32>, vector<128x256xf32>, vector<16x256xf32> -> vector<16x256xf32>
    %67 = arith.addf %65, %66 : vector<16x256xf32>
    %c0_30 = arith.constant 0 : index
    %c0_31 = arith.constant 0 : index
    %68 = vector.load %arg21[%c0_30, %c0_31] : memref<16x256xf32, #tpu.memory_space<vmem>>, vector<16x256xf32>
    tpu.vector_store %arg21[%c0_30, %c0_31], %67 {strides = array<i32>} : memref<16x256xf32, #tpu.memory_space<vmem>>, vector<16x256xf32>,
    %c1_i32 = arith.constant 1 : i32
    %69 = arith.cmpi eq, %arg0, %c1_i32 : i32
    %70 = arith.extui %69 : i1 to i32
    %c0_i32_32 = arith.constant 0 : i32
    %71 = arith.cmpi ne, %70, %c0_i32_32 : i32
    scf.if %71 {
      %c0_33 = arith.constant 0 : index
      %c0_34 = arith.constant 0 : index
      %72 = vector.load %arg21[%c0_33, %c0_34] : memref<16x256xf32, #tpu.memory_space<vmem>>, vector<16x256xf32>
      %c0_35 = arith.constant 0 : index
      %c0_36 = arith.constant 0 : index
      %73 = vector.load %arg3[%c0_35, %c0_36] : memref<16x128xf32, #tpu.memory_space<vmem>>, vector<16x128xf32>
      %74 = vector.extract_strided_slice %72 {offsets = [0, 128], sizes = [16, 128], strides = [1, 1]} : vector<16x256xf32> to vector<16x128xf32>
      %c0_37 = arith.constant 0 : index
      %c0_38 = arith.constant 0 : index
      %75 = vector.load %arg4[%c0_37, %c0_38] : memref<16x1xf32, #tpu.memory_space<vmem>>, vector<16x1xf32>
      %76 = vector.broadcast %75 : vector<16x1xf32> to vector<16x128xf32>
      %77 = arith.mulf %74, %76 : vector<16x128xf32>
      %78 = arith.addf %73, %77 : vector<16x128xf32>
      %c0_39 = arith.constant 0 : index
      %c0_40 = arith.constant 0 : index
      %79 = vector.load %arg17[%c0_39, %c0_40] : memref<16x128xf32, #tpu.memory_space<vmem>>, vector<16x128xf32>
      tpu.vector_store %arg17[%c0_39, %c0_40], %78 {strides = array<i32>} : memref<16x128xf32, #tpu.memory_space<vmem>>, vector<16x128xf32>,
      %c0_41 = arith.constant 0 : index
      %c0_42 = arith.constant 0 : index
      %80 = vector.load %arg20[%c0_41, %c0_42] : memref<16x128xf32, #tpu.memory_space<vmem>>, vector<16x128xf32>
      %81 = vector.extract_strided_slice %72 {offsets = [0, 0], sizes = [16, 128], strides = [1, 1]} : vector<16x256xf32> to vector<16x128xf32>
      %c0_43 = arith.constant 0 : index
      %c0_44 = arith.constant 0 : index
      %82 = vector.load %arg13[%c0_43, %c0_44] : memref<128x128xf32, #tpu.memory_space<vmem>>, vector<128x128xf32>
      %cst_45 = arith.constant dense<0.000000e+00> : vector<16x128xf32>
      %83 = tpu.matmul %81, %82, %cst_45 {dimension_numbers = #tpu.dot_dimension_numbers<[1], [0], [0], [1], [0, 0, 1, 1], [], []>} : vector<16x128xf32>, vector<128x128xf32>, vector<16x128xf32> -> vector<16x128xf32>
      %84 = arith.addf %80, %83 : vector<16x128xf32>
      %85 = arith.negf %84 : vector<16x128xf32>
      %86 = math.exp %85 : vector<16x128xf32>
      %cst_46 = arith.constant 1.000000e+00 : f32
      %87 = vector.broadcast %cst_46 : f32 to vector<16x128xf32>
      %88 = arith.addf %87, %86 : vector<16x128xf32>
      %89 = arith.divf %87, %88 : vector<16x128xf32>
      %90 = arith.mulf %84, %89 : vector<16x128xf32>
      %c0_47 = arith.constant 0 : index
      %c0_48 = arith.constant 0 : index
      %91 = vector.load %arg14[%c0_47, %c0_48] : memref<128x128xf32, #tpu.memory_space<vmem>>, vector<128x128xf32>
      %cst_49 = arith.constant dense<0.000000e+00> : vector<16x128xf32>
      %92 = tpu.matmul %90, %91, %cst_49 {dimension_numbers = #tpu.dot_dimension_numbers<[1], [0], [0], [1], [0, 0, 1, 1], [], []>} : vector<16x128xf32>, vector<128x128xf32>, vector<16x128xf32> -> vector<16x128xf32>
      %c0_50 = arith.constant 0 : index
      %c0_51 = arith.constant 0 : index
      %93 = vector.load %arg15[%c0_50, %c0_51] : memref<1x128xf32, #tpu.memory_space<vmem>>, vector<1x128xf32>
      %94 = vector.broadcast %93 : vector<1x128xf32> to vector<16x128xf32>
      %95 = arith.addf %92, %94 : vector<16x128xf32>
      %c0_52 = arith.constant 0 : index
      %c0_53 = arith.constant 0 : index
      %96 = vector.load %arg2[%c0_52, %c0_53] : memref<16x128xf32, #tpu.memory_space<vmem>>, vector<16x128xf32>
      %97 = arith.addf %96, %95 : vector<16x128xf32>
      %c0_54 = arith.constant 0 : index
      %c0_55 = arith.constant 0 : index
      %98 = vector.load %arg16[%c0_54, %c0_55] : memref<16x128xf32, #tpu.memory_space<vmem>>, vector<16x128xf32>
      tpu.vector_store %arg16[%c0_54, %c0_55], %97 {strides = array<i32>} : memref<16x128xf32, #tpu.memory_space<vmem>>, vector<16x128xf32>,
    } else {
    }
    return
  }
  func.func @transform_0(%arg0: i32) -> (i32, i32) {
    %c0_i32 = arith.constant 0 : i32
    %c0_i32_0 = arith.constant 0 : i32
    return %arg0, %c0_i32 : i32, i32
  }
  func.func @transform_1(%arg0: i32) -> (i32, i32) {
    %c0_i32 = arith.constant 0 : i32
    %c0_i32_0 = arith.constant 0 : i32
    %c0_i32_1 = arith.constant 0 : i32
    return %c0_i32, %c0_i32_0 : i32, i32
  }
  func.func @transform_2(%arg0: i32) -> (i32, i32) {
    %c0_i32 = arith.constant 0 : i32
    %c0_i32_0 = arith.constant 0 : i32
    %c0_i32_1 = arith.constant 0 : i32
    return %c0_i32, %c0_i32_0 : i32, i32
  }
  func.func @transform_3(%arg0: i32) -> (i32, i32) {
    %c0_i32 = arith.constant 0 : i32
    %c0_i32_0 = arith.constant 0 : i32
    %c0_i32_1 = arith.constant 0 : i32
    return %c0_i32, %c0_i32_0 : i32, i32
  }
  func.func @transform_4(%arg0: i32) -> (i32, i32) {
    %c0_i32 = arith.constant 0 : i32
    %c0_i32_0 = arith.constant 0 : i32
    %c0_i32_1 = arith.constant 0 : i32
    return %c0_i32, %c0_i32_0 : i32, i32
  }
  func.func @transform_5(%arg0: i32) -> (i32, i32) {
    %c0_i32 = arith.constant 0 : i32
    %c0_i32_0 = arith.constant 0 : i32
    %c0_i32_1 = arith.constant 0 : i32
    return %c0_i32, %c0_i32_0 : i32, i32
  }
  func.func @transform_6(%arg0: i32) -> (i32, i32) {
    %c0_i32 = arith.constant 0 : i32
    %c0_i32_0 = arith.constant 0 : i32
    %c0_i32_1 = arith.constant 0 : i32
    return %c0_i32, %c0_i32_0 : i32, i32
  }
  func.func @transform_7(%arg0: i32) -> (i32, i32) {
    %c0_i32 = arith.constant 0 : i32
    %c0_i32_0 = arith.constant 0 : i32
    %c0_i32_1 = arith.constant 0 : i32
    return %c0_i32, %c0_i32_0 : i32, i32
  }
  func.func @transform_8(%arg0: i32) -> (i32, i32) {
    %c0_i32 = arith.constant 0 : i32
    %c0_i32_0 = arith.constant 0 : i32
    %c0_i32_1 = arith.constant 0 : i32
    return %c0_i32, %c0_i32_0 : i32, i32
  }
  func.func @transform_9(%arg0: i32) -> (i32, i32) {
    %c0_i32 = arith.constant 0 : i32
    %c0_i32_0 = arith.constant 0 : i32
    %c0_i32_1 = arith.constant 0 : i32
    return %c0_i32, %c0_i32_0 : i32, i32
  }
  func.func @transform_10(%arg0: i32) -> (i32, i32) {
    %c0_i32 = arith.constant 0 : i32
    %c0_i32_0 = arith.constant 0 : i32
    %c0_i32_1 = arith.constant 0 : i32
    return %c0_i32, %c0_i32_0 : i32, i32
  }
  func.func @transform_11(%arg0: i32) -> (i32, i32) {
    %c0_i32 = arith.constant 0 : i32
    %c0_i32_0 = arith.constant 0 : i32
    %c0_i32_1 = arith.constant 0 : i32
    return %c0_i32, %c0_i32_0 : i32, i32
  }
  func.func @transform_12(%arg0: i32) -> (i32, i32) {
    %c0_i32 = arith.constant 0 : i32
    %c0_i32_0 = arith.constant 0 : i32
    %c0_i32_1 = arith.constant 0 : i32
    return %c0_i32, %c0_i32_0 : i32, i32
  }
  func.func @transform_13(%arg0: i32) -> (i32, i32) {
    %c0_i32 = arith.constant 0 : i32
    %c0_i32_0 = arith.constant 0 : i32
    %c0_i32_1 = arith.constant 0 : i32
    return %c0_i32, %c0_i32_0 : i32, i32
  }
  func.func @transform_14(%arg0: i32) -> (i32, i32) {
    %c0_i32 = arith.constant 0 : i32
    %c0_i32_0 = arith.constant 0 : i32
    %c0_i32_1 = arith.constant 0 : i32
    return %c0_i32, %c0_i32_0 : i32, i32
  }
  func.func @transform_15(%arg0: i32) -> (i32, i32) {
    %c0_i32 = arith.constant 0 : i32
    %c0_i32_0 = arith.constant 0 : i32
    %c0_i32_1 = arith.constant 0 : i32
    return %c0_i32, %c0_i32_0 : i32, i32
  }
  func.func @transform_16(%arg0: i32) -> (i32, i32) {
    %c0_i32 = arith.constant 0 : i32
    %c0_i32_0 = arith.constant 0 : i32
    %c0_i32_1 = arith.constant 0 : i32
    return %c0_i32, %c0_i32_0 : i32, i32
  }
}

module attributes {stable_mosaic.version = 11 : i64} {
  func.func @kernel(%arg0: i32, %arg1: memref<128x2xi32, #tpu.memory_space<vmem>>, %arg2: memref<16x128xf32, #tpu.memory_space<vmem>>, %arg3: memref<16x128xf32, #tpu.memory_space<vmem>>, %arg4: memref<16x1xf32, #tpu.memory_space<vmem>>, %arg5: memref<128x384xf32, #tpu.memory_space<vmem>>, %arg6: memref<1x384xf32, #tpu.memory_space<vmem>>, %arg7: memref<1x128xf32, #tpu.memory_space<vmem>>, %arg8: memref<128x128xf32, #tpu.memory_space<vmem>>, %arg9: memref<1x128xf32, #tpu.memory_space<vmem>>, %arg10: memref<128x128xf32, #tpu.memory_space<vmem>>, %arg11: memref<1x128xf32, #tpu.memory_space<vmem>>, %arg12: memref<1x128xf32, #tpu.memory_space<vmem>>, %arg13: memref<128x128xf32, #tpu.memory_space<vmem>>, %arg14: memref<128x128xf32, #tpu.memory_space<vmem>>, %arg15: memref<1x128xf32, #tpu.memory_space<vmem>>, %arg16: memref<16x128xf32, #tpu.memory_space<vmem>>, %arg17: memref<16x128xf32, #tpu.memory_space<vmem>>, %arg18: memref<16x256xf32, #tpu.memory_space<vmem>>, %arg19: memref<16x256xf32, #tpu.memory_space<vmem>>, %arg20: memref<16x128xf32, #tpu.memory_space<vmem>>, %arg21: memref<16x256xf32, #tpu.memory_space<vmem>>) attributes {dimension_semantics = [#tpu.dimension_semantics<arbitrary>], iteration_bounds = array<i64: 2>, scalar_prefetch = 0 : i64, scratch_operands = 4 : i64, tpu.core_type = #tpu.core_type<tc>, window_params = [{transform_indices = @transform_0, window_bounds = array<i64: 128, 2>}, {pipeline_mode = #tpu.pipeline_mode<synchronous>, transform_indices = @transform_1, window_bounds = array<i64: 16, 128>}, {pipeline_mode = #tpu.pipeline_mode<synchronous>, transform_indices = @transform_2, window_bounds = array<i64: 16, 128>}, {pipeline_mode = #tpu.pipeline_mode<synchronous>, transform_indices = @transform_3, window_bounds = array<i64: 16, 1>}, {pipeline_mode = #tpu.pipeline_mode<synchronous>, transform_indices = @transform_4, window_bounds = array<i64: 128, 384>}, {pipeline_mode = #tpu.pipeline_mode<synchronous>, transform_indices = @transform_5, window_bounds = array<i64: 1, 384>}, {pipeline_mode = #tpu.pipeline_mode<synchronous>, transform_indices = @transform_6, window_bounds = array<i64: 1, 128>}, {pipeline_mode = #tpu.pipeline_mode<synchronous>, transform_indices = @transform_7, window_bounds = array<i64: 128, 128>}, {pipeline_mode = #tpu.pipeline_mode<synchronous>, transform_indices = @transform_8, window_bounds = array<i64: 1, 128>}, {pipeline_mode = #tpu.pipeline_mode<synchronous>, transform_indices = @transform_9, window_bounds = array<i64: 128, 128>}, {pipeline_mode = #tpu.pipeline_mode<synchronous>, transform_indices = @transform_10, window_bounds = array<i64: 1, 128>}, {pipeline_mode = #tpu.pipeline_mode<synchronous>, transform_indices = @transform_11, window_bounds = array<i64: 1, 128>}, {pipeline_mode = #tpu.pipeline_mode<synchronous>, transform_indices = @transform_12, window_bounds = array<i64: 128, 128>}, {pipeline_mode = #tpu.pipeline_mode<synchronous>, transform_indices = @transform_13, window_bounds = array<i64: 128, 128>}, {pipeline_mode = #tpu.pipeline_mode<synchronous>, transform_indices = @transform_14, window_bounds = array<i64: 1, 128>}, {pipeline_mode = #tpu.pipeline_mode<synchronous>, transform_indices = @transform_15, window_bounds = array<i64: 16, 128>}, {pipeline_mode = #tpu.pipeline_mode<synchronous>, transform_indices = @transform_16, window_bounds = array<i64: 16, 128>}]} {
    %c0_i32 = arith.constant 0 : i32
    %0 = arith.cmpi eq, %arg0, %c0_i32 : i32
    %1 = arith.extui %0 : i1 to i32
    %c0_i32_0 = arith.constant 0 : i32
    %2 = arith.cmpi ne, %1, %c0_i32_0 : i32
    scf.if %2 {
      %c0_33 = arith.constant 0 : index
      %c0_34 = arith.constant 0 : index
      %72 = vector.load %arg2[%c0_33, %c0_34] : memref<16x128xf32, #tpu.memory_space<vmem>>, vector<16x128xf32>
      %c0_35 = arith.constant 0 : index
      %c0_36 = arith.constant 0 : index
      %73 = vector.load %arg3[%c0_35, %c0_36] : memref<16x128xf32, #tpu.memory_space<vmem>>, vector<16x128xf32>
      %c0_37 = arith.constant 0 : index
      %c0_38 = arith.constant 0 : index
      %74 = vector.load %arg5[%c0_37, %c0_38] : memref<128x384xf32, #tpu.memory_space<vmem>>, vector<128x384xf32>
      %cst_39 = arith.constant dense<0.000000e+00> : vector<16x384xf32>
      %75 = tpu.matmul %72, %74, %cst_39 {dimension_numbers = #tpu.dot_dimension_numbers<[1], [0], [0], [1], [0, 0, 1, 1], [], []>} : vector<16x128xf32>, vector<128x384xf32>, vector<16x384xf32> -> vector<16x384xf32>
      %c0_40 = arith.constant 0 : index
      %c0_41 = arith.constant 0 : index
      %76 = vector.load %arg6[%c0_40, %c0_41] : memref<1x384xf32, #tpu.memory_space<vmem>>, vector<1x384xf32>
      %77 = vector.broadcast %76 : vector<1x384xf32> to vector<16x384xf32>
      %78 = arith.addf %75, %77 : vector<16x384xf32>
      %79 = vector.extract_strided_slice %78 {offsets = [0, 0], sizes = [16, 128], strides = [1, 1]} : vector<16x384xf32> to vector<16x128xf32>
      %80 = tpu.concatenate %79, %73 in 1 : vector<16x128xf32>, vector<16x128xf32> -> vector<16x256xf32>
      %c0_42 = arith.constant 0 : index
      %c0_43 = arith.constant 0 : index
      %81 = vector.load %arg18[%c0_42, %c0_43] : memref<16x256xf32, #tpu.memory_space<vmem>>, vector<16x256xf32>
      tpu.vector_store %arg18[%c0_42, %c0_43], %80 {strides = array<i32>} : memref<16x256xf32, #tpu.memory_space<vmem>>, vector<16x256xf32>,
      %82 = vector.extract_strided_slice %78 {offsets = [0, 128], sizes = [16, 128], strides = [1, 1]} : vector<16x384xf32> to vector<16x128xf32>
      %cst_44 = arith.constant 0.000000e+00 : f32
      %83 = vector.broadcast %cst_44 : f32 to vector<16x128xf32>
      %84 = arith.subf %83, %73 : vector<16x128xf32>
      %85 = tpu.concatenate %82, %84 in 1 : vector<16x128xf32>, vector<16x128xf32> -> vector<16x256xf32>
      %c0_45 = arith.constant 0 : index
      %c0_46 = arith.constant 0 : index
      %86 = vector.load %arg19[%c0_45, %c0_46] : memref<16x256xf32, #tpu.memory_space<vmem>>, vector<16x256xf32>
      tpu.vector_store %arg19[%c0_45, %c0_46], %85 {strides = array<i32>} : memref<16x256xf32, #tpu.memory_space<vmem>>, vector<16x256xf32>,
      %87 = vector.extract_strided_slice %78 {offsets = [0, 256], sizes = [16, 128], strides = [1, 1]} : vector<16x384xf32> to vector<16x128xf32>
      %c0_47 = arith.constant 0 : index
      %c0_48 = arith.constant 0 : index
      %88 = vector.load %arg20[%c0_47, %c0_48] : memref<16x128xf32, #tpu.memory_space<vmem>>, vector<16x128xf32>
      tpu.vector_store %arg20[%c0_47, %c0_48], %87 {strides = array<i32>} : memref<16x128xf32, #tpu.memory_space<vmem>>, vector<16x128xf32>,
      %cst_49 = arith.constant 0.000000e+00 : f32
      %89 = vector.broadcast %cst_49 : f32 to vector<16x256xf32>
      %c0_50 = arith.constant 0 : index
      %c0_51 = arith.constant 0 : index
      %90 = vector.load %arg21[%c0_50, %c0_51] : memref<16x256xf32, #tpu.memory_space<vmem>>, vector<16x256xf32>
      tpu.vector_store %arg21[%c0_50, %c0_51], %89 {strides = array<i32>} : memref<16x256xf32, #tpu.memory_space<vmem>>, vector<16x256xf32>,
    } else {
    }
    %3 = tpu.iota {dimensions = array<i32: 1>} : vector<128x16xi32>
    %c0 = arith.constant 0 : index
    %c0_1 = arith.constant 0 : index
    %4 = vector.load %arg1[%c0, %c0_1] : memref<128x2xi32, #tpu.memory_space<vmem>>, vector<128x1xi32>
    %5 = vector.broadcast %4 : vector<128x1xi32> to vector<128x16xi32>
    %6 = arith.cmpi eq, %5, %3 : vector<128x16xi32>
    %7 = arith.extui %6 : vector<128x16xi1> to vector<128x16xi32>
    %8 = arith.sitofp %7 : vector<128x16xi32> to vector<128x16xf32>
    %c0_2 = arith.constant 0 : index
    %c1 = arith.constant 1 : index
    %9 = vector.load %arg1[%c0_2, %c1] : memref<128x2xi32, #tpu.memory_space<vmem>>, vector<128x1xi32>
    %10 = vector.broadcast %9 : vector<128x1xi32> to vector<128x16xi32>
    %11 = arith.cmpi eq, %10, %3 : vector<128x16xi32>
    %12 = arith.extui %11 : vector<128x16xi1> to vector<128x16xi32>
    %13 = arith.sitofp %12 : vector<128x16xi32> to vector<128x16xf32>
    %c0_3 = arith.constant 0 : index
    %c0_4 = arith.constant 0 : index
    %14 = vector.load %arg18[%c0_3, %c0_4] : memref<16x256xf32, #tpu.memory_space<vmem>>, vector<16x256xf32>
    %cst = arith.constant dense<0.000000e+00> : vector<128x256xf32>
    %15 = tpu.matmul %8, %14, %cst {dimension_numbers = #tpu.dot_dimension_numbers<[1], [0], [0], [1], [0, 0, 1, 1], [], []>} : vector<128x16xf32>, vector<16x256xf32>, vector<128x256xf32> -> vector<128x256xf32>
    %c0_5 = arith.constant 0 : index
    %c0_6 = arith.constant 0 : index
    %16 = vector.load %arg19[%c0_5, %c0_6] : memref<16x256xf32, #tpu.memory_space<vmem>>, vector<16x256xf32>
    %cst_7 = arith.constant dense<0.000000e+00> : vector<128x256xf32>
    %17 = tpu.matmul %13, %16, %cst_7 {dimension_numbers = #tpu.dot_dimension_numbers<[1], [0], [0], [1], [0, 0, 1, 1], [], []>} : vector<128x16xf32>, vector<16x256xf32>, vector<128x256xf32> -> vector<128x256xf32>
    %18 = arith.addf %15, %17 : vector<128x256xf32>
    %19 = vector.extract_strided_slice %18 {offsets = [0, 0], sizes = [128, 128], strides = [1, 1]} : vector<128x256xf32> to vector<128x128xf32>
    %20 = vector.extract_strided_slice %18 {offsets = [0, 128], sizes = [128, 128], strides = [1, 1]} : vector<128x256xf32> to vector<128x128xf32>
    %21 = arith.mulf %20, %20 : vector<128x128xf32>
    %cst_8 = arith.constant dense<0.000000e+00> : vector<128xf32>
    %22 = vector.multi_reduction <add>, %21, %cst_8 [1] : vector<128x128xf32> to vector<128xf32>
    %23 = vector.shape_cast %22 : vector<128xf32> to vector<128x1xf32>
    %c0_9 = arith.constant 0 : index
    %c0_10 = arith.constant 0 : index
    %24 = vector.load %arg7[%c0_9, %c0_10] : memref<1x128xf32, #tpu.memory_space<vmem>>, vector<1x128xf32>
    %25 = vector.broadcast %23 : vector<128x1xf32> to vector<128x128xf32>
    %26 = vector.broadcast %24 : vector<1x128xf32> to vector<128x128xf32>
    %27 = arith.mulf %25, %26 : vector<128x128xf32>
    %28 = arith.addf %19, %27 : vector<128x128xf32>
    %29 = arith.negf %28 : vector<128x128xf32>
    %30 = math.exp %29 : vector<128x128xf32>
    %cst_11 = arith.constant 1.000000e+00 : f32
    %31 = vector.broadcast %cst_11 : f32 to vector<128x128xf32>
    %32 = arith.addf %31, %30 : vector<128x128xf32>
    %33 = arith.divf %31, %32 : vector<128x128xf32>
    %34 = arith.mulf %28, %33 : vector<128x128xf32>
    %c0_12 = arith.constant 0 : index
    %c0_13 = arith.constant 0 : index
    %35 = vector.load %arg8[%c0_12, %c0_13] : memref<128x128xf32, #tpu.memory_space<vmem>>, vector<128x128xf32>
    %cst_14 = arith.constant dense<0.000000e+00> : vector<128x128xf32>
    %36 = tpu.matmul %34, %35, %cst_14 {dimension_numbers = #tpu.dot_dimension_numbers<[1], [0], [0], [1], [0, 0, 1, 1], [], []>} : vector<128x128xf32>, vector<128x128xf32>, vector<128x128xf32> -> vector<128x128xf32>
    %c0_15 = arith.constant 0 : index
    %c0_16 = arith.constant 0 : index
    %37 = vector.load %arg9[%c0_15, %c0_16] : memref<1x128xf32, #tpu.memory_space<vmem>>, vector<1x128xf32>
    %38 = vector.broadcast %37 : vector<1x128xf32> to vector<128x128xf32>
    %39 = arith.addf %36, %38 : vector<128x128xf32>
    %40 = arith.negf %39 : vector<128x128xf32>
    %41 = math.exp %40 : vector<128x128xf32>
    %cst_17 = arith.constant 1.000000e+00 : f32
    %42 = vector.broadcast %cst_17 : f32 to vector<128x128xf32>
    %43 = arith.addf %42, %41 : vector<128x128xf32>
    %44 = arith.divf %42, %43 : vector<128x128xf32>
    %45 = arith.mulf %39, %44 : vector<128x128xf32>
    %c0_18 = arith.constant 0 : index
    %c0_19 = arith.constant 0 : index
    %46 = vector.load %arg10[%c0_18, %c0_19] : memref<128x128xf32, #tpu.memory_space<vmem>>, vector<128x128xf32>
    %cst_20 = arith.constant dense<0.000000e+00> : vector<128x128xf32>
    %47 = tpu.matmul %45, %46, %cst_20 {dimension_numbers = #tpu.dot_dimension_numbers<[1], [0], [0], [1], [0, 0, 1, 1], [], []>} : vector<128x128xf32>, vector<128x128xf32>, vector<128x128xf32> -> vector<128x128xf32>
    %c0_21 = arith.constant 0 : index
    %c0_22 = arith.constant 0 : index
    %48 = vector.load %arg11[%c0_21, %c0_22] : memref<1x128xf32, #tpu.memory_space<vmem>>, vector<1x128xf32>
    %49 = vector.broadcast %48 : vector<1x128xf32> to vector<128x128xf32>
    %50 = arith.addf %47, %49 : vector<128x128xf32>
    %51 = arith.negf %50 : vector<128x128xf32>
    %52 = math.exp %51 : vector<128x128xf32>
    %cst_23 = arith.constant 1.000000e+00 : f32
    %53 = vector.broadcast %cst_23 : f32 to vector<128x128xf32>
    %54 = arith.addf %53, %52 : vector<128x128xf32>
    %55 = arith.divf %53, %54 : vector<128x128xf32>
    %56 = arith.mulf %50, %55 : vector<128x128xf32>
    %c0_24 = arith.constant 0 : index
    %c0_25 = arith.constant 0 : index
    %57 = vector.load %arg12[%c0_24, %c0_25] : memref<1x128xf32, #tpu.memory_space<vmem>>, vector<1x128xf32>
    %58 = vector.broadcast %57 : vector<1x128xf32> to vector<128x128xf32>
    %59 = arith.mulf %56, %58 : vector<128x128xf32>
    %cst_26 = arith.constant dense<0.000000e+00> : vector<128xf32>
    %60 = vector.multi_reduction <add>, %59, %cst_26 [1] : vector<128x128xf32> to vector<128xf32>
    %61 = vector.shape_cast %60 : vector<128xf32> to vector<128x1xf32>
    %62 = vector.broadcast %61 : vector<128x1xf32> to vector<128x128xf32>
    %63 = arith.mulf %20, %62 : vector<128x128xf32>
    %64 = tpu.concatenate %45, %63 in 1 : vector<128x128xf32>, vector<128x128xf32> -> vector<128x256xf32>
    %c0_27 = arith.constant 0 : index
    %c0_28 = arith.constant 0 : index
    %65 = vector.load %arg21[%c0_27, %c0_28] : memref<16x256xf32, #tpu.memory_space<vmem>>, vector<16x256xf32>
    %cst_29 = arith.constant dense<0.000000e+00> : vector<16x256xf32>
    %66 = tpu.matmul %8, %64, %cst_29 {dimension_numbers = #tpu.dot_dimension_numbers<[0], [0], [1], [1], [0, 1, 1, 1], [], []>} : vector<128x16xf32>, vector<128x256xf32>, vector<16x256xf32> -> vector<16x256xf32>
    %67 = arith.addf %65, %66 : vector<16x256xf32>
    %c0_30 = arith.constant 0 : index
    %c0_31 = arith.constant 0 : index
    %68 = vector.load %arg21[%c0_30, %c0_31] : memref<16x256xf32, #tpu.memory_space<vmem>>, vector<16x256xf32>
    tpu.vector_store %arg21[%c0_30, %c0_31], %67 {strides = array<i32>} : memref<16x256xf32, #tpu.memory_space<vmem>>, vector<16x256xf32>,
    %c1_i32 = arith.constant 1 : i32
    %69 = arith.cmpi eq, %arg0, %c1_i32 : i32
    %70 = arith.extui %69 : i1 to i32
    %c0_i32_32 = arith.constant 0 : i32
    %71 = arith.cmpi ne, %70, %c0_i32_32 : i32
    scf.if %71 {
      %c0_33 = arith.constant 0 : index
      %c0_34 = arith.constant 0 : index
      %72 = vector.load %arg21[%c0_33, %c0_34] : memref<16x256xf32, #tpu.memory_space<vmem>>, vector<16x256xf32>
      %c0_35 = arith.constant 0 : index
      %c0_36 = arith.constant 0 : index
      %73 = vector.load %arg3[%c0_35, %c0_36] : memref<16x128xf32, #tpu.memory_space<vmem>>, vector<16x128xf32>
      %74 = vector.extract_strided_slice %72 {offsets = [0, 128], sizes = [16, 128], strides = [1, 1]} : vector<16x256xf32> to vector<16x128xf32>
      %c0_37 = arith.constant 0 : index
      %c0_38 = arith.constant 0 : index
      %75 = vector.load %arg4[%c0_37, %c0_38] : memref<16x1xf32, #tpu.memory_space<vmem>>, vector<16x1xf32>
      %76 = vector.broadcast %75 : vector<16x1xf32> to vector<16x128xf32>
      %77 = arith.mulf %74, %76 : vector<16x128xf32>
      %78 = arith.addf %73, %77 : vector<16x128xf32>
      %c0_39 = arith.constant 0 : index
      %c0_40 = arith.constant 0 : index
      %79 = vector.load %arg17[%c0_39, %c0_40] : memref<16x128xf32, #tpu.memory_space<vmem>>, vector<16x128xf32>
      tpu.vector_store %arg17[%c0_39, %c0_40], %78 {strides = array<i32>} : memref<16x128xf32, #tpu.memory_space<vmem>>, vector<16x128xf32>,
      %c0_41 = arith.constant 0 : index
      %c0_42 = arith.constant 0 : index
      %80 = vector.load %arg20[%c0_41, %c0_42] : memref<16x128xf32, #tpu.memory_space<vmem>>, vector<16x128xf32>
      %81 = vector.extract_strided_slice %72 {offsets = [0, 0], sizes = [16, 128], strides = [1, 1]} : vector<16x256xf32> to vector<16x128xf32>
      %c0_43 = arith.constant 0 : index
      %c0_44 = arith.constant 0 : index
      %82 = vector.load %arg13[%c0_43, %c0_44] : memref<128x128xf32, #tpu.memory_space<vmem>>, vector<128x128xf32>
      %cst_45 = arith.constant dense<0.000000e+00> : vector<16x128xf32>
      %83 = tpu.matmul %81, %82, %cst_45 {dimension_numbers = #tpu.dot_dimension_numbers<[1], [0], [0], [1], [0, 0, 1, 1], [], []>} : vector<16x128xf32>, vector<128x128xf32>, vector<16x128xf32> -> vector<16x128xf32>
      %84 = arith.addf %80, %83 : vector<16x128xf32>
      %85 = arith.negf %84 : vector<16x128xf32>
      %86 = math.exp %85 : vector<16x128xf32>
      %cst_46 = arith.constant 1.000000e+00 : f32
      %87 = vector.broadcast %cst_46 : f32 to vector<16x128xf32>
      %88 = arith.addf %87, %86 : vector<16x128xf32>
      %89 = arith.divf %87, %88 : vector<16x128xf32>
      %90 = arith.mulf %84, %89 : vector<16x128xf32>
      %c0_47 = arith.constant 0 : index
      %c0_48 = arith.constant 0 : index
      %91 = vector.load %arg14[%c0_47, %c0_48] : memref<128x128xf32, #tpu.memory_space<vmem>>, vector<128x128xf32>
      %cst_49 = arith.constant dense<0.000000e+00> : vector<16x128xf32>
      %92 = tpu.matmul %90, %91, %cst_49 {dimension_numbers = #tpu.dot_dimension_numbers<[1], [0], [0], [1], [0, 0, 1, 1], [], []>} : vector<16x128xf32>, vector<128x128xf32>, vector<16x128xf32> -> vector<16x128xf32>
      %c0_50 = arith.constant 0 : index
      %c0_51 = arith.constant 0 : index
      %93 = vector.load %arg15[%c0_50, %c0_51] : memref<1x128xf32, #tpu.memory_space<vmem>>, vector<1x128xf32>
      %94 = vector.broadcast %93 : vector<1x128xf32> to vector<16x128xf32>
      %95 = arith.addf %92, %94 : vector<16x128xf32>
      %c0_52 = arith.constant 0 : index
      %c0_53 = arith.constant 0 : index
      %96 = vector.load %arg2[%c0_52, %c0_53] : memref<16x128xf32, #tpu.memory_space<vmem>>, vector<16x128xf32>
      %97 = arith.addf %96, %95 : vector<16x128xf32>
      %c0_54 = arith.constant 0 : index
      %c0_55 = arith.constant 0 : index
      %98 = vector.load %arg16[%c0_54, %c0_55] : memref<16x128xf32, #tpu.memory_space<vmem>>, vector<16x128xf32>
      tpu.vector_store %arg16[%c0_54, %c0_55], %97 {strides = array<i32>} : memref<16x128xf32, #tpu.memory_space<vmem>>, vector<16x128xf32>,
    } else {
    }
    return
  }
  func.func @transform_0(%arg0: i32) -> (i32, i32) {
    %c0_i32 = arith.constant 0 : i32
    %c0_i32_0 = arith.constant 0 : i32
    return %arg0, %c0_i32 : i32, i32
  }
  func.func @transform_1(%arg0: i32) -> (i32, i32) {
    %c0_i32 = arith.constant 0 : i32
    %c0_i32_0 = arith.constant 0 : i32
    %c0_i32_1 = arith.constant 0 : i32
    return %c0_i32, %c0_i32_0 : i32, i32
  }
  func.func @transform_2(%arg0: i32) -> (i32, i32) {
    %c0_i32 = arith.constant 0 : i32
    %c0_i32_0 = arith.constant 0 : i32
    %c0_i32_1 = arith.constant 0 : i32
    return %c0_i32, %c0_i32_0 : i32, i32
  }
  func.func @transform_3(%arg0: i32) -> (i32, i32) {
    %c0_i32 = arith.constant 0 : i32
    %c0_i32_0 = arith.constant 0 : i32
    %c0_i32_1 = arith.constant 0 : i32
    return %c0_i32, %c0_i32_0 : i32, i32
  }
  func.func @transform_4(%arg0: i32) -> (i32, i32) {
    %c0_i32 = arith.constant 0 : i32
    %c0_i32_0 = arith.constant 0 : i32
    %c0_i32_1 = arith.constant 0 : i32
    return %c0_i32, %c0_i32_0 : i32, i32
  }
  func.func @transform_5(%arg0: i32) -> (i32, i32) {
    %c0_i32 = arith.constant 0 : i32
    %c0_i32_0 = arith.constant 0 : i32
    %c0_i32_1 = arith.constant 0 : i32
    return %c0_i32, %c0_i32_0 : i32, i32
  }
  func.func @transform_6(%arg0: i32) -> (i32, i32) {
    %c0_i32 = arith.constant 0 : i32
    %c0_i32_0 = arith.constant 0 : i32
    %c0_i32_1 = arith.constant 0 : i32
    return %c0_i32, %c0_i32_0 : i32, i32
  }
  func.func @transform_7(%arg0: i32) -> (i32, i32) {
    %c0_i32 = arith.constant 0 : i32
    %c0_i32_0 = arith.constant 0 : i32
    %c0_i32_1 = arith.constant 0 : i32
    return %c0_i32, %c0_i32_0 : i32, i32
  }
  func.func @transform_8(%arg0: i32) -> (i32, i32) {
    %c0_i32 = arith.constant 0 : i32
    %c0_i32_0 = arith.constant 0 : i32
    %c0_i32_1 = arith.constant 0 : i32
    return %c0_i32, %c0_i32_0 : i32, i32
  }
  func.func @transform_9(%arg0: i32) -> (i32, i32) {
    %c0_i32 = arith.constant 0 : i32
    %c0_i32_0 = arith.constant 0 : i32
    %c0_i32_1 = arith.constant 0 : i32
    return %c0_i32, %c0_i32_0 : i32, i32
  }
  func.func @transform_10(%arg0: i32) -> (i32, i32) {
    %c0_i32 = arith.constant 0 : i32
    %c0_i32_0 = arith.constant 0 : i32
    %c0_i32_1 = arith.constant 0 : i32
    return %c0_i32, %c0_i32_0 : i32, i32
  }
  func.func @transform_11(%arg0: i32) -> (i32, i32) {
    %c0_i32 = arith.constant 0 : i32
    %c0_i32_0 = arith.constant 0 : i32
    %c0_i32_1 = arith.constant 0 : i32
    return %c0_i32, %c0_i32_0 : i32, i32
  }
  func.func @transform_12(%arg0: i32) -> (i32, i32) {
    %c0_i32 = arith.constant 0 : i32
    %c0_i32_0 = arith.constant 0 : i32
    %c0_i32_1 = arith.constant 0 : i32
    return %c0_i32, %c0_i32_0 : i32, i32
  }
  func.func @transform_13(%arg0: i32) -> (i32, i32) {
    %c0_i32 = arith.constant 0 : i32
    %c0_i32_0 = arith.constant 0 : i32
    %c0_i32_1 = arith.constant 0 : i32
    return %c0_i32, %c0_i32_0 : i32, i32
  }
  func.func @transform_14(%arg0: i32) -> (i32, i32) {
    %c0_i32 = arith.constant 0 : i32
    %c0_i32_0 = arith.constant 0 : i32
    %c0_i32_1 = arith.constant 0 : i32
    return %c0_i32, %c0_i32_0 : i32, i32
  }
  func.func @transform_15(%arg0: i32) -> (i32, i32) {
    %c0_i32 = arith.constant 0 : i32
    %c0_i32_0 = arith.constant 0 : i32
    %c0_i32_1 = arith.constant 0 : i32
    return %c0_i32, %c0_i32_0 : i32, i32
  }
  func.func @transform_16(%arg0: i32) -> (i32, i32) {
    %c0_i32 = arith.constant 0 : i32
    %c0_i32_0 = arith.constant 0 : i32
    %c0_i32_1 = arith.constant 0 : i32
    return %c0_i32, %c0_i32_0 : i32, i32
  }
}

</mosaic_0001>

<llo_original>
// kernel: tpu_custom_call.1
$region0: #{tpu_custom_call.1}
  #allocation0 [shape = 'u32[]', space=smem, size = 0x4, offset = 0x4, fixed_abs, tag = 'smem constant byte address 0x4 - core index']
  #allocation1 [shape = 'u32[144,128]{1,0:T(1,128)}', space=vmem, size = 0x12000, scoped, tag = 'internal scratch']
  #allocation2 [shape = 'f32[16,256]{1,0:T(8,128)}', space=vmem, size = 0x4000, scoped, tag = 'scratch operand']
  #allocation3 [shape = 'f32[16,256]{1,0:T(8,128)}', space=vmem, size = 0x4000, scoped, tag = 'scratch operand']
  #allocation4 [shape = 'f32[16,128]{1,0:T(8,128)}', space=vmem, size = 0x2000, scoped, tag = 'scratch operand']
  #allocation5 [shape = 'f32[16,256]{1,0:T(8,128)}', space=vmem, size = 0x4000, scoped, tag = 'scratch operand']
  %s0 = inlined_call_operand.vmem [shape: s32[256,2], index: 0, kind: input, shape index: {}]
  %s1 = inlined_call_operand.vmem [shape: f32[16,128], index: 1, kind: input, shape index: {}]
  %s2 = inlined_call_operand.hbm [shape: f32[16,128], index: 2, kind: input, shape index: {}]
  %s3 = inlined_call_operand.vmem [shape: f32[16,1], index: 3, kind: input, shape index: {}]
  %s4 = inlined_call_operand.hbm [shape: f32[128,384], index: 4, kind: input, shape index: {}]
  %s5 = inlined_call_operand.vmem [shape: f32[1,384], index: 5, kind: input, shape index: {}]
  %s6 = inlined_call_operand.vmem [shape: f32[1,128], index: 6, kind: input, shape index: {}]
  %s7 = inlined_call_operand.vmem [shape: f32[128,128], index: 7, kind: input, shape index: {}]
  %s8 = inlined_call_operand.vmem [shape: f32[1,128], index: 8, kind: input, shape index: {}]
  %s9 = inlined_call_operand.vmem [shape: f32[128,128], index: 9, kind: input, shape index: {}]
  %s10 = inlined_call_operand.vmem [shape: f32[1,128], index: 10, kind: input, shape index: {}]
  %s11 = inlined_call_operand.vmem [shape: f32[1,128], index: 11, kind: input, shape index: {}]
  %s12 = inlined_call_operand.hbm [shape: f32[128,128], index: 12, kind: input, shape index: {}]
  %s13 = inlined_call_operand.hbm [shape: f32[128,128], index: 13, kind: input, shape index: {}]
  %s14 = inlined_call_operand.vmem [shape: f32[1,128], index: 14, kind: input, shape index: {}]
  %s15 = inlined_call_operand.hbm [shape: f32[16,128], index: 15, kind: output, shape index: {0}]
  %s16 = inlined_call_operand.hbm [shape: f32[16,128], index: 16, kind: output, shape index: {1}]
  %17 = xla_tuple %s15, %s16
  %s18 = sld [smem:[#allocation0]]
  $region125: #{tpu_custom_call.1} parent=0
    _
  %s20 = ssub.s32 1, %s18
  %s21 = scalar_select 0, %s20, %s18
  $region1: #{tpu_custom_call.1} parent=0
    #allocation6 [shape = 'u8[8192]{0}', space=vmem, size = 0x2000, scoped, tag = 'input window, operand 2, single buffered']
    #allocation7 [shape = 's32[2]{0}', space=sflag, size = 0x8, scoped, tag = 'scoped memory for tpu_custom_call.1']
    #allocation8 [shape = 's32[2]{0}', space=sflag, size = 0x8, scoped, tag = 'scoped memory for tpu_custom_call.1']
    #allocation9 [shape = 'u8[196608]{0}', space=vmem, size = 0x30000, scoped, tag = 'input window, operand 4, single buffered']
    #allocation10 [shape = 's32[1]{0}', space=sflag, size = 0x4, scoped, tag = 'scoped memory for tpu_custom_call.1']
    #allocation11 [shape = 'u8[65536]{0}', space=vmem, size = 0x10000, scoped, tag = 'input window, operand 12, single buffered']
    #allocation12 [shape = 'u8[65536]{0}', space=vmem, size = 0x10000, scoped, tag = 'input window, operand 13, single buffered']
    #allocation13 [shape = 's32[1]{0}', space=sflag, size = 0x4, scoped, tag = 'scoped memory for tpu_custom_call.1']
    #allocation14 [shape = 'u8[8192]{0}', space=vmem, size = 0x2000, scoped, tag = 'output window, operand 0, single buffered']
    #allocation15 [shape = 'u8[8192]{0}', space=vmem, size = 0x2000, scoped, tag = 'output window, operand 1, single buffered']
    #allocation16 [shape = 's32[1]{0}', space=sflag, size = 0x4, scoped, tag = 'scoped memory for tpu_custom_call.1']
    %22 = vsyncpa [#allocation7], 0
    %23 = vsyncpa [#allocation10], 0
    %24 = vsyncpa [#allocation13], 0
    %25 = vsyncpa [#allocation8], 0
    %26 = vsyncpa [#allocation16], 0
    loop: start=0, step=1, limit=4
    $region2: #{tpu_custom_call.1} parent=1 // loop_pre_header
      _
    $region3: #{tpu_custom_call.1} parent=1 // loop_header
      %s28 = sphi 0, %s32
      %p29 = scmp.ge.s32.totalorder %s28, 4
      %s38 = sphi 0, %s40
      %s41 = sphi 0, %s38
      %s42 = sphi 0, %s41
      %s58 = sphi 0, %s42
      %s62 = sphi 0, %s62
      %s64 = sphi 0, %s62
      %s65 = sphi 0, %s64
      %s79 = sphi 0, %s65
      %s83 = sphi 0, %s83
      %s85 = sphi 0, %s83
      %s86 = sphi 0, %s85
      %s100 = sphi 0, %s86
      %s104 = sphi 0, %s104
      %s106 = sphi 0, %s104
      %s107 = sphi 0, %s106
      %s121 = sphi 0, %s107
      %s125 = sphi 0, %s125
      %s127 = sphi 0, %s125
      %s128 = sphi 0, %s127
      %s142 = sphi 0, %s128
      %s146 = sphi 0, %s146
      %s148 = sphi 0, %s146
      %s149 = sphi 0, %s148
      %s163 = sphi 0, %s149
      %s167 = sphi 0, %s167
      %s169 = sphi 0, %s167
      %s170 = sphi 0, %s169
      %s184 = sphi 0, %s170
      %s188 = sphi 0, %s188
      %s190 = sphi 0, %s188
      %s191 = sphi 0, %s190
      %s205 = sphi 0, %s191
      %s209 = sphi 0, %s209
      %s211 = sphi 0, %s209
      %s212 = sphi 0, %s211
      %s226 = sphi 0, %s212
      %s230 = sphi 0, %s230
      %s232 = sphi 0, %s230
      %s233 = sphi 0, %s232
      %s247 = sphi 0, %s233
      %s251 = sphi 0, %s251
      %s253 = sphi 0, %s251
      %s254 = sphi 0, %s253
      %s268 = sphi 0, %s254
      %s272 = sphi 0, %s272
      %s274 = sphi 0, %s272
      %s275 = sphi 0, %s274
      %s289 = sphi 0, %s275
      %s293 = sphi 0, %s293
      %s295 = sphi 0, %s293
      %s296 = sphi 0, %s295
      %s310 = sphi 0, %s296
      %s314 = sphi 0, %s314
      %s316 = sphi 0, %s314
      %s317 = sphi 0, %s316
      %s331 = sphi 0, %s317
      %s335 = sphi 0, %s335
      %s337 = sphi 0, %s335
      %s338 = sphi 0, %s337
      %s352 = sphi 0, %s338
      %s356 = sphi 0, %s356
      %s358 = sphi 0, %s356
      %s359 = sphi 0, %s358
      %s373 = sphi 0, %s359
      %s377 = sphi 0, %s377
      %s379 = sphi 0, %s377
      %s380 = sphi 0, %s379
      %s394 = sphi 0, %s380
    $region4: #{tpu_custom_call.1} parent=1 // loop_header_branch
      %31 = sbr.rel (%p29) target = $region8
    $region5: #{tpu_custom_call.1} parent=1 // loop_body
      %s33 = ssub.s32 %s28, 1
      %s34 = ssub.s32 %s28, 2
      %s35 = sadd.s32 %s28, 1
      %s36 = ssub.s32 %s28, %s35
      %p37 = scmp.eq.s32.totalorder %s36, 0
      %s39 = sadd.s32 %s38, 1
      %s40 = scalar_select %p37, %s38, %s39
      %p43 = pneg %p37
      %p44 = scmp.eq.s32.totalorder %s28, 1
      %p45 = por %p43, %p44
      %p46 = scmp.ne.s32.totalorder %s38, %s41
      %p47 = scmp.eq.s32.totalorder %s28, 0
      %p48 = por %p46, %p47
      %p49 = scmp.ne.s32.totalorder %s38, %s41
      %p50 = scmp.eq.s32.totalorder %s33, 1
      %p51 = por %p49, %p50
      %p52 = scmp.ne.s32.totalorder %s41, %s42
      %p53 = scmp.eq.s32.totalorder %s33, 0
      %p54 = por %p52, %p53
      %p55 = scmp.ne.s32.totalorder %s41, %s42
      %p56 = scmp.eq.s32.totalorder %s34, 1
      %p57 = por %p55, %p56
      %p59 = scmp.ne.s32.totalorder %s42, %s58
      %p60 = scmp.eq.s32.totalorder %s34, 0
      %p61 = por %p59, %p60
      %s63 = sadd.s32 %s62, 1
      %p66 = scmp.eq.s32.totalorder %s28, 1
      %p67 = scmp.ne.s32.totalorder %s62, %s64
      %p68 = scmp.eq.s32.totalorder %s28, 0
      %p69 = por %p67, %p68
      %p70 = scmp.ne.s32.totalorder %s62, %s64
      %p71 = scmp.eq.s32.totalorder %s33, 1
      %p72 = por %p70, %p71
      %p73 = scmp.ne.s32.totalorder %s64, %s65
      %p74 = scmp.eq.s32.totalorder %s33, 0
      %p75 = por %p73, %p74
      %p76 = scmp.ne.s32.totalorder %s64, %s65
      %p77 = scmp.eq.s32.totalorder %s34, 1
      %p78 = por %p76, %p77
      %p80 = scmp.ne.s32.totalorder %s65, %s79
      %p81 = scmp.eq.s32.totalorder %s34, 0
      %p82 = por %p80, %p81
      %s84 = sadd.s32 %s83, 1
      %p87 = scmp.eq.s32.totalorder %s28, 1
      %p88 = scmp.ne.s32.totalorder %s83, %s85
      %p89 = scmp.eq.s32.totalorder %s28, 0
      %p90 = por %p88, %p89
      %p91 = scmp.ne.s32.totalorder %s83, %s85
      %p92 = scmp.eq.s32.totalorder %s33, 1
      %p93 = por %p91, %p92
      %p94 = scmp.ne.s32.totalorder %s85, %s86
      %p95 = scmp.eq.s32.totalorder %s33, 0
      %p96 = por %p94, %p95
      %p97 = scmp.ne.s32.totalorder %s85, %s86
      %p98 = scmp.eq.s32.totalorder %s34, 1
      %p99 = por %p97, %p98
      %p101 = scmp.ne.s32.totalorder %s86, %s100
      %p102 = scmp.eq.s32.totalorder %s34, 0
      %p103 = por %p101, %p102
      %s105 = sadd.s32 %s104, 1
      %p108 = scmp.eq.s32.totalorder %s28, 1
      %p109 = scmp.ne.s32.totalorder %s104, %s106
      %p110 = scmp.eq.s32.totalorder %s28, 0
      %p111 = por %p109, %p110
      %p112 = scmp.ne.s32.totalorder %s104, %s106
      %p113 = scmp.eq.s32.totalorder %s33, 1
      %p114 = por %p112, %p113
      %p115 = scmp.ne.s32.totalorder %s106, %s107
      %p116 = scmp.eq.s32.totalorder %s33, 0
      %p117 = por %p115, %p116
      %p118 = scmp.ne.s32.totalorder %s106, %s107
      %p119 = scmp.eq.s32.totalorder %s34, 1
      %p120 = por %p118, %p119
      %p122 = scmp.ne.s32.totalorder %s107, %s121
      %p123 = scmp.eq.s32.totalorder %s34, 0
      %p124 = por %p122, %p123
      %s126 = sadd.s32 %s125, 1
      %p129 = scmp.eq.s32.totalorder %s28, 1
      %p130 = scmp.ne.s32.totalorder %s125, %s127
      %p131 = scmp.eq.s32.totalorder %s28, 0
      %p132 = por %p130, %p131
      %p133 = scmp.ne.s32.totalorder %s125, %s127
      %p134 = scmp.eq.s32.totalorder %s33, 1
      %p135 = por %p133, %p134
      %p136 = scmp.ne.s32.totalorder %s127, %s128
      %p137 = scmp.eq.s32.totalorder %s33, 0
      %p138 = por %p136, %p137
      %p139 = scmp.ne.s32.totalorder %s127, %s128
      %p140 = scmp.eq.s32.totalorder %s34, 1
      %p141 = por %p139, %p140
      %p143 = scmp.ne.s32.totalorder %s128, %s142
      %p144 = scmp.eq.s32.totalorder %s34, 0
      %p145 = por %p143, %p144
      %s147 = sadd.s32 %s146, 1
      %p150 = scmp.eq.s32.totalorder %s28, 1
      %p151 = scmp.ne.s32.totalorder %s146, %s148
      %p152 = scmp.eq.s32.totalorder %s28, 0
      %p153 = por %p151, %p152
      %p154 = scmp.ne.s32.totalorder %s146, %s148
      %p155 = scmp.eq.s32.totalorder %s33, 1
      %p156 = por %p154, %p155
      %p157 = scmp.ne.s32.totalorder %s148, %s149
      %p158 = scmp.eq.s32.totalorder %s33, 0
      %p159 = por %p157, %p158
      %p160 = scmp.ne.s32.totalorder %s148, %s149
      %p161 = scmp.eq.s32.totalorder %s34, 1
      %p162 = por %p160, %p161
      %p164 = scmp.ne.s32.totalorder %s149, %s163
      %p165 = scmp.eq.s32.totalorder %s34, 0
      %p166 = por %p164, %p165
      %s168 = sadd.s32 %s167, 1
      %p171 = scmp.eq.s32.totalorder %s28, 1
      %p172 = scmp.ne.s32.totalorder %s167, %s169
      %p173 = scmp.eq.s32.totalorder %s28, 0
      %p174 = por %p172, %p173
      %p175 = scmp.ne.s32.totalorder %s167, %s169
      %p176 = scmp.eq.s32.totalorder %s33, 1
      %p177 = por %p175, %p176
      %p178 = scmp.ne.s32.totalorder %s169, %s170
      %p179 = scmp.eq.s32.totalorder %s33, 0
      %p180 = por %p178, %p179
      %p181 = scmp.ne.s32.totalorder %s169, %s170
      %p182 = scmp.eq.s32.totalorder %s34, 1
      %p183 = por %p181, %p182
      %p185 = scmp.ne.s32.totalorder %s170, %s184
      %p186 = scmp.eq.s32.totalorder %s34, 0
      %p187 = por %p185, %p186
      %s189 = sadd.s32 %s188, 1
      %p192 = scmp.eq.s32.totalorder %s28, 1
      %p193 = scmp.ne.s32.totalorder %s188, %s190
      %p194 = scmp.eq.s32.totalorder %s28, 0
      %p195 = por %p193, %p194
      %p196 = scmp.ne.s32.totalorder %s188, %s190
      %p197 = scmp.eq.s32.totalorder %s33, 1
      %p198 = por %p196, %p197
      %p199 = scmp.ne.s32.totalorder %s190, %s191
      %p200 = scmp.eq.s32.totalorder %s33, 0
      %p201 = por %p199, %p200
      %p202 = scmp.ne.s32.totalorder %s190, %s191
      %p203 = scmp.eq.s32.totalorder %s34, 1
      %p204 = por %p202, %p203
      %p206 = scmp.ne.s32.totalorder %s191, %s205
      %p207 = scmp.eq.s32.totalorder %s34, 0
      %p208 = por %p206, %p207
      %s210 = sadd.s32 %s209, 1
      %p213 = scmp.eq.s32.totalorder %s28, 1
      %p214 = scmp.ne.s32.totalorder %s209, %s211
      %p215 = scmp.eq.s32.totalorder %s28, 0
      %p216 = por %p214, %p215
      %p217 = scmp.ne.s32.totalorder %s209, %s211
      %p218 = scmp.eq.s32.totalorder %s33, 1
      %p219 = por %p217, %p218
      %p220 = scmp.ne.s32.totalorder %s211, %s212
      %p221 = scmp.eq.s32.totalorder %s33, 0
      %p222 = por %p220, %p221
      %p223 = scmp.ne.s32.totalorder %s211, %s212
      %p224 = scmp.eq.s32.totalorder %s34, 1
      %p225 = por %p223, %p224
      %p227 = scmp.ne.s32.totalorder %s212, %s226
      %p228 = scmp.eq.s32.totalorder %s34, 0
      %p229 = por %p227, %p228
      %s231 = sadd.s32 %s230, 1
      %p234 = scmp.eq.s32.totalorder %s28, 1
      %p235 = scmp.ne.s32.totalorder %s230, %s232
      %p236 = scmp.eq.s32.totalorder %s28, 0
      %p237 = por %p235, %p236
      %p238 = scmp.ne.s32.totalorder %s230, %s232
      %p239 = scmp.eq.s32.totalorder %s33, 1
      %p240 = por %p238, %p239
      %p241 = scmp.ne.s32.totalorder %s232, %s233
      %p242 = scmp.eq.s32.totalorder %s33, 0
      %p243 = por %p241, %p242
      %p244 = scmp.ne.s32.totalorder %s232, %s233
      %p245 = scmp.eq.s32.totalorder %s34, 1
      %p246 = por %p244, %p245
      %p248 = scmp.ne.s32.totalorder %s233, %s247
      %p249 = scmp.eq.s32.totalorder %s34, 0
      %p250 = por %p248, %p249
      %s252 = sadd.s32 %s251, 1
      %p255 = scmp.eq.s32.totalorder %s28, 1
      %p256 = scmp.ne.s32.totalorder %s251, %s253
      %p257 = scmp.eq.s32.totalorder %s28, 0
      %p258 = por %p256, %p257
      %p259 = scmp.ne.s32.totalorder %s251, %s253
      %p260 = scmp.eq.s32.totalorder %s33, 1
      %p261 = por %p259, %p260
      %p262 = scmp.ne.s32.totalorder %s253, %s254
      %p263 = scmp.eq.s32.totalorder %s33, 0
      %p264 = por %p262, %p263
      %p265 = scmp.ne.s32.totalorder %s253, %s254
      %p266 = scmp.eq.s32.totalorder %s34, 1
      %p267 = por %p265, %p266
      %p269 = scmp.ne.s32.totalorder %s254, %s268
      %p270 = scmp.eq.s32.totalorder %s34, 0
      %p271 = por %p269, %p270
      %s273 = sadd.s32 %s272, 1
      %p276 = scmp.eq.s32.totalorder %s28, 1
      %p277 = scmp.ne.s32.totalorder %s272, %s274
      %p278 = scmp.eq.s32.totalorder %s28, 0
      %p279 = por %p277, %p278
      %p280 = scmp.ne.s32.totalorder %s272, %s274
      %p281 = scmp.eq.s32.totalorder %s33, 1
      %p282 = por %p280, %p281
      %p283 = scmp.ne.s32.totalorder %s274, %s275
      %p284 = scmp.eq.s32.totalorder %s33, 0
      %p285 = por %p283, %p284
      %p286 = scmp.ne.s32.totalorder %s274, %s275
      %p287 = scmp.eq.s32.totalorder %s34, 1
      %p288 = por %p286, %p287
      %p290 = scmp.ne.s32.totalorder %s275, %s289
      %p291 = scmp.eq.s32.totalorder %s34, 0
      %p292 = por %p290, %p291
      %s294 = sadd.s32 %s293, 1
      %p297 = scmp.eq.s32.totalorder %s28, 1
      %p298 = scmp.ne.s32.totalorder %s293, %s295
      %p299 = scmp.eq.s32.totalorder %s28, 0
      %p300 = por %p298, %p299
      %p301 = scmp.ne.s32.totalorder %s293, %s295
      %p302 = scmp.eq.s32.totalorder %s33, 1
      %p303 = por %p301, %p302
      %p304 = scmp.ne.s32.totalorder %s295, %s296
      %p305 = scmp.eq.s32.totalorder %s33, 0
      %p306 = por %p304, %p305
      %p307 = scmp.ne.s32.totalorder %s295, %s296
      %p308 = scmp.eq.s32.totalorder %s34, 1
      %p309 = por %p307, %p308
      %p311 = scmp.ne.s32.totalorder %s296, %s310
      %p312 = scmp.eq.s32.totalorder %s34, 0
      %p313 = por %p311, %p312
      %s315 = sadd.s32 %s314, 1
      %p318 = scmp.eq.s32.totalorder %s28, 1
      %p319 = scmp.ne.s32.totalorder %s314, %s316
      %p320 = scmp.eq.s32.totalorder %s28, 0
      %p321 = por %p319, %p320
      %p322 = scmp.ne.s32.totalorder %s314, %s316
      %p323 = scmp.eq.s32.totalorder %s33, 1
      %p324 = por %p322, %p323
      %p325 = scmp.ne.s32.totalorder %s316, %s317
      %p326 = scmp.eq.s32.totalorder %s33, 0
      %p327 = por %p325, %p326
      %p328 = scmp.ne.s32.totalorder %s316, %s317
      %p329 = scmp.eq.s32.totalorder %s34, 1
      %p330 = por %p328, %p329
      %p332 = scmp.ne.s32.totalorder %s317, %s331
      %p333 = scmp.eq.s32.totalorder %s34, 0
      %p334 = por %p332, %p333
      %s336 = sadd.s32 %s335, 1
      %p339 = scmp.eq.s32.totalorder %s28, 1
      %p340 = scmp.ne.s32.totalorder %s335, %s337
      %p341 = scmp.eq.s32.totalorder %s28, 0
      %p342 = por %p340, %p341
      %p343 = scmp.ne.s32.totalorder %s335, %s337
      %p344 = scmp.eq.s32.totalorder %s33, 1
      %p345 = por %p343, %p344
      %p346 = scmp.ne.s32.totalorder %s337, %s338
      %p347 = scmp.eq.s32.totalorder %s33, 0
      %p348 = por %p346, %p347
      %p349 = scmp.ne.s32.totalorder %s337, %s338
      %p350 = scmp.eq.s32.totalorder %s34, 1
      %p351 = por %p349, %p350
      %p353 = scmp.ne.s32.totalorder %s338, %s352
      %p354 = scmp.eq.s32.totalorder %s34, 0
      %p355 = por %p353, %p354
      %s357 = sadd.s32 %s356, 1
      %p360 = scmp.eq.s32.totalorder %s28, 1
      %p361 = scmp.ne.s32.totalorder %s356, %s358
      %p362 = scmp.eq.s32.totalorder %s28, 0
      %p363 = por %p361, %p362
      %p364 = scmp.ne.s32.totalorder %s356, %s358
      %p365 = scmp.eq.s32.totalorder %s33, 1
      %p366 = por %p364, %p365
      %p367 = scmp.ne.s32.totalorder %s358, %s359
      %p368 = scmp.eq.s32.totalorder %s33, 0
      %p369 = por %p367, %p368
      %p370 = scmp.ne.s32.totalorder %s358, %s359
      %p371 = scmp.eq.s32.totalorder %s34, 1
      %p372 = por %p370, %p371
      %p374 = scmp.ne.s32.totalorder %s359, %s373
      %p375 = scmp.eq.s32.totalorder %s34, 0
      %p376 = por %p374, %p375
      %s378 = sadd.s32 %s377, 1
      %p381 = scmp.eq.s32.totalorder %s28, 1
      %p382 = scmp.ne.s32.totalorder %s377, %s379
      %p383 = scmp.eq.s32.totalorder %s28, 0
      %p384 = por %p382, %p383
      %p385 = scmp.ne.s32.totalorder %s377, %s379
      %p386 = scmp.eq.s32.totalorder %s33, 1
      %p387 = por %p385, %p386
      %p388 = scmp.ne.s32.totalorder %s379, %s380
      %p389 = scmp.eq.s32.totalorder %s33, 0
      %p390 = por %p388, %p389
      %p391 = scmp.ne.s32.totalorder %s379, %s380
      %p392 = scmp.eq.s32.totalorder %s34, 1
      %p393 = por %p391, %p392
      %p395 = scmp.ne.s32.totalorder %s380, %s394
      %p396 = scmp.eq.s32.totalorder %s34, 0
      %p397 = por %p395, %p396
      %p398 = scmp.le.s32.totalorder 1, %s28
      %p399 = scmp.lt.s32.totalorder %s28, 3
      %p400 = pnand %p398, %p399
      %p401 = pneg %p400
      // Predicated region
      $region9: #{tpu_custom_call.1} parent=5 // pred_check
        _
      $region10: #{tpu_custom_call.1} parent=5 // pred_check_branch
        %403 = sbr.rel (%p400) target = $region12
      $region11: #{tpu_custom_call.1} parent=5 // pred_region
        %s404 = ssub.s32 %s28, 1
        // Predicated region
        $region13: #{tpu_custom_call.1} parent=11 // pred_check
          %p405 = pneg %p75
        $region14: #{tpu_custom_call.1} parent=11 // pred_check_branch
          %407 = sbr.rel (%p405) target = $region16
        $region15: #{tpu_custom_call.1} parent=11 // pred_region
          _
        $region16: #{tpu_custom_call.1} parent=11 // pred_fallthru
          _
        // Predicated region
        $region17: #{tpu_custom_call.1} parent=11 // pred_check
          %p408 = pneg %p96
        $region18: #{tpu_custom_call.1} parent=11 // pred_check_branch
          %410 = sbr.rel (%p408) target = $region20
        $region19: #{tpu_custom_call.1} parent=11 // pred_region
          %s412 = ssub.s32 256, 256
          %413 = vsyncadd [#allocation7], %s412
          %s414 = sshll.u32 [#allocation6], 4
          %s415 = int_to_ptr.vmem [resolvable:$true] %s414
          %420 = dma.hbm_to_vmem [thread:$0]  %s2, 256, %s415, [#allocation7], 128, 128, 8
        $region20: #{tpu_custom_call.1} parent=11 // pred_fallthru
          _
        // Predicated region
        $region21: #{tpu_custom_call.1} parent=11 // pred_check
          %p421 = pneg %p117
        $region22: #{tpu_custom_call.1} parent=11 // pred_check_branch
          %423 = sbr.rel (%p421) target = $region24
        $region23: #{tpu_custom_call.1} parent=11 // pred_region
          _
        $region24: #{tpu_custom_call.1} parent=11 // pred_fallthru
          _
        // Predicated region
        $region25: #{tpu_custom_call.1} parent=11 // pred_check
          %p424 = pneg %p138
        $region26: #{tpu_custom_call.1} parent=11 // pred_check_branch
          %426 = sbr.rel (%p424) target = $region28
        $region27: #{tpu_custom_call.1} parent=11 // pred_region
          %s428 = ssub.s32 6144, 6144
          %429 = vsyncadd [#allocation10], %s428
          %s430 = sshll.u32 [#allocation9], 4
          %s431 = int_to_ptr.vmem [resolvable:$true] %s430
          %436 = dma.hbm_to_vmem [thread:$0]  %s4, 6144, %s431, [#allocation10], 384, 384, 24
        $region28: #{tpu_custom_call.1} parent=11 // pred_fallthru
          _
        // Predicated region
        $region29: #{tpu_custom_call.1} parent=11 // pred_check
          %p437 = pneg %p159
        $region30: #{tpu_custom_call.1} parent=11 // pred_check_branch
          %439 = sbr.rel (%p437) target = $region32
        $region31: #{tpu_custom_call.1} parent=11 // pred_region
          _
        $region32: #{tpu_custom_call.1} parent=11 // pred_fallthru
          _
        // Predicated region
        $region33: #{tpu_custom_call.1} parent=11 // pred_check
          %p440 = pneg %p180
        $region34: #{tpu_custom_call.1} parent=11 // pred_check_branch
          %442 = sbr.rel (%p440) target = $region36
        $region35: #{tpu_custom_call.1} parent=11 // pred_region
          _
        $region36: #{tpu_custom_call.1} parent=11 // pred_fallthru
          _
        // Predicated region
        $region37: #{tpu_custom_call.1} parent=11 // pred_check
          %p443 = pneg %p201
        $region38: #{tpu_custom_call.1} parent=11 // pred_check_branch
          %445 = sbr.rel (%p443) target = $region40
        $region39: #{tpu_custom_call.1} parent=11 // pred_region
          _
        $region40: #{tpu_custom_call.1} parent=11 // pred_fallthru
          _
        // Predicated region
        $region41: #{tpu_custom_call.1} parent=11 // pred_check
          %p446 = pneg %p222
        $region42: #{tpu_custom_call.1} parent=11 // pred_check_branch
          %448 = sbr.rel (%p446) target = $region44
        $region43: #{tpu_custom_call.1} parent=11 // pred_region
          _
        $region44: #{tpu_custom_call.1} parent=11 // pred_fallthru
          _
        // Predicated region
        $region45: #{tpu_custom_call.1} parent=11 // pred_check
          %p449 = pneg %p243
        $region46: #{tpu_custom_call.1} parent=11 // pred_check_branch
          %451 = sbr.rel (%p449) target = $region48
        $region47: #{tpu_custom_call.1} parent=11 // pred_region
          _
        $region48: #{tpu_custom_call.1} parent=11 // pred_fallthru
          _
        // Predicated region
        $region49: #{tpu_custom_call.1} parent=11 // pred_check
          %p452 = pneg %p264
        $region50: #{tpu_custom_call.1} parent=11 // pred_check_branch
          %454 = sbr.rel (%p452) target = $region52
        $region51: #{tpu_custom_call.1} parent=11 // pred_region
          _
        $region52: #{tpu_custom_call.1} parent=11 // pred_fallthru
          _
        // Predicated region
        $region53: #{tpu_custom_call.1} parent=11 // pred_check
          %p455 = pneg %p285
        $region54: #{tpu_custom_call.1} parent=11 // pred_check_branch
          %457 = sbr.rel (%p455) target = $region56
        $region55: #{tpu_custom_call.1} parent=11 // pred_region
          _
        $region56: #{tpu_custom_call.1} parent=11 // pred_fallthru
          _
        // Predicated region
        $region57: #{tpu_custom_call.1} parent=11 // pred_check
          %p458 = pneg %p306
        $region58: #{tpu_custom_call.1} parent=11 // pred_check_branch
          %460 = sbr.rel (%p458) target = $region60
        $region59: #{tpu_custom_call.1} parent=11 // pred_region
          %s462 = ssub.s32 2048, 2048
          %463 = vsyncadd [#allocation10], %s462
          %s464 = sshll.u32 [#allocation11], 4
          %s465 = int_to_ptr.vmem [resolvable:$true] %s464
          %470 = dma.hbm_to_vmem [thread:$0]  %s12, 2048, %s465, [#allocation10], 128, 128, 8
        $region60: #{tpu_custom_call.1} parent=11 // pred_fallthru
          _
        // Predicated region
        $region61: #{tpu_custom_call.1} parent=11 // pred_check
          %p471 = pneg %p327
        $region62: #{tpu_custom_call.1} parent=11 // pred_check_branch
          %473 = sbr.rel (%p471) target = $region64
        $region63: #{tpu_custom_call.1} parent=11 // pred_region
          %s475 = ssub.s32 2048, 2048
          %476 = vsyncadd [#allocation13], %s475
          %s477 = sshll.u32 [#allocation12], 4
          %s478 = int_to_ptr.vmem [resolvable:$true] %s477
          %483 = dma.hbm_to_vmem [thread:$0]  %s13, 2048, %s478, [#allocation13], 128, 128, 8
        $region64: #{tpu_custom_call.1} parent=11 // pred_fallthru
          _
        // Predicated region
        $region65: #{tpu_custom_call.1} parent=11 // pred_check
          %p484 = pneg %p348
        $region66: #{tpu_custom_call.1} parent=11 // pred_check_branch
          %486 = sbr.rel (%p484) target = $region68
        $region67: #{tpu_custom_call.1} parent=11 // pred_region
          _
        $region68: #{tpu_custom_call.1} parent=11 // pred_fallthru
          _
      $region12: #{tpu_custom_call.1} parent=5 // pred_fallthru
        _
      %p487 = scmp.lt.s32.totalorder %s28, 2
      // Predicated region
      $region69: #{tpu_custom_call.1} parent=5 // pred_check
        %p488 = pneg %p487
      $region70: #{tpu_custom_call.1} parent=5 // pred_check_branch
        %490 = sbr.rel (%p488) target = $region72
      $region71: #{tpu_custom_call.1} parent=5 // pred_region
        // Predicated region
        $region73: #{tpu_custom_call.1} parent=71 // pred_check
          %p491 = pneg %p48
        $region74: #{tpu_custom_call.1} parent=71 // pred_check_branch
          %493 = sbr.rel (%p491) target = $region76
        $region75: #{tpu_custom_call.1} parent=71 // pred_region
          %s494 = smul.u32 16, %s28
          %p495 = scmp.lt.s32.totalorder %s494, 31
          %s496 = scalar_select %p495, %s494, 31
          %s497 = smul.addr %s496, 8
          %s498 = scalar_lea.vmem %s0, %s497
          %s499 = smul.u32 16, %s28
        $region76: #{tpu_custom_call.1} parent=71 // pred_fallthru
          _
      $region72: #{tpu_custom_call.1} parent=5 // pred_fallthru
        _
      %p500 = scmp.le.s32.totalorder 1, %s28
      %p501 = scmp.lt.s32.totalorder %s28, 3
      %p502 = pnand %p500, %p501
      %p503 = pneg %p502
      // Predicated region
      $region77: #{tpu_custom_call.1} parent=5 // pred_check
        _
      $region78: #{tpu_custom_call.1} parent=5 // pred_check_branch
        %505 = sbr.rel (%p502) target = $region80
      $region79: #{tpu_custom_call.1} parent=5 // pred_region
        %s506 = ssub.s32 %s28, 1
        // Predicated region
        $region81: #{tpu_custom_call.1} parent=79 // pred_check
          %p507 = pneg %p96
        $region82: #{tpu_custom_call.1} parent=79 // pred_check_branch
          %509 = sbr.rel (%p507) target = $region84
        $region83: #{tpu_custom_call.1} parent=79 // pred_region
          %510 = dma.done [#allocation7], 256
        $region84: #{tpu_custom_call.1} parent=79 // pred_fallthru
          _
        // Predicated region
        $region85: #{tpu_custom_call.1} parent=79 // pred_check
          %p511 = pneg %p138
        $region86: #{tpu_custom_call.1} parent=79 // pred_check_branch
          %513 = sbr.rel (%p511) target = $region88
        $region87: #{tpu_custom_call.1} parent=79 // pred_region
          %514 = dma.done [#allocation10], 6144
        $region88: #{tpu_custom_call.1} parent=79 // pred_fallthru
          _
        // Predicated region
        $region89: #{tpu_custom_call.1} parent=79 // pred_check
          %p515 = pneg %p306
        $region90: #{tpu_custom_call.1} parent=79 // pred_check_branch
          %517 = sbr.rel (%p515) target = $region92
        $region91: #{tpu_custom_call.1} parent=79 // pred_region
          %518 = dma.done [#allocation10], 2048
        $region92: #{tpu_custom_call.1} parent=79 // pred_fallthru
          _
        // Predicated region
        $region93: #{tpu_custom_call.1} parent=79 // pred_check
          %p519 = pneg %p327
        $region94: #{tpu_custom_call.1} parent=79 // pred_check_branch
          %521 = sbr.rel (%p519) target = $region96
        $region95: #{tpu_custom_call.1} parent=79 // pred_region
          %522 = dma.done [#allocation13], 2048
        $region96: #{tpu_custom_call.1} parent=79 // pred_fallthru
          _
        %s523 = smul.u32 16, %s33
        %p524 = scmp.lt.s32.totalorder %s523, 31
        %s525 = scalar_select %p524, %s523, 31
        %s526 = smul.addr %s525, 8
        %s527 = scalar_lea.vmem %s0, %s526
        %p528 = pneg %p54
        %p529 = pneg %p51
        %p530 = pneg %p75
        %p531 = pneg %p72
        %p532 = pneg %p96
        %p533 = pneg %p93
        %p534 = pneg %p117
        %p535 = pneg %p114
        %p536 = pneg %p138
        %p537 = pneg %p135
        %p538 = pneg %p159
        %p539 = pneg %p156
        %p540 = pneg %p180
        %p541 = pneg %p177
        %p542 = pneg %p201
        %p543 = pneg %p198
        %p544 = pneg %p222
        %p545 = pneg %p219
        %p546 = pneg %p243
        %p547 = pneg %p240
        %p548 = pneg %p264
        %p549 = pneg %p261
        %p550 = pneg %p285
        %p551 = pneg %p282
        %p552 = pneg %p306
        %p553 = pneg %p303
        %p554 = pneg %p327
        %p555 = pneg %p324
        %p556 = pneg %p348
        %p557 = pneg %p345
        %p558 = pneg %p369
        %p559 = pneg %p366
        %p560 = pneg %p390
        %p561 = pneg %p387
        %s562 = smul.u32 16, %s33
        %p563 = scmp.lt.s32.totalorder %s562, 31
        %s564 = scalar_select %p563, %s562, 31
        %s565 = smul.addr %s564, 8
        %s566 = scalar_lea.vmem %s0, %s565
        %s567 = smul.u32 16, %s33
        %p568 = scmp.eq.s32.totalorder %s33, 0
        // Predicated region
        $region97: #{tpu_custom_call.1} parent=79 // pred_check
          %p569 = pneg %p568
        $region98: #{tpu_custom_call.1} parent=79 // pred_check_branch
          %571 = sbr.rel (%p569) target = $region100
        $region99: #{tpu_custom_call.1} parent=79 // pred_region
          %v572 = vld [vmem:[%s1] sm:$0xff]
          %v573 = vld [vmem:[%s1 + $0x8] sm:$0xff]
          %v574 = vld [vmem:[#allocation6] sm:$0xff]
          %v575 = vld [vmem:[#allocation6 + $0x8] sm:$0xff]
          %v576 = vld [vmem:[#allocation9] sm:$0xff]
          %v577 = vld [vmem:[#allocation9 + $0x8] sm:$0xff]
          %v578 = vld [vmem:[#allocation9 + $0x10] sm:$0xff]
          %v579 = vld [vmem:[#allocation9 + $0x18] sm:$0xff]
          %v580 = vld [vmem:[#allocation9 + $0x20] sm:$0xff]
          %v581 = vld [vmem:[#allocation9 + $0x28] sm:$0xff]
          %v582 = vld [vmem:[#allocation9 + $0x30] sm:$0xff]
          %v583 = vld [vmem:[#allocation9 + $0x38] sm:$0xff]
          %v584 = vld [vmem:[#allocation9 + $0x40] sm:$0xff]
          %v585 = vld [vmem:[#allocation9 + $0x48] sm:$0xff]
          %v586 = vld [vmem:[#allocation9 + $0x50] sm:$0xff]
          %v587 = vld [vmem:[#allocation9 + $0x58] sm:$0xff]
          %v588 = vld [vmem:[#allocation9 + $0x60] sm:$0xff]
          %v589 = vld [vmem:[#allocation9 + $0x68] sm:$0xff]
          %v590 = vld [vmem:[#allocation9 + $0x70] sm:$0xff]
          %v591 = vld [vmem:[#allocation9 + $0x78] sm:$0xff]
          %v592 = vld [vmem:[#allocation9 + $0x80] sm:$0xff]
          %v593 = vld [vmem:[#allocation9 + $0x88] sm:$0xff]
          %v594 = vld [vmem:[#allocation9 + $0x90] sm:$0xff]
          %v595 = vld [vmem:[#allocation9 + $0x98] sm:$0xff]
          %v596 = vld [vmem:[#allocation9 + $0xa0] sm:$0xff]
          %v597 = vld [vmem:[#allocation9 + $0xa8] sm:$0xff]
          %v598 = vld [vmem:[#allocation9 + $0xb0] sm:$0xff]
          %v599 = vld [vmem:[#allocation9 + $0xb8] sm:$0xff]
          %v600 = vld [vmem:[#allocation9 + $0xc0] sm:$0xff]
          %v601 = vld [vmem:[#allocation9 + $0xc8] sm:$0xff]
          %v602 = vld [vmem:[#allocation9 + $0xd0] sm:$0xff]
          %v603 = vld [vmem:[#allocation9 + $0xd8] sm:$0xff]
          %v604 = vld [vmem:[#allocation9 + $0xe0] sm:$0xff]
          %v605 = vld [vmem:[#allocation9 + $0xe8] sm:$0xff]
          %v606 = vld [vmem:[#allocation9 + $0xf0] sm:$0xff]
          %v607 = vld [vmem:[#allocation9 + $0xf8] sm:$0xff]
          %v608 = vld [vmem:[#allocation9 + $0x100] sm:$0xff]
          %v609 = vld [vmem:[#allocation9 + $0x108] sm:$0xff]
          %v610 = vld [vmem:[#allocation9 + $0x110] sm:$0xff]
          %v611 = vld [vmem:[#allocation9 + $0x118] sm:$0xff]
          %v612 = vld [vmem:[#allocation9 + $0x120] sm:$0xff]
          %v613 = vld [vmem:[#allocation9 + $0x128] sm:$0xff]
          %v614 = vld [vmem:[#allocation9 + $0x130] sm:$0xff]
          %v615 = vld [vmem:[#allocation9 + $0x138] sm:$0xff]
          %v616 = vld [vmem:[#allocation9 + $0x140] sm:$0xff]
          %v617 = vld [vmem:[#allocation9 + $0x148] sm:$0xff]
          %v618 = vld [vmem:[#allocation9 + $0x150] sm:$0xff]
          %v619 = vld [vmem:[#allocation9 + $0x158] sm:$0xff]
          %v620 = vld [vmem:[#allocation9 + $0x160] sm:$0xff]
          %v621 = vld [vmem:[#allocation9 + $0x168] sm:$0xff]
          %v622 = vld [vmem:[#allocation9 + $0x170] sm:$0xff]
          %v623 = vld [vmem:[#allocation9 + $0x178] sm:$0xff]
          %v624 = vld [vmem:[%s5] sm:$0x7]
          %v626 = vlaneseq
          %v627 = vshrl.u32 %v626, 7
          %v628 = vsub.s32 0, %v627
          %v629 = vrot.slane %v624, %v628
          %v630 = vlaneseq
          %v631 = vshrl.u32 %v630, 7
          %v632 = vsub.s32 1, %v631
          %v633 = vrot.slane %v624, %v632
          %v634 = vlaneseq
          %v635 = vshrl.u32 %v634, 7
          %v636 = vsub.s32 2, %v635
          %v637 = vrot.slane %v624, %v636
          %641 = vmatprep.subr.mxu0 %v577
          %642 = vmatpush1.msra.mxu0 %v576
          %643 = vmatprep.subr.mxu0 %v580
          %644 = vmatpush1.msra.mxu0 %v579
          %645 = vmatprep.subr.mxu0 %v583
          %646 = vmatpush1.msra.mxu0 %v582
          %647 = vmatprep.subr.mxu0 %v586
          %648 = vmatpush1.msra.mxu0 %v585
          %649 = vmatprep.subr.mxu0 %v589
          %650 = vmatpush1.msra.mxu0 %v588
          %651 = vmatprep.subr.mxu0 %v592
          %652 = vmatpush1.msra.mxu0 %v591
          %653 = vmatprep.subr.mxu0 %v595
          %654 = vmatpush1.msra.mxu0 %v594
          %655 = vmatprep.subr.mxu0 %v598
          %656 = vmatpush1.msra.mxu0 %v597
          %657 = vmatprep.subr.mxu0 %v601
          %658 = vmatpush1.msra.mxu0 %v600
          %659 = vmatprep.subr.mxu0 %v604
          %660 = vmatpush1.msra.mxu0 %v603
          %661 = vmatprep.subr.mxu0 %v607
          %662 = vmatpush1.msra.mxu0 %v606
          %663 = vmatprep.subr.mxu0 %v610
          %664 = vmatpush1.msra.mxu0 %v609
          %665 = vmatprep.subr.mxu0 %v613
          %666 = vmatpush1.msra.mxu0 %v612
          %667 = vmatprep.subr.mxu0 %v616
          %668 = vmatpush1.msra.mxu0 %v615
          %669 = vmatprep.subr.mxu0 %v619
          %670 = vmatpush1.msra.mxu0 %v618
          %671 = vmatprep.subr.mxu0 %v622
          %672 = vmatpush1.msra.mxu0 %v621
          %673 = vmatprep.subr.mxu0 0.0
          %674 = vmatpush1.msra.mxu0 0.0
          %675 = vmatprep.subr.mxu0 0.0
          %676 = vmatpush1.msra.mxu0 0.0
          %677 = vmatprep.subr.mxu0 0.0
          %678 = vmatpush1.msra.mxu0 0.0
          %679 = vmatprep.subr.mxu0 0.0
          %680 = vmatpush1.msra.mxu0 0.0
          %681 = vmatprep.subr.mxu0 0.0
          %682 = vmatpush1.msra.mxu0 0.0
          %683 = vmatprep.subr.mxu0 0.0
          %684 = vmatpush1.msra.mxu0 0.0
          %685 = vmatprep.subr.mxu0 0.0
          %686 = vmatpush1.msra.mxu0 0.0
          %687 = vmatprep.subr.mxu0 0.0
          %688 = vmatpush1.msra.mxu0 0.0
          %689 = vmatprep.subr.mxu0 0.0
          %690 = vmatpush1.msra.mxu0 0.0
          %691 = vmatprep.subr.mxu0 0.0
          %692 = vmatpush1.msra.mxu0 0.0
          %693 = vmatprep.subr.mxu0 0.0
          %694 = vmatpush1.msra.mxu0 0.0
          %695 = vmatprep.subr.mxu0 0.0
          %696 = vmatpush1.msra.mxu0 0.0
          %697 = vmatprep.subr.mxu0 0.0
          %698 = vmatpush1.msra.mxu0 0.0
          %699 = vmatprep.subr.mxu0 0.0
          %700 = vmatpush1.msra.mxu0 0.0
          %701 = vmatprep.subr.mxu0 0.0
          %702 = vmatpush1.msra.mxu0 0.0
          %703 = vmatprep.subr.mxu0 0.0
          %704 = vmatpush1.msra.mxu0 0.0
          %705 = vmatprep.mubr.f32.mxu0 0.0
          %706 = vmatmul.mubr.f32.gmra.mrb[0].mxu0 %v572
          %v707 = vpop.f32.mrb[0].mxu0
          %v708 = vadd.f32 %v629, %v707
          %v709 = vpop.f32.mrb[0].mxu0
          %v710 = vadd.f32 %v633, %v709
          %711 = vmatprep.mubr.f32.mxu0 0.0
          %712 = vmatmul.mubr.f32.gmra.mrb[0].mxu0 %v573
          %v713 = vpop.f32.mrb[0].mxu0
          %v714 = vadd.f32 %v629, %v713
          %v715 = vpop.f32.mrb[0].mxu0
          %v716 = vadd.f32 %v633, %v715
          %717 = vdwg.mxu0
          %718 = vmatprep.subr.mxu0 0.0
          %719 = vmatpush1.msra.mxu0 %v578
          %720 = vmatprep.subr.mxu0 0.0
          %721 = vmatpush1.msra.mxu0 %v581
          %722 = vmatprep.subr.mxu0 0.0
          %723 = vmatpush1.msra.mxu0 %v584
          %724 = vmatprep.subr.mxu0 0.0
          %725 = vmatpush1.msra.mxu0 %v587
          %726 = vmatprep.subr.mxu0 0.0
          %727 = vmatpush1.msra.mxu0 %v590
          %728 = vmatprep.subr.mxu0 0.0
          %729 = vmatpush1.msra.mxu0 %v593
          %730 = vmatprep.subr.mxu0 0.0
          %731 = vmatpush1.msra.mxu0 %v596
          %732 = vmatprep.subr.mxu0 0.0
          %733 = vmatpush1.msra.mxu0 %v599
          %734 = vmatprep.subr.mxu0 0.0
          %735 = vmatpush1.msra.mxu0 %v602
          %736 = vmatprep.subr.mxu0 0.0
          %737 = vmatpush1.msra.mxu0 %v605
          %738 = vmatprep.subr.mxu0 0.0
          %739 = vmatpush1.msra.mxu0 %v608
          %740 = vmatprep.subr.mxu0 0.0
          %741 = vmatpush1.msra.mxu0 %v611
          %742 = vmatprep.subr.mxu0 0.0
          %743 = vmatpush1.msra.mxu0 %v614
          %744 = vmatprep.subr.mxu0 0.0
          %745 = vmatpush1.msra.mxu0 %v617
          %746 = vmatprep.subr.mxu0 0.0
          %747 = vmatpush1.msra.mxu0 %v620
          %748 = vmatprep.subr.mxu0 0.0
          %749 = vmatpush1.msra.mxu0 %v623
          %750 = vmatprep.subr.mxu0 0.0
          %751 = vmatpush1.msra.mxu0 0.0
          %752 = vmatprep.subr.mxu0 0.0
          %753 = vmatpush1.msra.mxu0 0.0
          %754 = vmatprep.subr.mxu0 0.0
          %755 = vmatpush1.msra.mxu0 0.0
          %756 = vmatprep.subr.mxu0 0.0
          %757 = vmatpush1.msra.mxu0 0.0
          %758 = vmatprep.subr.mxu0 0.0
          %759 = vmatpush1.msra.mxu0 0.0
          %760 = vmatprep.subr.mxu0 0.0
          %761 = vmatpush1.msra.mxu0 0.0
          %762 = vmatprep.subr.mxu0 0.0
          %763 = vmatpush1.msra.mxu0 0.0
          %764 = vmatprep.subr.mxu0 0.0
          %765 = vmatpush1.msra.mxu0 0.0
          %766 = vmatprep.subr.mxu0 0.0
          %767 = vmatpush1.msra.mxu0 0.0
          %768 = vmatprep.subr.mxu0 0.0
          %769 = vmatpush1.msra.mxu0 0.0
          %770 = vmatprep.subr.mxu0 0.0
          %771 = vmatpush1.msra.mxu0 0.0
          %772 = vmatprep.subr.mxu0 0.0
          %773 = vmatpush1.msra.mxu0 0.0
          %774 = vmatprep.subr.mxu0 0.0
          %775 = vmatpush1.msra.mxu0 0.0
          %776 = vmatprep.subr.mxu0 0.0
          %777 = vmatpush1.msra.mxu0 0.0
          %778 = vmatprep.subr.mxu0 0.0
          %779 = vmatpush1.msra.mxu0 0.0
          %780 = vmatprep.subr.mxu0 0.0
          %781 = vmatpush1.msra.mxu0 0.0
          %782 = vmatprep.mubr.f32.mxu0 0.0
          %783 = vmatmul.mubr.f32.gmra.mrb[0].mxu0 %v572
          %v784 = vpop.f32.mrb[0].mxu0
          %v785 = vadd.f32 %v637, %v784
          %v786 = vpop.f32.mrb[0].mxu0
          %787 = vmatprep.mubr.f32.mxu0 0.0
          %788 = vmatmul.mubr.f32.gmra.mrb[0].mxu0 %v573
          %v789 = vpop.f32.mrb[0].mxu0
          %v790 = vadd.f32 %v637, %v789
          %v791 = vpop.f32.mrb[0].mxu0
          %792 = vdwg.mxu0
          %793 = vst [vmem:[#allocation2] sm:$0xff] %v708
          %794 = vst [vmem:[#allocation2 + $0x8] sm:$0xff] %v574
          %795 = vst [vmem:[#allocation2 + $0x10] sm:$0xff] %v714
          %796 = vst [vmem:[#allocation2 + $0x18] sm:$0xff] %v575
          %v797 = vsub.f32 0.0, %v574
          %v798 = vsub.f32 0.0, %v575
          %799 = vst [vmem:[#allocation3] sm:$0xff] %v710
          %800 = vst [vmem:[#allocation3 + $0x8] sm:$0xff] %v797
          %801 = vst [vmem:[#allocation3 + $0x10] sm:$0xff] %v716
          %802 = vst [vmem:[#allocation3 + $0x18] sm:$0xff] %v798
          %803 = vst [vmem:[#allocation4] sm:$0xff] %v785
          %804 = vst [vmem:[#allocation4 + $0x8] sm:$0xff] %v790
          %805 = vst [vmem:[#allocation5] sm:$0xff] 0.0
          %806 = vst [vmem:[#allocation5 + $0x8] sm:$0xff] 0.0
          %807 = vst [vmem:[#allocation5 + $0x10] sm:$0xff] 0.0
          %808 = vst [vmem:[#allocation5 + $0x18] sm:$0xff] 0.0
        $region100: #{tpu_custom_call.1} parent=79 // pred_fallthru
          _
        %v809 = vlaneseq
        %v810 = vand.u32 %v809, 127
        %v811 = vld [vmem:[%s566] sm:$0xff]
        %v812 = vld [vmem:[%s566 + $0x8] sm:$0xff]
        %v813 = vld [vmem:[%s566 + $0x10] sm:$0xff]
        %v814 = vld [vmem:[%s566 + $0x18] sm:$0xff]
        %v815 = vld [vmem:[%s566 + $0x20] sm:$0xff]
        %v816 = vld [vmem:[%s566 + $0x28] sm:$0xff]
        %v817 = vld [vmem:[%s566 + $0x30] sm:$0xff]
        %v818 = vld [vmem:[%s566 + $0x38] sm:$0xff]
        %v819 = vld [vmem:[%s566 + $0x40] sm:$0xff]
        %v820 = vld [vmem:[%s566 + $0x48] sm:$0xff]
        %v821 = vld [vmem:[%s566 + $0x50] sm:$0xff]
        %v822 = vld [vmem:[%s566 + $0x58] sm:$0xff]
        %v823 = vld [vmem:[%s566 + $0x60] sm:$0xff]
        %v824 = vld [vmem:[%s566 + $0x68] sm:$0xff]
        %v825 = vld [vmem:[%s566 + $0x70] sm:$0xff]
        %v826 = vld [vmem:[%s566 + $0x78] sm:$0xff]
        %827 = vset.pattern.permute.xlu0 0
        %828 = vperm.xlu0 %827, %v811
        %v829 = vpop.permute.xlu0 %828
        %830 = vset.pattern.permute.xlu0 0
        %831 = vperm.xlu0 %830, %v812
        %v832 = vpop.permute.xlu0 %831
        %833 = vset.pattern.permute.xlu0 0
        %834 = vperm.xlu0 %833, %v813
        %v835 = vpop.permute.xlu0 %834
        %836 = vset.pattern.permute.xlu0 0
        %837 = vperm.xlu0 %836, %v814
        %v838 = vpop.permute.xlu0 %837
        %839 = vset.pattern.permute.xlu0 0
        %840 = vperm.xlu0 %839, %v815
        %v841 = vpop.permute.xlu0 %840
        %842 = vset.pattern.permute.xlu0 0
        %843 = vperm.xlu0 %842, %v816
        %v844 = vpop.permute.xlu0 %843
        %845 = vset.pattern.permute.xlu0 0
        %846 = vperm.xlu0 %845, %v817
        %v847 = vpop.permute.xlu0 %846
        %848 = vset.pattern.permute.xlu0 0
        %849 = vperm.xlu0 %848, %v818
        %v850 = vpop.permute.xlu0 %849
        %851 = vset.pattern.permute.xlu0 0
        %852 = vperm.xlu0 %851, %v819
        %v853 = vpop.permute.xlu0 %852
        %854 = vset.pattern.permute.xlu0 0
        %855 = vperm.xlu0 %854, %v820
        %v856 = vpop.permute.xlu0 %855
        %857 = vset.pattern.permute.xlu0 0
        %858 = vperm.xlu0 %857, %v821
        %v859 = vpop.permute.xlu0 %858
        %860 = vset.pattern.permute.xlu0 0
        %861 = vperm.xlu0 %860, %v822
        %v862 = vpop.permute.xlu0 %861
        %863 = vset.pattern.permute.xlu0 0
        %864 = vperm.xlu0 %863, %v823
        %v865 = vpop.permute.xlu0 %864
        %866 = vset.pattern.permute.xlu0 0
        %867 = vperm.xlu0 %866, %v824
        %v868 = vpop.permute.xlu0 %867
        %869 = vset.pattern.permute.xlu0 0
        %870 = vperm.xlu0 %869, %v825
        %v871 = vpop.permute.xlu0 %870
        %872 = vset.pattern.permute.xlu0 0
        %873 = vperm.xlu0 %872, %v826
        %v874 = vpop.permute.xlu0 %873
        %vm875 = vcmp.eq.s32.totalorder %v829, %v810
        %vm876 = vcmp.eq.s32.totalorder %v832, %v810
        %vm877 = vcmp.eq.s32.totalorder %v835, %v810
        %vm878 = vcmp.eq.s32.totalorder %v838, %v810
        %vm879 = vcmp.eq.s32.totalorder %v841, %v810
        %vm880 = vcmp.eq.s32.totalorder %v844, %v810
        %vm881 = vcmp.eq.s32.totalorder %v847, %v810
        %vm882 = vcmp.eq.s32.totalorder %v850, %v810
        %vm883 = vcmp.eq.s32.totalorder %v853, %v810
        %vm884 = vcmp.eq.s32.totalorder %v856, %v810
        %vm885 = vcmp.eq.s32.totalorder %v859, %v810
        %vm886 = vcmp.eq.s32.totalorder %v862, %v810
        %vm887 = vcmp.eq.s32.totalorder %v865, %v810
        %vm888 = vcmp.eq.s32.totalorder %v868, %v810
        %vm889 = vcmp.eq.s32.totalorder %v871, %v810
        %vm890 = vcmp.eq.s32.totalorder %v874, %v810
        %v891 = vsel %vm875, 1, 0
        %v892 = vsel %vm876, 1, 0
        %v893 = vsel %vm877, 1, 0
        %v894 = vsel %vm878, 1, 0
        %v895 = vsel %vm879, 1, 0
        %v896 = vsel %vm880, 1, 0
        %v897 = vsel %vm881, 1, 0
        %v898 = vsel %vm882, 1, 0
        %v899 = vsel %vm883, 1, 0
        %v900 = vsel %vm884, 1, 0
        %v901 = vsel %vm885, 1, 0
        %v902 = vsel %vm886, 1, 0
        %v903 = vsel %vm887, 1, 0
        %v904 = vsel %vm888, 1, 0
        %v905 = vsel %vm889, 1, 0
        %v906 = vsel %vm890, 1, 0
        %v907 = vcvt.s32.f32 %v891
        %v908 = vcvt.s32.f32 %v892
        %v909 = vcvt.s32.f32 %v893
        %v910 = vcvt.s32.f32 %v894
        %v911 = vcvt.s32.f32 %v895
        %v912 = vcvt.s32.f32 %v896
        %v913 = vcvt.s32.f32 %v897
        %v914 = vcvt.s32.f32 %v898
        %v915 = vcvt.s32.f32 %v899
        %v916 = vcvt.s32.f32 %v900
        %v917 = vcvt.s32.f32 %v901
        %v918 = vcvt.s32.f32 %v902
        %v919 = vcvt.s32.f32 %v903
        %v920 = vcvt.s32.f32 %v904
        %v921 = vcvt.s32.f32 %v905
        %v922 = vcvt.s32.f32 %v906
        %923 = vset.pattern.permute.xlu0 1
        %924 = vperm.xlu0 %923, %v811
        %v925 = vpop.permute.xlu0 %924
        %926 = vset.pattern.permute.xlu0 1
        %927 = vperm.xlu0 %926, %v812
        %v928 = vpop.permute.xlu0 %927
        %929 = vset.pattern.permute.xlu0 1
        %930 = vperm.xlu0 %929, %v813
        %v931 = vpop.permute.xlu0 %930
        %932 = vset.pattern.permute.xlu0 1
        %933 = vperm.xlu0 %932, %v814
        %v934 = vpop.permute.xlu0 %933
        %935 = vset.pattern.permute.xlu0 1
        %936 = vperm.xlu0 %935, %v815
        %v937 = vpop.permute.xlu0 %936
        %938 = vset.pattern.permute.xlu0 1
        %939 = vperm.xlu0 %938, %v816
        %v940 = vpop.permute.xlu0 %939
        %941 = vset.pattern.permute.xlu0 1
        %942 = vperm.xlu0 %941, %v817
        %v943 = vpop.permute.xlu0 %942
        %944 = vset.pattern.permute.xlu0 1
        %945 = vperm.xlu0 %944, %v818
        %v946 = vpop.permute.xlu0 %945
        %947 = vset.pattern.permute.xlu0 1
        %948 = vperm.xlu0 %947, %v819
        %v949 = vpop.permute.xlu0 %948
        %950 = vset.pattern.permute.xlu0 1
        %951 = vperm.xlu0 %950, %v820
        %v952 = vpop.permute.xlu0 %951
        %953 = vset.pattern.permute.xlu0 1
        %954 = vperm.xlu0 %953, %v821
        %v955 = vpop.permute.xlu0 %954
        %956 = vset.pattern.permute.xlu0 1
        %957 = vperm.xlu0 %956, %v822
        %v958 = vpop.permute.xlu0 %957
        %959 = vset.pattern.permute.xlu0 1
        %960 = vperm.xlu0 %959, %v823
        %v961 = vpop.permute.xlu0 %960
        %962 = vset.pattern.permute.xlu0 1
        %963 = vperm.xlu0 %962, %v824
        %v964 = vpop.permute.xlu0 %963
        %965 = vset.pattern.permute.xlu0 1
        %966 = vperm.xlu0 %965, %v825
        %v967 = vpop.permute.xlu0 %966
        %968 = vset.pattern.permute.xlu0 1
        %969 = vperm.xlu0 %968, %v826
        %v970 = vpop.permute.xlu0 %969
        %vm971 = vcmp.eq.s32.totalorder %v925, %v810
        %vm972 = vcmp.eq.s32.totalorder %v928, %v810
        %vm973 = vcmp.eq.s32.totalorder %v931, %v810
        %vm974 = vcmp.eq.s32.totalorder %v934, %v810
        %vm975 = vcmp.eq.s32.totalorder %v937, %v810
        %vm976 = vcmp.eq.s32.totalorder %v940, %v810
        %vm977 = vcmp.eq.s32.totalorder %v943, %v810
        %vm978 = vcmp.eq.s32.totalorder %v946, %v810
        %vm979 = vcmp.eq.s32.totalorder %v949, %v810
        %vm980 = vcmp.eq.s32.totalorder %v952, %v810
        %vm981 = vcmp.eq.s32.totalorder %v955, %v810
        %vm982 = vcmp.eq.s32.totalorder %v958, %v810
        %vm983 = vcmp.eq.s32.totalorder %v961, %v810
        %vm984 = vcmp.eq.s32.totalorder %v964, %v810
        %vm985 = vcmp.eq.s32.totalorder %v967, %v810
        %vm986 = vcmp.eq.s32.totalorder %v970, %v810
        %v987 = vsel %vm971, 1, 0
        %v988 = vsel %vm972, 1, 0
        %v989 = vsel %vm973, 1, 0
        %v990 = vsel %vm974, 1, 0
        %v991 = vsel %vm975, 1, 0
        %v992 = vsel %vm976, 1, 0
        %v993 = vsel %vm977, 1, 0
        %v994 = vsel %vm978, 1, 0
        %v995 = vsel %vm979, 1, 0
        %v996 = vsel %vm980, 1, 0
        %v997 = vsel %vm981, 1, 0
        %v998 = vsel %vm982, 1, 0
        %v999 = vsel %vm983, 1, 0
        %v1000 = vsel %vm984, 1, 0
        %v1001 = vsel %vm985, 1, 0
        %v1002 = vsel %vm986, 1, 0
        %v1003 = vcvt.s32.f32 %v987
        %v1004 = vcvt.s32.f32 %v988
        %v1005 = vcvt.s32.f32 %v989
        %v1006 = vcvt.s32.f32 %v990
        %v1007 = vcvt.s32.f32 %v991
        %v1008 = vcvt.s32.f32 %v992
        %v1009 = vcvt.s32.f32 %v993
        %v1010 = vcvt.s32.f32 %v994
        %v1011 = vcvt.s32.f32 %v995
        %v1012 = vcvt.s32.f32 %v996
        %v1013 = vcvt.s32.f32 %v997
        %v1014 = vcvt.s32.f32 %v998
        %v1015 = vcvt.s32.f32 %v999
        %v1016 = vcvt.s32.f32 %v1000
        %v1017 = vcvt.s32.f32 %v1001
        %v1018 = vcvt.s32.f32 %v1002
        %v1019 = vld [vmem:[#allocation2] sm:$0xff]
        %v1020 = vld [vmem:[#allocation2 + $0x8] sm:$0xff]
        %v1021 = vld [vmem:[#allocation2 + $0x10] sm:$0xff]
        %v1022 = vld [vmem:[#allocation2 + $0x18] sm:$0xff]
        %v1023 = vld [vmem:[#allocation3] sm:$0xff]
        %v1024 = vld [vmem:[#allocation3 + $0x8] sm:$0xff]
        %v1025 = vld [vmem:[#allocation3 + $0x10] sm:$0xff]
        %v1026 = vld [vmem:[#allocation3 + $0x18] sm:$0xff]
        %vm1027 = vcmask 130048
        %v1029 = vsel %vm1027, %v1003, 0
        %v1032 = vsel %vm1027, %v1004, 0
        %v1035 = vsel %vm1027, %v1005, 0
        %v1038 = vsel %vm1027, %v1006, 0
        %v1041 = vsel %vm1027, %v1007, 0
        %v1044 = vsel %vm1027, %v1008, 0
        %v1047 = vsel %vm1027, %v1009, 0
        %v1050 = vsel %vm1027, %v1010, 0
        %v1053 = vsel %vm1027, %v1011, 0
        %v1056 = vsel %vm1027, %v1012, 0
        %v1059 = vsel %vm1027, %v1013, 0
        %v1062 = vsel %vm1027, %v1014, 0
        %v1065 = vsel %vm1027, %v1015, 0
        %v1068 = vsel %vm1027, %v1016, 0
        %v1071 = vsel %vm1027, %v1017, 0
        %v1074 = vsel %vm1027, %v1018, 0
        %1076 = vmatprep.subr.mxu0 %v1024
        %1077 = vmatpush1.msra.mxu0 %v1023
        %1078 = vmatprep.subr.mxu0 %v1026
        %1079 = vmatpush1.msra.mxu0 %v1025
        %1080 = vmatprep.subr.mxu0 0.0
        %1081 = vmatpush1.msra.mxu0 0.0
        %1082 = vmatprep.subr.mxu0 0.0
        %1083 = vmatpush1.msra.mxu0 0.0
        %1084 = vmatprep.subr.mxu0 0.0
        %1085 = vmatpush1.msra.mxu0 0.0
        %1086 = vmatprep.subr.mxu0 0.0
        %1087 = vmatpush1.msra.mxu0 0.0
        %1088 = vmatprep.subr.mxu0 0.0
        %1089 = vmatpush1.msra.mxu0 0.0
        %1090 = vmatprep.subr.mxu0 0.0
        %1091 = vmatpush1.msra.mxu0 0.0
        %1092 = vmatprep.subr.mxu0 0.0
        %1093 = vmatpush1.msra.mxu0 0.0
        %1094 = vmatprep.subr.mxu0 0.0
        %1095 = vmatpush1.msra.mxu0 0.0
        %1096 = vmatprep.subr.mxu0 0.0
        %1097 = vmatpush1.msra.mxu0 0.0
        %1098 = vmatprep.subr.mxu0 0.0
        %1099 = vmatpush1.msra.mxu0 0.0
        %1100 = vmatprep.subr.mxu0 0.0
        %1101 = vmatpush1.msra.mxu0 0.0
        %1102 = vmatprep.subr.mxu0 0.0
        %1103 = vmatpush1.msra.mxu0 0.0
        %1104 = vmatprep.subr.mxu0 0.0
        %1105 = vmatpush1.msra.mxu0 0.0
        %1106 = vmatprep.subr.mxu0 0.0
        %1107 = vmatpush1.msra.mxu0 0.0
        %1108 = vmatprep.subr.mxu0 0.0
        %1109 = vmatpush1.msra.mxu0 0.0
        %1110 = vmatprep.subr.mxu0 0.0
        %1111 = vmatpush1.msra.mxu0 0.0
        %1112 = vmatprep.subr.mxu0 0.0
        %1113 = vmatpush1.msra.mxu0 0.0
        %1114 = vmatprep.subr.mxu0 0.0
        %1115 = vmatpush1.msra.mxu0 0.0
        %1116 = vmatprep.subr.mxu0 0.0
        %1117 = vmatpush1.msra.mxu0 0.0
        %1118 = vmatprep.subr.mxu0 0.0
        %1119 = vmatpush1.msra.mxu0 0.0
        %1120 = vmatprep.subr.mxu0 0.0
        %1121 = vmatpush1.msra.mxu0 0.0
        %1122 = vmatprep.subr.mxu0 0.0
        %1123 = vmatpush1.msra.mxu0 0.0
        %1124 = vmatprep.subr.mxu0 0.0
        %1125 = vmatpush1.msra.mxu0 0.0
        %1126 = vmatprep.subr.mxu0 0.0
        %1127 = vmatpush1.msra.mxu0 0.0
        %1128 = vmatprep.subr.mxu0 0.0
        %1129 = vmatpush1.msra.mxu0 0.0
        %1130 = vmatprep.subr.mxu0 0.0
        %1131 = vmatpush1.msra.mxu0 0.0
        %1132 = vmatprep.subr.mxu0 0.0
        %1133 = vmatpush1.msra.mxu0 0.0
        %1134 = vmatprep.subr.mxu0 0.0
        %1135 = vmatpush1.msra.mxu0 0.0
        %1136 = vmatprep.subr.mxu0 0.0
        %1137 = vmatpush1.msra.mxu0 0.0
        %1138 = vmatprep.subr.mxu0 0.0
        %1139 = vmatpush1.msra.mxu0 0.0
        %1140 = vmatprep.mubr.f32.mxu0 0.0
        %1141 = vmatmul.mubr.f32.gmra.mrb[0].mxu0 %v1029
        %v1142 = vpop.f32.mrb[0].mxu0
        %v1143 = vadd.f32 0.0, %v1142
        %v1144 = vpop.f32.mrb[0].mxu0
        %v1145 = vadd.f32 0.0, %v1144
        %1146 = vmatprep.mubr.f32.mxu0 0.0
        %1147 = vmatmul.mubr.f32.gmra.mrb[0].mxu0 %v1032
        %v1148 = vpop.f32.mrb[0].mxu0
        %v1149 = vadd.f32 0.0, %v1148
        %v1150 = vpop.f32.mrb[0].mxu0
        %v1151 = vadd.f32 0.0, %v1150
        %1152 = vmatprep.mubr.f32.mxu0 0.0
        %1153 = vmatmul.mubr.f32.gmra.mrb[0].mxu0 %v1035
        %v1154 = vpop.f32.mrb[0].mxu0
        %v1155 = vadd.f32 0.0, %v1154
        %v1156 = vpop.f32.mrb[0].mxu0
        %v1157 = vadd.f32 0.0, %v1156
        %1158 = vmatprep.mubr.f32.mxu0 0.0
        %1159 = vmatmul.mubr.f32.gmra.mrb[0].mxu0 %v1038
        %v1160 = vpop.f32.mrb[0].mxu0
        %v1161 = vadd.f32 0.0, %v1160
        %v1162 = vpop.f32.mrb[0].mxu0
        %v1163 = vadd.f32 0.0, %v1162
        %1164 = vmatprep.mubr.f32.mxu0 0.0
        %1165 = vmatmul.mubr.f32.gmra.mrb[0].mxu0 %v1041
        %v1166 = vpop.f32.mrb[0].mxu0
        %v1167 = vadd.f32 0.0, %v1166
        %v1168 = vpop.f32.mrb[0].mxu0
        %v1169 = vadd.f32 0.0, %v1168
        %1170 = vmatprep.mubr.f32.mxu0 0.0
        %1171 = vmatmul.mubr.f32.gmra.mrb[0].mxu0 %v1044
        %v1172 = vpop.f32.mrb[0].mxu0
        %v1173 = vadd.f32 0.0, %v1172
        %v1174 = vpop.f32.mrb[0].mxu0
        %v1175 = vadd.f32 0.0, %v1174
        %1176 = vmatprep.mubr.f32.mxu0 0.0
        %1177 = vmatmul.mubr.f32.gmra.mrb[0].mxu0 %v1047
        %v1178 = vpop.f32.mrb[0].mxu0
        %v1179 = vadd.f32 0.0, %v1178
        %v1180 = vpop.f32.mrb[0].mxu0
        %v1181 = vadd.f32 0.0, %v1180
        %1182 = vmatprep.mubr.f32.mxu0 0.0
        %1183 = vmatmul.mubr.f32.gmra.mrb[0].mxu0 %v1050
        %v1184 = vpop.f32.mrb[0].mxu0
        %v1185 = vadd.f32 0.0, %v1184
        %v1186 = vpop.f32.mrb[0].mxu0
        %v1187 = vadd.f32 0.0, %v1186
        %1188 = vmatprep.mubr.f32.mxu0 0.0
        %1189 = vmatmul.mubr.f32.gmra.mrb[0].mxu0 %v1053
        %v1190 = vpop.f32.mrb[0].mxu0
        %v1191 = vadd.f32 0.0, %v1190
        %v1192 = vpop.f32.mrb[0].mxu0
        %v1193 = vadd.f32 0.0, %v1192
        %1194 = vmatprep.mubr.f32.mxu0 0.0
        %1195 = vmatmul.mubr.f32.gmra.mrb[0].mxu0 %v1056
        %v1196 = vpop.f32.mrb[0].mxu0
        %v1197 = vadd.f32 0.0, %v1196
        %v1198 = vpop.f32.mrb[0].mxu0
        %v1199 = vadd.f32 0.0, %v1198
        %1200 = vmatprep.mubr.f32.mxu0 0.0
        %1201 = vmatmul.mubr.f32.gmra.mrb[0].mxu0 %v1059
        %v1202 = vpop.f32.mrb[0].mxu0
        %v1203 = vadd.f32 0.0, %v1202
        %v1204 = vpop.f32.mrb[0].mxu0
        %v1205 = vadd.f32 0.0, %v1204
        %1206 = vmatprep.mubr.f32.mxu0 0.0
        %1207 = vmatmul.mubr.f32.gmra.mrb[0].mxu0 %v1062
        %v1208 = vpop.f32.mrb[0].mxu0
        %v1209 = vadd.f32 0.0, %v1208
        %v1210 = vpop.f32.mrb[0].mxu0
        %v1211 = vadd.f32 0.0, %v1210
        %1212 = vmatprep.mubr.f32.mxu0 0.0
        %1213 = vmatmul.mubr.f32.gmra.mrb[0].mxu0 %v1065
        %v1214 = vpop.f32.mrb[0].mxu0
        %v1215 = vadd.f32 0.0, %v1214
        %v1216 = vpop.f32.mrb[0].mxu0
        %v1217 = vadd.f32 0.0, %v1216
        %1218 = vmatprep.mubr.f32.mxu0 0.0
        %1219 = vmatmul.mubr.f32.gmra.mrb[0].mxu0 %v1068
        %v1220 = vpop.f32.mrb[0].mxu0
        %v1221 = vadd.f32 0.0, %v1220
        %v1222 = vpop.f32.mrb[0].mxu0
        %v1223 = vadd.f32 0.0, %v1222
        %1224 = vmatprep.mubr.f32.mxu0 0.0
        %1225 = vmatmul.mubr.f32.gmra.mrb[0].mxu0 %v1071
        %v1226 = vpop.f32.mrb[0].mxu0
        %v1227 = vadd.f32 0.0, %v1226
        %v1228 = vpop.f32.mrb[0].mxu0
        %v1229 = vadd.f32 0.0, %v1228
        %1230 = vmatprep.mubr.f32.mxu0 0.0
        %1231 = vmatmul.mubr.f32.gmra.mrb[0].mxu0 %v1074
        %v1232 = vpop.f32.mrb[0].mxu0
        %v1233 = vadd.f32 0.0, %v1232
        %v1234 = vpop.f32.mrb[0].mxu0
        %v1235 = vadd.f32 0.0, %v1234
        %1236 = vdwg.mxu0
        %v1238 = vsel %vm1027, %v907, 0
        %v1241 = vsel %vm1027, %v908, 0
        %v1244 = vsel %vm1027, %v909, 0
        %v1247 = vsel %vm1027, %v910, 0
        %v1250 = vsel %vm1027, %v911, 0
        %v1253 = vsel %vm1027, %v912, 0
        %v1256 = vsel %vm1027, %v913, 0
        %v1259 = vsel %vm1027, %v914, 0
        %v1262 = vsel %vm1027, %v915, 0
        %v1265 = vsel %vm1027, %v916, 0
        %v1268 = vsel %vm1027, %v917, 0
        %v1271 = vsel %vm1027, %v918, 0
        %v1274 = vsel %vm1027, %v919, 0
        %v1277 = vsel %vm1027, %v920, 0
        %v1280 = vsel %vm1027, %v921, 0
        %v1283 = vsel %vm1027, %v922, 0
        %1285 = vmatprep.subr.mxu0 %v1020
        %1286 = vmatpush1.msra.mxu0 %v1019
        %1287 = vmatprep.subr.mxu0 %v1022
        %1288 = vmatpush1.msra.mxu0 %v1021
        %1289 = vmatprep.subr.mxu0 0.0
        %1290 = vmatpush1.msra.mxu0 0.0
        %1291 = vmatprep.subr.mxu0 0.0
        %1292 = vmatpush1.msra.mxu0 0.0
        %1293 = vmatprep.subr.mxu0 0.0
        %1294 = vmatpush1.msra.mxu0 0.0
        %1295 = vmatprep.subr.mxu0 0.0
        %1296 = vmatpush1.msra.mxu0 0.0
        %1297 = vmatprep.subr.mxu0 0.0
        %1298 = vmatpush1.msra.mxu0 0.0
        %1299 = vmatprep.subr.mxu0 0.0
        %1300 = vmatpush1.msra.mxu0 0.0
        %1301 = vmatprep.subr.mxu0 0.0
        %1302 = vmatpush1.msra.mxu0 0.0
        %1303 = vmatprep.subr.mxu0 0.0
        %1304 = vmatpush1.msra.mxu0 0.0
        %1305 = vmatprep.subr.mxu0 0.0
        %1306 = vmatpush1.msra.mxu0 0.0
        %1307 = vmatprep.subr.mxu0 0.0
        %1308 = vmatpush1.msra.mxu0 0.0
        %1309 = vmatprep.subr.mxu0 0.0
        %1310 = vmatpush1.msra.mxu0 0.0
        %1311 = vmatprep.subr.mxu0 0.0
        %1312 = vmatpush1.msra.mxu0 0.0
        %1313 = vmatprep.subr.mxu0 0.0
        %1314 = vmatpush1.msra.mxu0 0.0
        %1315 = vmatprep.subr.mxu0 0.0
        %1316 = vmatpush1.msra.mxu0 0.0
        %1317 = vmatprep.subr.mxu0 0.0
        %1318 = vmatpush1.msra.mxu0 0.0
        %1319 = vmatprep.subr.mxu0 0.0
        %1320 = vmatpush1.msra.mxu0 0.0
        %1321 = vmatprep.subr.mxu0 0.0
        %1322 = vmatpush1.msra.mxu0 0.0
        %1323 = vmatprep.subr.mxu0 0.0
        %1324 = vmatpush1.msra.mxu0 0.0
        %1325 = vmatprep.subr.mxu0 0.0
        %1326 = vmatpush1.msra.mxu0 0.0
        %1327 = vmatprep.subr.mxu0 0.0
        %1328 = vmatpush1.msra.mxu0 0.0
        %1329 = vmatprep.subr.mxu0 0.0
        %1330 = vmatpush1.msra.mxu0 0.0
        %1331 = vmatprep.subr.mxu0 0.0
        %1332 = vmatpush1.msra.mxu0 0.0
        %1333 = vmatprep.subr.mxu0 0.0
        %1334 = vmatpush1.msra.mxu0 0.0
        %1335 = vmatprep.subr.mxu0 0.0
        %1336 = vmatpush1.msra.mxu0 0.0
        %1337 = vmatprep.subr.mxu0 0.0
        %1338 = vmatpush1.msra.mxu0 0.0
        %1339 = vmatprep.subr.mxu0 0.0
        %1340 = vmatpush1.msra.mxu0 0.0
        %1341 = vmatprep.subr.mxu0 0.0
        %1342 = vmatpush1.msra.mxu0 0.0
        %1343 = vmatprep.subr.mxu0 0.0
        %1344 = vmatpush1.msra.mxu0 0.0
        %1345 = vmatprep.subr.mxu0 0.0
        %1346 = vmatpush1.msra.mxu0 0.0
        %1347 = vmatprep.subr.mxu0 0.0
        %1348 = vmatpush1.msra.mxu0 0.0
        %1349 = vmatprep.mubr.f32.mxu0 0.0
        %1350 = vmatmul.mubr.f32.gmra.mrb[0].mxu0 %v1238
        %v1351 = vpop.f32.mrb[0].mxu0
        %v1352 = vadd.f32 %v1143, %v1351
        %v1353 = vpop.f32.mrb[0].mxu0
        %v1354 = vadd.f32 %v1145, %v1353
        %1355 = vmatprep.mubr.f32.mxu0 0.0
        %1356 = vmatmul.mubr.f32.gmra.mrb[0].mxu0 %v1241
        %v1357 = vpop.f32.mrb[0].mxu0
        %v1358 = vadd.f32 %v1149, %v1357
        %v1359 = vpop.f32.mrb[0].mxu0
        %v1360 = vadd.f32 %v1151, %v1359
        %1361 = vmatprep.mubr.f32.mxu0 0.0
        %1362 = vmatmul.mubr.f32.gmra.mrb[0].mxu0 %v1244
        %v1363 = vpop.f32.mrb[0].mxu0
        %v1364 = vadd.f32 %v1155, %v1363
        %v1365 = vpop.f32.mrb[0].mxu0
        %v1366 = vadd.f32 %v1157, %v1365
        %1367 = vmatprep.mubr.f32.mxu0 0.0
        %1368 = vmatmul.mubr.f32.gmra.mrb[0].mxu0 %v1247
        %v1369 = vpop.f32.mrb[0].mxu0
        %v1370 = vadd.f32 %v1161, %v1369
        %v1371 = vpop.f32.mrb[0].mxu0
        %v1372 = vadd.f32 %v1163, %v1371
        %1373 = vmatprep.mubr.f32.mxu0 0.0
        %1374 = vmatmul.mubr.f32.gmra.mrb[0].mxu0 %v1250
        %v1375 = vpop.f32.mrb[0].mxu0
        %v1376 = vadd.f32 %v1167, %v1375
        %v1377 = vpop.f32.mrb[0].mxu0
        %v1378 = vadd.f32 %v1169, %v1377
        %1379 = vmatprep.mubr.f32.mxu0 0.0
        %1380 = vmatmul.mubr.f32.gmra.mrb[0].mxu0 %v1253
        %v1381 = vpop.f32.mrb[0].mxu0
        %v1382 = vadd.f32 %v1173, %v1381
        %v1383 = vpop.f32.mrb[0].mxu0
        %v1384 = vadd.f32 %v1175, %v1383
        %1385 = vmatprep.mubr.f32.mxu0 0.0
        %1386 = vmatmul.mubr.f32.gmra.mrb[0].mxu0 %v1256
        %v1387 = vpop.f32.mrb[0].mxu0
        %v1388 = vadd.f32 %v1179, %v1387
        %v1389 = vpop.f32.mrb[0].mxu0
        %v1390 = vadd.f32 %v1181, %v1389
        %1391 = vmatprep.mubr.f32.mxu0 0.0
        %1392 = vmatmul.mubr.f32.gmra.mrb[0].mxu0 %v1259
        %v1393 = vpop.f32.mrb[0].mxu0
        %v1394 = vadd.f32 %v1185, %v1393
        %v1395 = vpop.f32.mrb[0].mxu0
        %v1396 = vadd.f32 %v1187, %v1395
        %1397 = vmatprep.mubr.f32.mxu0 0.0
        %1398 = vmatmul.mubr.f32.gmra.mrb[0].mxu0 %v1262
        %v1399 = vpop.f32.mrb[0].mxu0
        %v1400 = vadd.f32 %v1191, %v1399
        %v1401 = vpop.f32.mrb[0].mxu0
        %v1402 = vadd.f32 %v1193, %v1401
        %1403 = vmatprep.mubr.f32.mxu0 0.0
        %1404 = vmatmul.mubr.f32.gmra.mrb[0].mxu0 %v1265
        %v1405 = vpop.f32.mrb[0].mxu0
        %v1406 = vadd.f32 %v1197, %v1405
        %v1407 = vpop.f32.mrb[0].mxu0
        %v1408 = vadd.f32 %v1199, %v1407
        %1409 = vmatprep.mubr.f32.mxu0 0.0
        %1410 = vmatmul.mubr.f32.gmra.mrb[0].mxu0 %v1268
        %v1411 = vpop.f32.mrb[0].mxu0
        %v1412 = vadd.f32 %v1203, %v1411
        %v1413 = vpop.f32.mrb[0].mxu0
        %v1414 = vadd.f32 %v1205, %v1413
        %1415 = vmatprep.mubr.f32.mxu0 0.0
        %1416 = vmatmul.mubr.f32.gmra.mrb[0].mxu0 %v1271
        %v1417 = vpop.f32.mrb[0].mxu0
        %v1418 = vadd.f32 %v1209, %v1417
        %v1419 = vpop.f32.mrb[0].mxu0
        %v1420 = vadd.f32 %v1211, %v1419
        %1421 = vmatprep.mubr.f32.mxu0 0.0
        %1422 = vmatmul.mubr.f32.gmra.mrb[0].mxu0 %v1274
        %v1423 = vpop.f32.mrb[0].mxu0
        %v1424 = vadd.f32 %v1215, %v1423
        %v1425 = vpop.f32.mrb[0].mxu0
        %v1426 = vadd.f32 %v1217, %v1425
        %1427 = vmatprep.mubr.f32.mxu0 0.0
        %1428 = vmatmul.mubr.f32.gmra.mrb[0].mxu0 %v1277
        %v1429 = vpop.f32.mrb[0].mxu0
        %v1430 = vadd.f32 %v1221, %v1429
        %v1431 = vpop.f32.mrb[0].mxu0
        %v1432 = vadd.f32 %v1223, %v1431
        %1433 = vmatprep.mubr.f32.mxu0 0.0
        %1434 = vmatmul.mubr.f32.gmra.mrb[0].mxu0 %v1280
        %v1435 = vpop.f32.mrb[0].mxu0
        %v1436 = vadd.f32 %v1227, %v1435
        %v1437 = vpop.f32.mrb[0].mxu0
        %v1438 = vadd.f32 %v1229, %v1437
        %1439 = vmatprep.mubr.f32.mxu0 0.0
        %1440 = vmatmul.mubr.f32.gmra.mrb[0].mxu0 %v1283
        %v1441 = vpop.f32.mrb[0].mxu0
        %v1442 = vadd.f32 %v1233, %v1441
        %v1443 = vpop.f32.mrb[0].mxu0
        %v1444 = vadd.f32 %v1235, %v1443
        %1445 = vdwg.mxu0
        %v1446 = vmul.f32 %v1354, %v1354
        %v1447 = vmul.f32 %v1360, %v1360
        %v1448 = vmul.f32 %v1366, %v1366
        %v1449 = vmul.f32 %v1372, %v1372
        %v1450 = vmul.f32 %v1378, %v1378
        %v1451 = vmul.f32 %v1384, %v1384
        %v1452 = vmul.f32 %v1390, %v1390
        %v1453 = vmul.f32 %v1396, %v1396
        %v1454 = vmul.f32 %v1402, %v1402
        %v1455 = vmul.f32 %v1408, %v1408
        %v1456 = vmul.f32 %v1414, %v1414
        %v1457 = vmul.f32 %v1420, %v1420
        %v1458 = vmul.f32 %v1426, %v1426
        %v1459 = vmul.f32 %v1432, %v1432
        %v1460 = vmul.f32 %v1438, %v1438
        %v1461 = vmul.f32 %v1444, %v1444
        %1462 = vadd.xlane.f32.xlu0 %v1446
        %v1463 = vpop.xlane.xlu0 %1462
        %1464 = vadd.xlane.f32.xlu0 %v1447
        %v1465 = vpop.xlane.xlu0 %1464
        %1466 = vadd.xlane.f32.xlu0 %v1448
        %v1467 = vpop.xlane.xlu0 %1466
        %1468 = vadd.xlane.f32.xlu0 %v1449
        %v1469 = vpop.xlane.xlu0 %1468
        %1470 = vadd.xlane.f32.xlu0 %v1450
        %v1471 = vpop.xlane.xlu0 %1470
        %1472 = vadd.xlane.f32.xlu0 %v1451
        %v1473 = vpop.xlane.xlu0 %1472
        %1474 = vadd.xlane.f32.xlu0 %v1452
        %v1475 = vpop.xlane.xlu0 %1474
        %1476 = vadd.xlane.f32.xlu0 %v1453
        %v1477 = vpop.xlane.xlu0 %1476
        %1478 = vadd.xlane.f32.xlu0 %v1454
        %v1479 = vpop.xlane.xlu0 %1478
        %1480 = vadd.xlane.f32.xlu0 %v1455
        %v1481 = vpop.xlane.xlu0 %1480
        %1482 = vadd.xlane.f32.xlu0 %v1456
        %v1483 = vpop.xlane.xlu0 %1482
        %1484 = vadd.xlane.f32.xlu0 %v1457
        %v1485 = vpop.xlane.xlu0 %1484
        %1486 = vadd.xlane.f32.xlu0 %v1458
        %v1487 = vpop.xlane.xlu0 %1486
        %1488 = vadd.xlane.f32.xlu0 %v1459
        %v1489 = vpop.xlane.xlu0 %1488
        %1490 = vadd.xlane.f32.xlu0 %v1460
        %v1491 = vpop.xlane.xlu0 %1490
        %1492 = vadd.xlane.f32.xlu0 %v1461
        %v1493 = vpop.xlane.xlu0 %1492
        %v1494 = vld [vmem:[%s6] sm:$0x1]
        %v1496 = vlaneseq
        %v1497 = vshrl.u32 %v1496, 7
        %v1498 = vsub.s32 0, %v1497
        %v1499 = vrot.slane %v1494, %v1498
        %v1501 = vmul.f32 %v1463, %v1499
        %v1502 = vmul.f32 %v1465, %v1499
        %v1503 = vmul.f32 %v1467, %v1499
        %v1504 = vmul.f32 %v1469, %v1499
        %v1505 = vmul.f32 %v1471, %v1499
        %v1506 = vmul.f32 %v1473, %v1499
        %v1507 = vmul.f32 %v1475, %v1499
        %v1508 = vmul.f32 %v1477, %v1499
        %v1509 = vmul.f32 %v1479, %v1499
        %v1510 = vmul.f32 %v1481, %v1499
        %v1511 = vmul.f32 %v1483, %v1499
        %v1512 = vmul.f32 %v1485, %v1499
        %v1513 = vmul.f32 %v1487, %v1499
        %v1514 = vmul.f32 %v1489, %v1499
        %v1515 = vmul.f32 %v1491, %v1499
        %v1516 = vmul.f32 %v1493, %v1499
        %v1517 = vadd.f32 %v1352, %v1501
        %v1518 = vadd.f32 %v1358, %v1502
        %v1519 = vadd.f32 %v1364, %v1503
        %v1520 = vadd.f32 %v1370, %v1504
        %v1521 = vadd.f32 %v1376, %v1505
        %v1522 = vadd.f32 %v1382, %v1506
        %v1523 = vadd.f32 %v1388, %v1507
        %v1524 = vadd.f32 %v1394, %v1508
        %v1525 = vadd.f32 %v1400, %v1509
        %v1526 = vadd.f32 %v1406, %v1510
        %v1527 = vadd.f32 %v1412, %v1511
        %v1528 = vadd.f32 %v1418, %v1512
        %v1529 = vadd.f32 %v1424, %v1513
        %v1530 = vadd.f32 %v1430, %v1514
        %v1531 = vadd.f32 %v1436, %v1515
        %v1532 = vadd.f32 %v1442, %v1516
        %v1533 = vxor.u32 %v1517, 2147483648
        %v1534 = vxor.u32 %v1518, 2147483648
        %v1535 = vxor.u32 %v1519, 2147483648
        %v1536 = vxor.u32 %v1520, 2147483648
        %v1537 = vxor.u32 %v1521, 2147483648
        %v1538 = vxor.u32 %v1522, 2147483648
        %v1539 = vxor.u32 %v1523, 2147483648
        %v1540 = vxor.u32 %v1524, 2147483648
        %v1541 = vxor.u32 %v1525, 2147483648
        %v1542 = vxor.u32 %v1526, 2147483648
        %v1543 = vxor.u32 %v1527, 2147483648
        %v1544 = vxor.u32 %v1528, 2147483648
        %v1545 = vxor.u32 %v1529, 2147483648
        %v1546 = vxor.u32 %v1530, 2147483648
        %v1547 = vxor.u32 %v1531, 2147483648
        %v1548 = vxor.u32 %v1532, 2147483648
        %v1549 = vmul.f32 %v1533, 1.442695
        %v1550 = vpow.pop %v1549
        %v1551 = vmul.f32 %v1534, 1.442695
        %v1552 = vpow.pop %v1551
        %v1553 = vmul.f32 %v1535, 1.442695
        %v1554 = vpow.pop %v1553
        %v1555 = vmul.f32 %v1536, 1.442695
        %v1556 = vpow.pop %v1555
        %v1557 = vmul.f32 %v1537, 1.442695
        %v1558 = vpow.pop %v1557
        %v1559 = vmul.f32 %v1538, 1.442695
        %v1560 = vpow.pop %v1559
        %v1561 = vmul.f32 %v1539, 1.442695
        %v1562 = vpow.pop %v1561
        %v1563 = vmul.f32 %v1540, 1.442695
        %v1564 = vpow.pop %v1563
        %v1565 = vmul.f32 %v1541, 1.442695
        %v1566 = vpow.pop %v1565
        %v1567 = vmul.f32 %v1542, 1.442695
        %v1568 = vpow.pop %v1567
        %v1569 = vmul.f32 %v1543, 1.442695
        %v1570 = vpow.pop %v1569
        %v1571 = vmul.f32 %v1544, 1.442695
        %v1572 = vpow.pop %v1571
        %v1573 = vmul.f32 %v1545, 1.442695
        %v1574 = vpow.pop %v1573
        %v1575 = vmul.f32 %v1546, 1.442695
        %v1576 = vpow.pop %v1575
        %v1577 = vmul.f32 %v1547, 1.442695
        %v1578 = vpow.pop %v1577
        %v1579 = vmul.f32 %v1548, 1.442695
        %v1580 = vpow.pop %v1579
        %v1581 = vadd.f32 %v1550, 1.0
        %v1582 = vadd.f32 %v1552, 1.0
        %v1583 = vadd.f32 %v1554, 1.0
        %v1584 = vadd.f32 %v1556, 1.0
        %v1585 = vadd.f32 %v1558, 1.0
        %v1586 = vadd.f32 %v1560, 1.0
        %v1587 = vadd.f32 %v1562, 1.0
        %v1588 = vadd.f32 %v1564, 1.0
        %v1589 = vadd.f32 %v1566, 1.0
        %v1590 = vadd.f32 %v1568, 1.0
        %v1591 = vadd.f32 %v1570, 1.0
        %v1592 = vadd.f32 %v1572, 1.0
        %v1593 = vadd.f32 %v1574, 1.0
        %v1594 = vadd.f32 %v1576, 1.0
        %v1595 = vadd.f32 %v1578, 1.0
        %v1596 = vadd.f32 %v1580, 1.0
        %v1597 = vrcp.pop %v1581
        %v1598 = vmul.f32 1.0, %v1597
        %v1599 = vrcp.pop %v1582
        %v1600 = vmul.f32 1.0, %v1599
        %v1601 = vrcp.pop %v1583
        %v1602 = vmul.f32 1.0, %v1601
        %v1603 = vrcp.pop %v1584
        %v1604 = vmul.f32 1.0, %v1603
        %v1605 = vrcp.pop %v1585
        %v1606 = vmul.f32 1.0, %v1605
        %v1607 = vrcp.pop %v1586
        %v1608 = vmul.f32 1.0, %v1607
        %v1609 = vrcp.pop %v1587
        %v1610 = vmul.f32 1.0, %v1609
        %v1611 = vrcp.pop %v1588
        %v1612 = vmul.f32 1.0, %v1611
        %v1613 = vrcp.pop %v1589
        %v1614 = vmul.f32 1.0, %v1613
        %v1615 = vrcp.pop %v1590
        %v1616 = vmul.f32 1.0, %v1615
        %v1617 = vrcp.pop %v1591
        %v1618 = vmul.f32 1.0, %v1617
        %v1619 = vrcp.pop %v1592
        %v1620 = vmul.f32 1.0, %v1619
        %v1621 = vrcp.pop %v1593
        %v1622 = vmul.f32 1.0, %v1621
        %v1623 = vrcp.pop %v1594
        %v1624 = vmul.f32 1.0, %v1623
        %v1625 = vrcp.pop %v1595
        %v1626 = vmul.f32 1.0, %v1625
        %v1627 = vrcp.pop %v1596
        %v1628 = vmul.f32 1.0, %v1627
        %v1629 = vmul.f32 %v1517, %v1598
        %v1630 = vmul.f32 %v1518, %v1600
        %v1631 = vmul.f32 %v1519, %v1602
        %v1632 = vmul.f32 %v1520, %v1604
        %v1633 = vmul.f32 %v1521, %v1606
        %v1634 = vmul.f32 %v1522, %v1608
        %v1635 = vmul.f32 %v1523, %v1610
        %v1636 = vmul.f32 %v1524, %v1612
        %v1637 = vmul.f32 %v1525, %v1614
        %v1638 = vmul.f32 %v1526, %v1616
        %v1639 = vmul.f32 %v1527, %v1618
        %v1640 = vmul.f32 %v1528, %v1620
        %v1641 = vmul.f32 %v1529, %v1622
        %v1642 = vmul.f32 %v1530, %v1624
        %v1643 = vmul.f32 %v1531, %v1626
        %v1644 = vmul.f32 %v1532, %v1628
        %v1645 = vld [vmem:[%s7] sm:$0xff]
        %v1646 = vld [vmem:[%s7 + $0x8] sm:$0xff]
        %v1647 = vld [vmem:[%s7 + $0x10] sm:$0xff]
        %v1648 = vld [vmem:[%s7 + $0x18] sm:$0xff]
        %v1649 = vld [vmem:[%s7 + $0x20] sm:$0xff]
        %v1650 = vld [vmem:[%s7 + $0x28] sm:$0xff]
        %v1651 = vld [vmem:[%s7 + $0x30] sm:$0xff]
        %v1652 = vld [vmem:[%s7 + $0x38] sm:$0xff]
        %v1653 = vld [vmem:[%s7 + $0x40] sm:$0xff]
        %v1654 = vld [vmem:[%s7 + $0x48] sm:$0xff]
        %v1655 = vld [vmem:[%s7 + $0x50] sm:$0xff]
        %v1656 = vld [vmem:[%s7 + $0x58] sm:$0xff]
        %v1657 = vld [vmem:[%s7 + $0x60] sm:$0xff]
        %v1658 = vld [vmem:[%s7 + $0x68] sm:$0xff]
        %v1659 = vld [vmem:[%s7 + $0x70] sm:$0xff]
        %v1660 = vld [vmem:[%s7 + $0x78] sm:$0xff]
        %v1661 = vld [vmem:[%s8] sm:$0x1]
        %v1663 = vlaneseq
        %v1664 = vshrl.u32 %v1663, 7
        %v1665 = vsub.s32 0, %v1664
        %v1666 = vrot.slane %v1661, %v1665
        %1668 = vmatprep.subr.mxu0 0.0
        %1669 = vmatpush1.msra.mxu0 %v1645
        %1670 = vmatprep.subr.mxu0 0.0
        %1671 = vmatpush1.msra.mxu0 %v1646
        %1672 = vmatprep.subr.mxu0 0.0
        %1673 = vmatpush1.msra.mxu0 %v1647
        %1674 = vmatprep.subr.mxu0 0.0
        %1675 = vmatpush1.msra.mxu0 %v1648
        %1676 = vmatprep.subr.mxu0 0.0
        %1677 = vmatpush1.msra.mxu0 %v1649
        %1678 = vmatprep.subr.mxu0 0.0
        %1679 = vmatpush1.msra.mxu0 %v1650
        %1680 = vmatprep.subr.mxu0 0.0
        %1681 = vmatpush1.msra.mxu0 %v1651
        %1682 = vmatprep.subr.mxu0 0.0
        %1683 = vmatpush1.msra.mxu0 %v1652
        %1684 = vmatprep.subr.mxu0 0.0
        %1685 = vmatpush1.msra.mxu0 %v1653
        %1686 = vmatprep.subr.mxu0 0.0
        %1687 = vmatpush1.msra.mxu0 %v1654
        %1688 = vmatprep.subr.mxu0 0.0
        %1689 = vmatpush1.msra.mxu0 %v1655
        %1690 = vmatprep.subr.mxu0 0.0
        %1691 = vmatpush1.msra.mxu0 %v1656
        %1692 = vmatprep.subr.mxu0 0.0
        %1693 = vmatpush1.msra.mxu0 %v1657
        %1694 = vmatprep.subr.mxu0 0.0
        %1695 = vmatpush1.msra.mxu0 %v1658
        %1696 = vmatprep.subr.mxu0 0.0
        %1697 = vmatpush1.msra.mxu0 %v1659
        %1698 = vmatprep.subr.mxu0 0.0
        %1699 = vmatpush1.msra.mxu0 %v1660
        %1700 = vmatprep.subr.mxu0 0.0
        %1701 = vmatpush1.msra.mxu0 0.0
        %1702 = vmatprep.subr.mxu0 0.0
        %1703 = vmatpush1.msra.mxu0 0.0
        %1704 = vmatprep.subr.mxu0 0.0
        %1705 = vmatpush1.msra.mxu0 0.0
        %1706 = vmatprep.subr.mxu0 0.0
        %1707 = vmatpush1.msra.mxu0 0.0
        %1708 = vmatprep.subr.mxu0 0.0
        %1709 = vmatpush1.msra.mxu0 0.0
        %1710 = vmatprep.subr.mxu0 0.0
        %1711 = vmatpush1.msra.mxu0 0.0
        %1712 = vmatprep.subr.mxu0 0.0
        %1713 = vmatpush1.msra.mxu0 0.0
        %1714 = vmatprep.subr.mxu0 0.0
        %1715 = vmatpush1.msra.mxu0 0.0
        %1716 = vmatprep.subr.mxu0 0.0
        %1717 = vmatpush1.msra.mxu0 0.0
        %1718 = vmatprep.subr.mxu0 0.0
        %1719 = vmatpush1.msra.mxu0 0.0
        %1720 = vmatprep.subr.mxu0 0.0
        %1721 = vmatpush1.msra.mxu0 0.0
        %1722 = vmatprep.subr.mxu0 0.0
        %1723 = vmatpush1.msra.mxu0 0.0
        %1724 = vmatprep.subr.mxu0 0.0
        %1725 = vmatpush1.msra.mxu0 0.0
        %1726 = vmatprep.subr.mxu0 0.0
        %1727 = vmatpush1.msra.mxu0 0.0
        %1728 = vmatprep.subr.mxu0 0.0
        %1729 = vmatpush1.msra.mxu0 0.0
        %1730 = vmatprep.subr.mxu0 0.0
        %1731 = vmatpush1.msra.mxu0 0.0
        %1732 = vmatprep.mubr.f32.mxu0 0.0
        %1733 = vmatmul.mubr.f32.gmra.mrb[0].mxu0 %v1629
        %v1734 = vpop.f32.mrb[0].mxu0
        %v1735 = vadd.f32 %v1666, %v1734
        %v1736 = vpop.f32.mrb[0].mxu0
        %1737 = vmatprep.mubr.f32.mxu0 0.0
        %1738 = vmatmul.mubr.f32.gmra.mrb[0].mxu0 %v1630
        %v1739 = vpop.f32.mrb[0].mxu0
        %v1740 = vadd.f32 %v1666, %v1739
        %v1741 = vpop.f32.mrb[0].mxu0
        %1742 = vmatprep.mubr.f32.mxu0 0.0
        %1743 = vmatmul.mubr.f32.gmra.mrb[0].mxu0 %v1631
        %v1744 = vpop.f32.mrb[0].mxu0
        %v1745 = vadd.f32 %v1666, %v1744
        %v1746 = vpop.f32.mrb[0].mxu0
        %1747 = vmatprep.mubr.f32.mxu0 0.0
        %1748 = vmatmul.mubr.f32.gmra.mrb[0].mxu0 %v1632
        %v1749 = vpop.f32.mrb[0].mxu0
        %v1750 = vadd.f32 %v1666, %v1749
        %v1751 = vpop.f32.mrb[0].mxu0
        %1752 = vmatprep.mubr.f32.mxu0 0.0
        %1753 = vmatmul.mubr.f32.gmra.mrb[0].mxu0 %v1633
        %v1754 = vpop.f32.mrb[0].mxu0
        %v1755 = vadd.f32 %v1666, %v1754
        %v1756 = vpop.f32.mrb[0].mxu0
        %1757 = vmatprep.mubr.f32.mxu0 0.0
        %1758 = vmatmul.mubr.f32.gmra.mrb[0].mxu0 %v1634
        %v1759 = vpop.f32.mrb[0].mxu0
        %v1760 = vadd.f32 %v1666, %v1759
        %v1761 = vpop.f32.mrb[0].mxu0
        %1762 = vmatprep.mubr.f32.mxu0 0.0
        %1763 = vmatmul.mubr.f32.gmra.mrb[0].mxu0 %v1635
        %v1764 = vpop.f32.mrb[0].mxu0
        %v1765 = vadd.f32 %v1666, %v1764
        %v1766 = vpop.f32.mrb[0].mxu0
        %1767 = vmatprep.mubr.f32.mxu0 0.0
        %1768 = vmatmul.mubr.f32.gmra.mrb[0].mxu0 %v1636
        %v1769 = vpop.f32.mrb[0].mxu0
        %v1770 = vadd.f32 %v1666, %v1769
        %v1771 = vpop.f32.mrb[0].mxu0
        %1772 = vmatprep.mubr.f32.mxu0 0.0
        %1773 = vmatmul.mubr.f32.gmra.mrb[0].mxu0 %v1637
        %v1774 = vpop.f32.mrb[0].mxu0
        %v1775 = vadd.f32 %v1666, %v1774
        %v1776 = vpop.f32.mrb[0].mxu0
        %1777 = vmatprep.mubr.f32.mxu0 0.0
        %1778 = vmatmul.mubr.f32.gmra.mrb[0].mxu0 %v1638
        %v1779 = vpop.f32.mrb[0].mxu0
        %v1780 = vadd.f32 %v1666, %v1779
        %v1781 = vpop.f32.mrb[0].mxu0
        %1782 = vmatprep.mubr.f32.mxu0 0.0
        %1783 = vmatmul.mubr.f32.gmra.mrb[0].mxu0 %v1639
        %v1784 = vpop.f32.mrb[0].mxu0
        %v1785 = vadd.f32 %v1666, %v1784
        %v1786 = vpop.f32.mrb[0].mxu0
        %1787 = vmatprep.mubr.f32.mxu0 0.0
        %1788 = vmatmul.mubr.f32.gmra.mrb[0].mxu0 %v1640
        %v1789 = vpop.f32.mrb[0].mxu0
        %v1790 = vadd.f32 %v1666, %v1789
        %v1791 = vpop.f32.mrb[0].mxu0
        %1792 = vmatprep.mubr.f32.mxu0 0.0
        %1793 = vmatmul.mubr.f32.gmra.mrb[0].mxu0 %v1641
        %v1794 = vpop.f32.mrb[0].mxu0
        %v1795 = vadd.f32 %v1666, %v1794
        %v1796 = vpop.f32.mrb[0].mxu0
        %1797 = vmatprep.mubr.f32.mxu0 0.0
        %1798 = vmatmul.mubr.f32.gmra.mrb[0].mxu0 %v1642
        %v1799 = vpop.f32.mrb[0].mxu0
        %v1800 = vadd.f32 %v1666, %v1799
        %v1801 = vpop.f32.mrb[0].mxu0
        %1802 = vmatprep.mubr.f32.mxu0 0.0
        %1803 = vmatmul.mubr.f32.gmra.mrb[0].mxu0 %v1643
        %v1804 = vpop.f32.mrb[0].mxu0
        %v1805 = vadd.f32 %v1666, %v1804
        %v1806 = vpop.f32.mrb[0].mxu0
        %1807 = vmatprep.mubr.f32.mxu0 0.0
        %1808 = vmatmul.mubr.f32.gmra.mrb[0].mxu0 %v1644
        %v1809 = vpop.f32.mrb[0].mxu0
        %v1810 = vadd.f32 %v1666, %v1809
        %v1811 = vpop.f32.mrb[0].mxu0
        %1812 = vdwg.mxu0
        %v1813 = vxor.u32 %v1735, 2147483648
        %v1814 = vxor.u32 %v1740, 2147483648
        %v1815 = vxor.u32 %v1745, 2147483648
        %v1816 = vxor.u32 %v1750, 2147483648
        %v1817 = vxor.u32 %v1755, 2147483648
        %v1818 = vxor.u32 %v1760, 2147483648
        %v1819 = vxor.u32 %v1765, 2147483648
        %v1820 = vxor.u32 %v1770, 2147483648
        %v1821 = vxor.u32 %v1775, 2147483648
        %v1822 = vxor.u32 %v1780, 2147483648
        %v1823 = vxor.u32 %v1785, 2147483648
        %v1824 = vxor.u32 %v1790, 2147483648
        %v1825 = vxor.u32 %v1795, 2147483648
        %v1826 = vxor.u32 %v1800, 2147483648
        %v1827 = vxor.u32 %v1805, 2147483648
        %v1828 = vxor.u32 %v1810, 2147483648
        %v1829 = vmul.f32 %v1813, 1.442695
        %v1830 = vpow.pop %v1829
        %v1831 = vmul.f32 %v1814, 1.442695
        %v1832 = vpow.pop %v1831
        %v1833 = vmul.f32 %v1815, 1.442695
        %v1834 = vpow.pop %v1833
        %v1835 = vmul.f32 %v1816, 1.442695
        %v1836 = vpow.pop %v1835
        %v1837 = vmul.f32 %v1817, 1.442695
        %v1838 = vpow.pop %v1837
        %v1839 = vmul.f32 %v1818, 1.442695
        %v1840 = vpow.pop %v1839
        %v1841 = vmul.f32 %v1819, 1.442695
        %v1842 = vpow.pop %v1841
        %v1843 = vmul.f32 %v1820, 1.442695
        %v1844 = vpow.pop %v1843
        %v1845 = vmul.f32 %v1821, 1.442695
        %v1846 = vpow.pop %v1845
        %v1847 = vmul.f32 %v1822, 1.442695
        %v1848 = vpow.pop %v1847
        %v1849 = vmul.f32 %v1823, 1.442695
        %v1850 = vpow.pop %v1849
        %v1851 = vmul.f32 %v1824, 1.442695
        %v1852 = vpow.pop %v1851
        %v1853 = vmul.f32 %v1825, 1.442695
        %v1854 = vpow.pop %v1853
        %v1855 = vmul.f32 %v1826, 1.442695
        %v1856 = vpow.pop %v1855
        %v1857 = vmul.f32 %v1827, 1.442695
        %v1858 = vpow.pop %v1857
        %v1859 = vmul.f32 %v1828, 1.442695
        %v1860 = vpow.pop %v1859
        %v1861 = vadd.f32 %v1830, 1.0
        %v1862 = vadd.f32 %v1832, 1.0
        %v1863 = vadd.f32 %v1834, 1.0
        %v1864 = vadd.f32 %v1836, 1.0
        %v1865 = vadd.f32 %v1838, 1.0
        %v1866 = vadd.f32 %v1840, 1.0
        %v1867 = vadd.f32 %v1842, 1.0
        %v1868 = vadd.f32 %v1844, 1.0
        %v1869 = vadd.f32 %v1846, 1.0
        %v1870 = vadd.f32 %v1848, 1.0
        %v1871 = vadd.f32 %v1850, 1.0
        %v1872 = vadd.f32 %v1852, 1.0
        %v1873 = vadd.f32 %v1854, 1.0
        %v1874 = vadd.f32 %v1856, 1.0
        %v1875 = vadd.f32 %v1858, 1.0
        %v1876 = vadd.f32 %v1860, 1.0
        %v1877 = vrcp.pop %v1861
        %v1878 = vmul.f32 1.0, %v1877
        %v1879 = vrcp.pop %v1862
        %v1880 = vmul.f32 1.0, %v1879
        %v1881 = vrcp.pop %v1863
        %v1882 = vmul.f32 1.0, %v1881
        %v1883 = vrcp.pop %v1864
        %v1884 = vmul.f32 1.0, %v1883
        %v1885 = vrcp.pop %v1865
        %v1886 = vmul.f32 1.0, %v1885
        %v1887 = vrcp.pop %v1866
        %v1888 = vmul.f32 1.0, %v1887
        %v1889 = vrcp.pop %v1867
        %v1890 = vmul.f32 1.0, %v1889
        %v1891 = vrcp.pop %v1868
        %v1892 = vmul.f32 1.0, %v1891
        %v1893 = vrcp.pop %v1869
        %v1894 = vmul.f32 1.0, %v1893
        %v1895 = vrcp.pop %v1870
        %v1896 = vmul.f32 1.0, %v1895
        %v1897 = vrcp.pop %v1871
        %v1898 = vmul.f32 1.0, %v1897
        %v1899 = vrcp.pop %v1872
        %v1900 = vmul.f32 1.0, %v1899
        %v1901 = vrcp.pop %v1873
        %v1902 = vmul.f32 1.0, %v1901
        %v1903 = vrcp.pop %v1874
        %v1904 = vmul.f32 1.0, %v1903
        %v1905 = vrcp.pop %v1875
        %v1906 = vmul.f32 1.0, %v1905
        %v1907 = vrcp.pop %v1876
        %v1908 = vmul.f32 1.0, %v1907
        %v1909 = vmul.f32 %v1735, %v1878
        %v1910 = vmul.f32 %v1740, %v1880
        %v1911 = vmul.f32 %v1745, %v1882
        %v1912 = vmul.f32 %v1750, %v1884
        %v1913 = vmul.f32 %v1755, %v1886
        %v1914 = vmul.f32 %v1760, %v1888
        %v1915 = vmul.f32 %v1765, %v1890
        %v1916 = vmul.f32 %v1770, %v1892
        %v1917 = vmul.f32 %v1775, %v1894
        %v1918 = vmul.f32 %v1780, %v1896
        %v1919 = vmul.f32 %v1785, %v1898
        %v1920 = vmul.f32 %v1790, %v1900
        %v1921 = vmul.f32 %v1795, %v1902
        %v1922 = vmul.f32 %v1800, %v1904
        %v1923 = vmul.f32 %v1805, %v1906
        %v1924 = vmul.f32 %v1810, %v1908
        %v1925 = vld [vmem:[%s9] sm:$0xff]
        %v1926 = vld [vmem:[%s9 + $0x8] sm:$0xff]
        %v1927 = vld [vmem:[%s9 + $0x10] sm:$0xff]
        %v1928 = vld [vmem:[%s9 + $0x18] sm:$0xff]
        %v1929 = vld [vmem:[%s9 + $0x20] sm:$0xff]
        %v1930 = vld [vmem:[%s9 + $0x28] sm:$0xff]
        %v1931 = vld [vmem:[%s9 + $0x30] sm:$0xff]
        %v1932 = vld [vmem:[%s9 + $0x38] sm:$0xff]
        %v1933 = vld [vmem:[%s9 + $0x40] sm:$0xff]
        %v1934 = vld [vmem:[%s9 + $0x48] sm:$0xff]
        %v1935 = vld [vmem:[%s9 + $0x50] sm:$0xff]
        %v1936 = vld [vmem:[%s9 + $0x58] sm:$0xff]
        %v1937 = vld [vmem:[%s9 + $0x60] sm:$0xff]
        %v1938 = vld [vmem:[%s9 + $0x68] sm:$0xff]
        %v1939 = vld [vmem:[%s9 + $0x70] sm:$0xff]
        %v1940 = vld [vmem:[%s9 + $0x78] sm:$0xff]
        %v1941 = vld [vmem:[%s10] sm:$0x1]
        %v1943 = vlaneseq
        %v1944 = vshrl.u32 %v1943, 7
        %v1945 = vsub.s32 0, %v1944
        %v1946 = vrot.slane %v1941, %v1945
        %1948 = vmatprep.subr.mxu0 0.0
        %1949 = vmatpush1.msra.mxu0 %v1925
        %1950 = vmatprep.subr.mxu0 0.0
        %1951 = vmatpush1.msra.mxu0 %v1926
        %1952 = vmatprep.subr.mxu0 0.0
        %1953 = vmatpush1.msra.mxu0 %v1927
        %1954 = vmatprep.subr.mxu0 0.0
        %1955 = vmatpush1.msra.mxu0 %v1928
        %1956 = vmatprep.subr.mxu0 0.0
        %1957 = vmatpush1.msra.mxu0 %v1929
        %1958 = vmatprep.subr.mxu0 0.0
        %1959 = vmatpush1.msra.mxu0 %v1930
        %1960 = vmatprep.subr.mxu0 0.0
        %1961 = vmatpush1.msra.mxu0 %v1931
        %1962 = vmatprep.subr.mxu0 0.0
        %1963 = vmatpush1.msra.mxu0 %v1932
        %1964 = vmatprep.subr.mxu0 0.0
        %1965 = vmatpush1.msra.mxu0 %v1933
        %1966 = vmatprep.subr.mxu0 0.0
        %1967 = vmatpush1.msra.mxu0 %v1934
        %1968 = vmatprep.subr.mxu0 0.0
        %1969 = vmatpush1.msra.mxu0 %v1935
        %1970 = vmatprep.subr.mxu0 0.0
        %1971 = vmatpush1.msra.mxu0 %v1936
        %1972 = vmatprep.subr.mxu0 0.0
        %1973 = vmatpush1.msra.mxu0 %v1937
        %1974 = vmatprep.subr.mxu0 0.0
        %1975 = vmatpush1.msra.mxu0 %v1938
        %1976 = vmatprep.subr.mxu0 0.0
        %1977 = vmatpush1.msra.mxu0 %v1939
        %1978 = vmatprep.subr.mxu0 0.0
        %1979 = vmatpush1.msra.mxu0 %v1940
        %1980 = vmatprep.subr.mxu0 0.0
        %1981 = vmatpush1.msra.mxu0 0.0
        %1982 = vmatprep.subr.mxu0 0.0
        %1983 = vmatpush1.msra.mxu0 0.0
        %1984 = vmatprep.subr.mxu0 0.0
        %1985 = vmatpush1.msra.mxu0 0.0
        %1986 = vmatprep.subr.mxu0 0.0
        %1987 = vmatpush1.msra.mxu0 0.0
        %1988 = vmatprep.subr.mxu0 0.0
        %1989 = vmatpush1.msra.mxu0 0.0
        %1990 = vmatprep.subr.mxu0 0.0
        %1991 = vmatpush1.msra.mxu0 0.0
        %1992 = vmatprep.subr.mxu0 0.0
        %1993 = vmatpush1.msra.mxu0 0.0
        %1994 = vmatprep.subr.mxu0 0.0
        %1995 = vmatpush1.msra.mxu0 0.0
        %1996 = vmatprep.subr.mxu0 0.0
        %1997 = vmatpush1.msra.mxu0 0.0
        %1998 = vmatprep.subr.mxu0 0.0
        %1999 = vmatpush1.msra.mxu0 0.0
        %2000 = vmatprep.subr.mxu0 0.0
        %2001 = vmatpush1.msra.mxu0 0.0
        %2002 = vmatprep.subr.mxu0 0.0
        %2003 = vmatpush1.msra.mxu0 0.0
        %2004 = vmatprep.subr.mxu0 0.0
        %2005 = vmatpush1.msra.mxu0 0.0
        %2006 = vmatprep.subr.mxu0 0.0
        %2007 = vmatpush1.msra.mxu0 0.0
        %2008 = vmatprep.subr.mxu0 0.0
        %2009 = vmatpush1.msra.mxu0 0.0
        %2010 = vmatprep.subr.mxu0 0.0
        %2011 = vmatpush1.msra.mxu0 0.0
        %2012 = vmatprep.mubr.f32.mxu0 0.0
        %2013 = vmatmul.mubr.f32.gmra.mrb[0].mxu0 %v1909
        %v2014 = vpop.f32.mrb[0].mxu0
        %v2015 = vadd.f32 %v1946, %v2014
        %v2016 = vpop.f32.mrb[0].mxu0
        %2017 = vmatprep.mubr.f32.mxu0 0.0
        %2018 = vmatmul.mubr.f32.gmra.mrb[0].mxu0 %v1910
        %v2019 = vpop.f32.mrb[0].mxu0
        %v2020 = vadd.f32 %v1946, %v2019
        %v2021 = vpop.f32.mrb[0].mxu0
        %2022 = vmatprep.mubr.f32.mxu0 0.0
        %2023 = vmatmul.mubr.f32.gmra.mrb[0].mxu0 %v1911
        %v2024 = vpop.f32.mrb[0].mxu0
        %v2025 = vadd.f32 %v1946, %v2024
        %v2026 = vpop.f32.mrb[0].mxu0
        %2027 = vmatprep.mubr.f32.mxu0 0.0
        %2028 = vmatmul.mubr.f32.gmra.mrb[0].mxu0 %v1912
        %v2029 = vpop.f32.mrb[0].mxu0
        %v2030 = vadd.f32 %v1946, %v2029
        %v2031 = vpop.f32.mrb[0].mxu0
        %2032 = vmatprep.mubr.f32.mxu0 0.0
        %2033 = vmatmul.mubr.f32.gmra.mrb[0].mxu0 %v1913
        %v2034 = vpop.f32.mrb[0].mxu0
        %v2035 = vadd.f32 %v1946, %v2034
        %v2036 = vpop.f32.mrb[0].mxu0
        %2037 = vmatprep.mubr.f32.mxu0 0.0
        %2038 = vmatmul.mubr.f32.gmra.mrb[0].mxu0 %v1914
        %v2039 = vpop.f32.mrb[0].mxu0
        %v2040 = vadd.f32 %v1946, %v2039
        %v2041 = vpop.f32.mrb[0].mxu0
        %2042 = vmatprep.mubr.f32.mxu0 0.0
        %2043 = vmatmul.mubr.f32.gmra.mrb[0].mxu0 %v1915
        %v2044 = vpop.f32.mrb[0].mxu0
        %v2045 = vadd.f32 %v1946, %v2044
        %v2046 = vpop.f32.mrb[0].mxu0
        %2047 = vmatprep.mubr.f32.mxu0 0.0
        %2048 = vmatmul.mubr.f32.gmra.mrb[0].mxu0 %v1916
        %v2049 = vpop.f32.mrb[0].mxu0
        %v2050 = vadd.f32 %v1946, %v2049
        %v2051 = vpop.f32.mrb[0].mxu0
        %2052 = vmatprep.mubr.f32.mxu0 0.0
        %2053 = vmatmul.mubr.f32.gmra.mrb[0].mxu0 %v1917
        %v2054 = vpop.f32.mrb[0].mxu0
        %v2055 = vadd.f32 %v1946, %v2054
        %v2056 = vpop.f32.mrb[0].mxu0
        %2057 = vmatprep.mubr.f32.mxu0 0.0
        %2058 = vmatmul.mubr.f32.gmra.mrb[0].mxu0 %v1918
        %v2059 = vpop.f32.mrb[0].mxu0
        %v2060 = vadd.f32 %v1946, %v2059
        %v2061 = vpop.f32.mrb[0].mxu0
        %2062 = vmatprep.mubr.f32.mxu0 0.0
        %2063 = vmatmul.mubr.f32.gmra.mrb[0].mxu0 %v1919
        %v2064 = vpop.f32.mrb[0].mxu0
        %v2065 = vadd.f32 %v1946, %v2064
        %v2066 = vpop.f32.mrb[0].mxu0
        %2067 = vmatprep.mubr.f32.mxu0 0.0
        %2068 = vmatmul.mubr.f32.gmra.mrb[0].mxu0 %v1920
        %v2069 = vpop.f32.mrb[0].mxu0
        %v2070 = vadd.f32 %v1946, %v2069
        %v2071 = vpop.f32.mrb[0].mxu0
        %2072 = vmatprep.mubr.f32.mxu0 0.0
        %2073 = vmatmul.mubr.f32.gmra.mrb[0].mxu0 %v1921
        %v2074 = vpop.f32.mrb[0].mxu0
        %v2075 = vadd.f32 %v1946, %v2074
        %v2076 = vpop.f32.mrb[0].mxu0
        %2077 = vmatprep.mubr.f32.mxu0 0.0
        %2078 = vmatmul.mubr.f32.gmra.mrb[0].mxu0 %v1922
        %v2079 = vpop.f32.mrb[0].mxu0
        %v2080 = vadd.f32 %v1946, %v2079
        %v2081 = vpop.f32.mrb[0].mxu0
        %2082 = vmatprep.mubr.f32.mxu0 0.0
        %2083 = vmatmul.mubr.f32.gmra.mrb[0].mxu0 %v1923
        %v2084 = vpop.f32.mrb[0].mxu0
        %v2085 = vadd.f32 %v1946, %v2084
        %v2086 = vpop.f32.mrb[0].mxu0
        %2087 = vmatprep.mubr.f32.mxu0 0.0
        %2088 = vmatmul.mubr.f32.gmra.mrb[0].mxu0 %v1924
        %v2089 = vpop.f32.mrb[0].mxu0
        %v2090 = vadd.f32 %v1946, %v2089
        %v2091 = vpop.f32.mrb[0].mxu0
        %2092 = vdwg.mxu0
        %v2093 = vxor.u32 %v2015, 2147483648
        %v2094 = vxor.u32 %v2020, 2147483648
        %v2095 = vxor.u32 %v2025, 2147483648
        %v2096 = vxor.u32 %v2030, 2147483648
        %v2097 = vxor.u32 %v2035, 2147483648
        %v2098 = vxor.u32 %v2040, 2147483648
        %v2099 = vxor.u32 %v2045, 2147483648
        %v2100 = vxor.u32 %v2050, 2147483648
        %v2101 = vxor.u32 %v2055, 2147483648
        %v2102 = vxor.u32 %v2060, 2147483648
        %v2103 = vxor.u32 %v2065, 2147483648
        %v2104 = vxor.u32 %v2070, 2147483648
        %v2105 = vxor.u32 %v2075, 2147483648
        %v2106 = vxor.u32 %v2080, 2147483648
        %v2107 = vxor.u32 %v2085, 2147483648
        %v2108 = vxor.u32 %v2090, 2147483648
        %v2109 = vmul.f32 %v2093, 1.442695
        %v2110 = vpow.pop %v2109
        %v2111 = vmul.f32 %v2094, 1.442695
        %v2112 = vpow.pop %v2111
        %v2113 = vmul.f32 %v2095, 1.442695
        %v2114 = vpow.pop %v2113
        %v2115 = vmul.f32 %v2096, 1.442695
        %v2116 = vpow.pop %v2115
        %v2117 = vmul.f32 %v2097, 1.442695
        %v2118 = vpow.pop %v2117
        %v2119 = vmul.f32 %v2098, 1.442695
        %v2120 = vpow.pop %v2119
        %v2121 = vmul.f32 %v2099, 1.442695
        %v2122 = vpow.pop %v2121
        %v2123 = vmul.f32 %v2100, 1.442695
        %v2124 = vpow.pop %v2123
        %v2125 = vmul.f32 %v2101, 1.442695
        %v2126 = vpow.pop %v2125
        %v2127 = vmul.f32 %v2102, 1.442695
        %v2128 = vpow.pop %v2127
        %v2129 = vmul.f32 %v2103, 1.442695
        %v2130 = vpow.pop %v2129
        %v2131 = vmul.f32 %v2104, 1.442695
        %v2132 = vpow.pop %v2131
        %v2133 = vmul.f32 %v2105, 1.442695
        %v2134 = vpow.pop %v2133
        %v2135 = vmul.f32 %v2106, 1.442695
        %v2136 = vpow.pop %v2135
        %v2137 = vmul.f32 %v2107, 1.442695
        %v2138 = vpow.pop %v2137
        %v2139 = vmul.f32 %v2108, 1.442695
        %v2140 = vpow.pop %v2139
        %v2141 = vadd.f32 %v2110, 1.0
        %v2142 = vadd.f32 %v2112, 1.0
        %v2143 = vadd.f32 %v2114, 1.0
        %v2144 = vadd.f32 %v2116, 1.0
        %v2145 = vadd.f32 %v2118, 1.0
        %v2146 = vadd.f32 %v2120, 1.0
        %v2147 = vadd.f32 %v2122, 1.0
        %v2148 = vadd.f32 %v2124, 1.0
        %v2149 = vadd.f32 %v2126, 1.0
        %v2150 = vadd.f32 %v2128, 1.0
        %v2151 = vadd.f32 %v2130, 1.0
        %v2152 = vadd.f32 %v2132, 1.0
        %v2153 = vadd.f32 %v2134, 1.0
        %v2154 = vadd.f32 %v2136, 1.0
        %v2155 = vadd.f32 %v2138, 1.0
        %v2156 = vadd.f32 %v2140, 1.0
        %v2157 = vrcp.pop %v2141
        %v2158 = vmul.f32 1.0, %v2157
        %v2159 = vrcp.pop %v2142
        %v2160 = vmul.f32 1.0, %v2159
        %v2161 = vrcp.pop %v2143
        %v2162 = vmul.f32 1.0, %v2161
        %v2163 = vrcp.pop %v2144
        %v2164 = vmul.f32 1.0, %v2163
        %v2165 = vrcp.pop %v2145
        %v2166 = vmul.f32 1.0, %v2165
        %v2167 = vrcp.pop %v2146
        %v2168 = vmul.f32 1.0, %v2167
        %v2169 = vrcp.pop %v2147
        %v2170 = vmul.f32 1.0, %v2169
        %v2171 = vrcp.pop %v2148
        %v2172 = vmul.f32 1.0, %v2171
        %v2173 = vrcp.pop %v2149
        %v2174 = vmul.f32 1.0, %v2173
        %v2175 = vrcp.pop %v2150
        %v2176 = vmul.f32 1.0, %v2175
        %v2177 = vrcp.pop %v2151
        %v2178 = vmul.f32 1.0, %v2177
        %v2179 = vrcp.pop %v2152
        %v2180 = vmul.f32 1.0, %v2179
        %v2181 = vrcp.pop %v2153
        %v2182 = vmul.f32 1.0, %v2181
        %v2183 = vrcp.pop %v2154
        %v2184 = vmul.f32 1.0, %v2183
        %v2185 = vrcp.pop %v2155
        %v2186 = vmul.f32 1.0, %v2185
        %v2187 = vrcp.pop %v2156
        %v2188 = vmul.f32 1.0, %v2187
        %v2189 = vmul.f32 %v2015, %v2158
        %v2190 = vmul.f32 %v2020, %v2160
        %v2191 = vmul.f32 %v2025, %v2162
        %v2192 = vmul.f32 %v2030, %v2164
        %v2193 = vmul.f32 %v2035, %v2166
        %v2194 = vmul.f32 %v2040, %v2168
        %v2195 = vmul.f32 %v2045, %v2170
        %v2196 = vmul.f32 %v2050, %v2172
        %v2197 = vmul.f32 %v2055, %v2174
        %v2198 = vmul.f32 %v2060, %v2176
        %v2199 = vmul.f32 %v2065, %v2178
        %v2200 = vmul.f32 %v2070, %v2180
        %v2201 = vmul.f32 %v2075, %v2182
        %v2202 = vmul.f32 %v2080, %v2184
        %v2203 = vmul.f32 %v2085, %v2186
        %v2204 = vmul.f32 %v2090, %v2188
        %v2205 = vld [vmem:[%s11] sm:$0x1]
        %v2207 = vlaneseq
        %v2208 = vshrl.u32 %v2207, 7
        %v2209 = vsub.s32 0, %v2208
        %v2210 = vrot.slane %v2205, %v2209
        %v2212 = vmul.f32 %v2189, %v2210
        %v2213 = vmul.f32 %v2190, %v2210
        %v2214 = vmul.f32 %v2191, %v2210
        %v2215 = vmul.f32 %v2192, %v2210
        %v2216 = vmul.f32 %v2193, %v2210
        %v2217 = vmul.f32 %v2194, %v2210
        %v2218 = vmul.f32 %v2195, %v2210
        %v2219 = vmul.f32 %v2196, %v2210
        %v2220 = vmul.f32 %v2197, %v2210
        %v2221 = vmul.f32 %v2198, %v2210
        %v2222 = vmul.f32 %v2199, %v2210
        %v2223 = vmul.f32 %v2200, %v2210
        %v2224 = vmul.f32 %v2201, %v2210
        %v2225 = vmul.f32 %v2202, %v2210
        %v2226 = vmul.f32 %v2203, %v2210
        %v2227 = vmul.f32 %v2204, %v2210
        %2228 = vadd.xlane.f32.xlu0 %v2212
        %v2229 = vpop.xlane.xlu0 %2228
        %2230 = vadd.xlane.f32.xlu0 %v2213
        %v2231 = vpop.xlane.xlu0 %2230
        %2232 = vadd.xlane.f32.xlu0 %v2214
        %v2233 = vpop.xlane.xlu0 %2232
        %2234 = vadd.xlane.f32.xlu0 %v2215
        %v2235 = vpop.xlane.xlu0 %2234
        %2236 = vadd.xlane.f32.xlu0 %v2216
        %v2237 = vpop.xlane.xlu0 %2236
        %2238 = vadd.xlane.f32.xlu0 %v2217
        %v2239 = vpop.xlane.xlu0 %2238
        %2240 = vadd.xlane.f32.xlu0 %v2218
        %v2241 = vpop.xlane.xlu0 %2240
        %2242 = vadd.xlane.f32.xlu0 %v2219
        %v2243 = vpop.xlane.xlu0 %2242
        %2244 = vadd.xlane.f32.xlu0 %v2220
        %v2245 = vpop.xlane.xlu0 %2244
        %2246 = vadd.xlane.f32.xlu0 %v2221
        %v2247 = vpop.xlane.xlu0 %2246
        %2248 = vadd.xlane.f32.xlu0 %v2222
        %v2249 = vpop.xlane.xlu0 %2248
        %2250 = vadd.xlane.f32.xlu0 %v2223
        %v2251 = vpop.xlane.xlu0 %2250
        %2252 = vadd.xlane.f32.xlu0 %v2224
        %v2253 = vpop.xlane.xlu0 %2252
        %2254 = vadd.xlane.f32.xlu0 %v2225
        %v2255 = vpop.xlane.xlu0 %2254
        %2256 = vadd.xlane.f32.xlu0 %v2226
        %v2257 = vpop.xlane.xlu0 %2256
        %2258 = vadd.xlane.f32.xlu0 %v2227
        %v2259 = vpop.xlane.xlu0 %2258
        %v2260 = vmul.f32 %v1354, %v2229
        %v2261 = vmul.f32 %v1360, %v2231
        %v2262 = vmul.f32 %v1366, %v2233
        %v2263 = vmul.f32 %v1372, %v2235
        %v2264 = vmul.f32 %v1378, %v2237
        %v2265 = vmul.f32 %v1384, %v2239
        %v2266 = vmul.f32 %v1390, %v2241
        %v2267 = vmul.f32 %v1396, %v2243
        %v2268 = vmul.f32 %v1402, %v2245
        %v2269 = vmul.f32 %v1408, %v2247
        %v2270 = vmul.f32 %v1414, %v2249
        %v2271 = vmul.f32 %v1420, %v2251
        %v2272 = vmul.f32 %v1426, %v2253
        %v2273 = vmul.f32 %v1432, %v2255
        %v2274 = vmul.f32 %v1438, %v2257
        %v2275 = vmul.f32 %v1444, %v2259
        %v2276 = vld [vmem:[#allocation5] sm:$0xff]
        %v2277 = vld [vmem:[#allocation5 + $0x8] sm:$0xff]
        %v2278 = vld [vmem:[#allocation5 + $0x10] sm:$0xff]
        %v2279 = vld [vmem:[#allocation5 + $0x18] sm:$0xff]
        %2280 = vxpose.xlu0.b32.start [1/16] %v907, 128
        %2281 = vxpose.xlu0.b32.cont [2/16] %v908, 128
        %2282 = vxpose.xlu0.b32.cont [3/16] %v909, 128
        %2283 = vxpose.xlu0.b32.cont [4/16] %v910, 128
        %2284 = vxpose.xlu0.b32.cont [5/16] %v911, 128
        %2285 = vxpose.xlu0.b32.cont [6/16] %v912, 128
        %2286 = vxpose.xlu0.b32.cont [7/16] %v913, 128
        %2287 = vxpose.xlu0.b32.cont [8/16] %v914, 128
        %2288 = vxpose.xlu0.b32.cont [9/16] %v915, 128
        %2289 = vxpose.xlu0.b32.cont [10/16] %v916, 128
        %2290 = vxpose.xlu0.b32.cont [11/16] %v917, 128
        %2291 = vxpose.xlu0.b32.cont [12/16] %v918, 128
        %2292 = vxpose.xlu0.b32.cont [13/16] %v919, 128
        %2293 = vxpose.xlu0.b32.cont [14/16] %v920, 128
        %2294 = vxpose.xlu0.b32.cont [15/16] %v921, 128
        %2295 = vxpose.xlu0.b32.end [16/16] %v922, 128
        %v2296 = vpop.trf.xlu0
        %v2297 = vpop.trf.xlu0
        %v2298 = vpop.trf.xlu0
        %v2299 = vpop.trf.xlu0
        %v2300 = vpop.trf.xlu0
        %v2301 = vpop.trf.xlu0
        %v2302 = vpop.trf.xlu0
        %v2303 = vpop.trf.xlu0
        %v2304 = vpop.trf.xlu0
        %v2305 = vpop.trf.xlu0
        %v2306 = vpop.trf.xlu0
        %v2307 = vpop.trf.xlu0
        %v2308 = vpop.trf.xlu0
        %v2309 = vpop.trf.xlu0
        %v2310 = vpop.trf.xlu0
        %v2311 = vpop.trf.xlu0
        %2312 = vmatprep.subr.mxu0 %v2260
        %2313 = vmatpush1.msra.mxu0 %v1909
        %2314 = vmatprep.subr.mxu0 %v2261
        %2315 = vmatpush1.msra.mxu0 %v1910
        %2316 = vmatprep.subr.mxu0 %v2262
        %2317 = vmatpush1.msra.mxu0 %v1911
        %2318 = vmatprep.subr.mxu0 %v2263
        %2319 = vmatpush1.msra.mxu0 %v1912
        %2320 = vmatprep.subr.mxu0 %v2264
        %2321 = vmatpush1.msra.mxu0 %v1913
        %2322 = vmatprep.subr.mxu0 %v2265
        %2323 = vmatpush1.msra.mxu0 %v1914
        %2324 = vmatprep.subr.mxu0 %v2266
        %2325 = vmatpush1.msra.mxu0 %v1915
        %2326 = vmatprep.subr.mxu0 %v2267
        %2327 = vmatpush1.msra.mxu0 %v1916
        %2328 = vmatprep.subr.mxu0 %v2268
        %2329 = vmatpush1.msra.mxu0 %v1917
        %2330 = vmatprep.subr.mxu0 %v2269
        %2331 = vmatpush1.msra.mxu0 %v1918
        %2332 = vmatprep.subr.mxu0 %v2270
        %2333 = vmatpush1.msra.mxu0 %v1919
        %2334 = vmatprep.subr.mxu0 %v2271
        %2335 = vmatpush1.msra.mxu0 %v1920
        %2336 = vmatprep.subr.mxu0 %v2272
        %2337 = vmatpush1.msra.mxu0 %v1921
        %2338 = vmatprep.subr.mxu0 %v2273
        %2339 = vmatpush1.msra.mxu0 %v1922
        %2340 = vmatprep.subr.mxu0 %v2274
        %2341 = vmatpush1.msra.mxu0 %v1923
        %2342 = vmatprep.subr.mxu0 %v2275
        %2343 = vmatpush1.msra.mxu0 %v1924
        %2344 = vmatprep.subr.mxu0 0.0
        %2345 = vmatpush1.msra.mxu0 0.0
        %2346 = vmatprep.subr.mxu0 0.0
        %2347 = vmatpush1.msra.mxu0 0.0
        %2348 = vmatprep.subr.mxu0 0.0
        %2349 = vmatpush1.msra.mxu0 0.0
        %2350 = vmatprep.subr.mxu0 0.0
        %2351 = vmatpush1.msra.mxu0 0.0
        %2352 = vmatprep.subr.mxu0 0.0
        %2353 = vmatpush1.msra.mxu0 0.0
        %2354 = vmatprep.subr.mxu0 0.0
        %2355 = vmatpush1.msra.mxu0 0.0
        %2356 = vmatprep.subr.mxu0 0.0
        %2357 = vmatpush1.msra.mxu0 0.0
        %2358 = vmatprep.subr.mxu0 0.0
        %2359 = vmatpush1.msra.mxu0 0.0
        %2360 = vmatprep.subr.mxu0 0.0
        %2361 = vmatpush1.msra.mxu0 0.0
        %2362 = vmatprep.subr.mxu0 0.0
        %2363 = vmatpush1.msra.mxu0 0.0
        %2364 = vmatprep.subr.mxu0 0.0
        %2365 = vmatpush1.msra.mxu0 0.0
        %2366 = vmatprep.subr.mxu0 0.0
        %2367 = vmatpush1.msra.mxu0 0.0
        %2368 = vmatprep.subr.mxu0 0.0
        %2369 = vmatpush1.msra.mxu0 0.0
        %2370 = vmatprep.subr.mxu0 0.0
        %2371 = vmatpush1.msra.mxu0 0.0
        %2372 = vmatprep.subr.mxu0 0.0
        %2373 = vmatpush1.msra.mxu0 0.0
        %2374 = vmatprep.subr.mxu0 0.0
        %2375 = vmatpush1.msra.mxu0 0.0
        %2376 = vmatprep.mubr.f32.mxu0 0.0
        %2377 = vmatmul.mubr.f32.gmra.mrb[0].mxu0 %v2296
        %v2378 = vpop.f32.mrb[0].mxu0
        %v2379 = vadd.f32 0.0, %v2378
        %v2380 = vpop.f32.mrb[0].mxu0
        %v2381 = vadd.f32 0.0, %v2380
        %2382 = vmatprep.mubr.f32.mxu0 0.0
        %2383 = vmatmul.mubr.f32.gmra.mrb[0].mxu0 %v2297
        %v2384 = vpop.f32.mrb[0].mxu0
        %v2385 = vadd.f32 0.0, %v2384
        %v2386 = vpop.f32.mrb[0].mxu0
        %v2387 = vadd.f32 0.0, %v2386
        %2388 = vdwg.mxu0
        %v2389 = vadd.f32 %v2276, %v2379
        %v2390 = vadd.f32 %v2277, %v2381
        %v2391 = vadd.f32 %v2278, %v2385
        %v2392 = vadd.f32 %v2279, %v2387
        %2393 = vst [vmem:[#allocation5] sm:$0xff] %v2389
        %2394 = vst [vmem:[#allocation5 + $0x8] sm:$0xff] %v2390
        %2395 = vst [vmem:[#allocation5 + $0x10] sm:$0xff] %v2391
        %2396 = vst [vmem:[#allocation5 + $0x18] sm:$0xff] %v2392
        %p2397 = scmp.eq.s32.totalorder %s33, 1
        // Predicated region
        $region101: #{tpu_custom_call.1} parent=79 // pred_check
          %p2398 = pneg %p2397
        $region102: #{tpu_custom_call.1} parent=79 // pred_check_branch
          %2400 = sbr.rel (%p2398) target = $region104
        $region103: #{tpu_custom_call.1} parent=79 // pred_region
          %v2401 = vld [vmem:[#allocation5] sm:$0xff]
          %v2402 = vld [vmem:[#allocation5 + $0x8] sm:$0xff]
          %v2403 = vld [vmem:[#allocation5 + $0x10] sm:$0xff]
          %v2404 = vld [vmem:[#allocation5 + $0x18] sm:$0xff]
          %v2405 = vld [vmem:[#allocation6] sm:$0xff]
          %v2406 = vld [vmem:[#allocation6 + $0x8] sm:$0xff]
          %v2407 = vld [vmem:[%s3] sm:$0xff]
          %v2408 = vld [vmem:[%s3 + $0x8] sm:$0xff]
          %2410 = vset.pattern.permute.xlu0 0
          %2411 = vperm.xlu0 %2410, %v2407
          %v2412 = vpop.permute.xlu0 %2411
          %2415 = vset.pattern.permute.xlu0 0
          %2416 = vperm.xlu0 %2415, %v2408
          %v2417 = vpop.permute.xlu0 %2416
          %v2419 = vmul.f32 %v2402, %v2412
          %v2420 = vmul.f32 %v2404, %v2417
          %v2421 = vadd.f32 %v2405, %v2419
          %v2422 = vadd.f32 %v2406, %v2420
          %2423 = vst [vmem:[#allocation15] sm:$0xff] %v2421
          %2424 = vst [vmem:[#allocation15 + $0x8] sm:$0xff] %v2422
          %v2425 = vld [vmem:[#allocation4] sm:$0xff]
          %v2426 = vld [vmem:[#allocation4 + $0x8] sm:$0xff]
          %v2427 = vld [vmem:[#allocation11] sm:$0xff]
          %v2428 = vld [vmem:[#allocation11 + $0x8] sm:$0xff]
          %v2429 = vld [vmem:[#allocation11 + $0x10] sm:$0xff]
          %v2430 = vld [vmem:[#allocation11 + $0x18] sm:$0xff]
          %v2431 = vld [vmem:[#allocation11 + $0x20] sm:$0xff]
          %v2432 = vld [vmem:[#allocation11 + $0x28] sm:$0xff]
          %v2433 = vld [vmem:[#allocation11 + $0x30] sm:$0xff]
          %v2434 = vld [vmem:[#allocation11 + $0x38] sm:$0xff]
          %v2435 = vld [vmem:[#allocation11 + $0x40] sm:$0xff]
          %v2436 = vld [vmem:[#allocation11 + $0x48] sm:$0xff]
          %v2437 = vld [vmem:[#allocation11 + $0x50] sm:$0xff]
          %v2438 = vld [vmem:[#allocation11 + $0x58] sm:$0xff]
          %v2439 = vld [vmem:[#allocation11 + $0x60] sm:$0xff]
          %v2440 = vld [vmem:[#allocation11 + $0x68] sm:$0xff]
          %v2441 = vld [vmem:[#allocation11 + $0x70] sm:$0xff]
          %v2442 = vld [vmem:[#allocation11 + $0x78] sm:$0xff]
          %2443 = vmatprep.subr.mxu0 0.0
          %2444 = vmatpush1.msra.mxu0 %v2427
          %2445 = vmatprep.subr.mxu0 0.0
          %2446 = vmatpush1.msra.mxu0 %v2428
          %2447 = vmatprep.subr.mxu0 0.0
          %2448 = vmatpush1.msra.mxu0 %v2429
          %2449 = vmatprep.subr.mxu0 0.0
          %2450 = vmatpush1.msra.mxu0 %v2430
          %2451 = vmatprep.subr.mxu0 0.0
          %2452 = vmatpush1.msra.mxu0 %v2431
          %2453 = vmatprep.subr.mxu0 0.0
          %2454 = vmatpush1.msra.mxu0 %v2432
          %2455 = vmatprep.subr.mxu0 0.0
          %2456 = vmatpush1.msra.mxu0 %v2433
          %2457 = vmatprep.subr.mxu0 0.0
          %2458 = vmatpush1.msra.mxu0 %v2434
          %2459 = vmatprep.subr.mxu0 0.0
          %2460 = vmatpush1.msra.mxu0 %v2435
          %2461 = vmatprep.subr.mxu0 0.0
          %2462 = vmatpush1.msra.mxu0 %v2436
          %2463 = vmatprep.subr.mxu0 0.0
          %2464 = vmatpush1.msra.mxu0 %v2437
          %2465 = vmatprep.subr.mxu0 0.0
          %2466 = vmatpush1.msra.mxu0 %v2438
          %2467 = vmatprep.subr.mxu0 0.0
          %2468 = vmatpush1.msra.mxu0 %v2439
          %2469 = vmatprep.subr.mxu0 0.0
          %2470 = vmatpush1.msra.mxu0 %v2440
          %2471 = vmatprep.subr.mxu0 0.0
          %2472 = vmatpush1.msra.mxu0 %v2441
          %2473 = vmatprep.subr.mxu0 0.0
          %2474 = vmatpush1.msra.mxu0 %v2442
          %2475 = vmatprep.subr.mxu0 0.0
          %2476 = vmatpush1.msra.mxu0 0.0
          %2477 = vmatprep.subr.mxu0 0.0
          %2478 = vmatpush1.msra.mxu0 0.0
          %2479 = vmatprep.subr.mxu0 0.0
          %2480 = vmatpush1.msra.mxu0 0.0
          %2481 = vmatprep.subr.mxu0 0.0
          %2482 = vmatpush1.msra.mxu0 0.0
          %2483 = vmatprep.subr.mxu0 0.0
          %2484 = vmatpush1.msra.mxu0 0.0
          %2485 = vmatprep.subr.mxu0 0.0
          %2486 = vmatpush1.msra.mxu0 0.0
          %2487 = vmatprep.subr.mxu0 0.0
          %2488 = vmatpush1.msra.mxu0 0.0
          %2489 = vmatprep.subr.mxu0 0.0
          %2490 = vmatpush1.msra.mxu0 0.0
          %2491 = vmatprep.subr.mxu0 0.0
          %2492 = vmatpush1.msra.mxu0 0.0
          %2493 = vmatprep.subr.mxu0 0.0
          %2494 = vmatpush1.msra.mxu0 0.0
          %2495 = vmatprep.subr.mxu0 0.0
          %2496 = vmatpush1.msra.mxu0 0.0
          %2497 = vmatprep.subr.mxu0 0.0
          %2498 = vmatpush1.msra.mxu0 0.0
          %2499 = vmatprep.subr.mxu0 0.0
          %2500 = vmatpush1.msra.mxu0 0.0
          %2501 = vmatprep.subr.mxu0 0.0
          %2502 = vmatpush1.msra.mxu0 0.0
          %2503 = vmatprep.subr.mxu0 0.0
          %2504 = vmatpush1.msra.mxu0 0.0
          %2505 = vmatprep.subr.mxu0 0.0
          %2506 = vmatpush1.msra.mxu0 0.0
          %2507 = vmatprep.mubr.f32.mxu0 0.0
          %2508 = vmatmul.mubr.f32.gmra.mrb[0].mxu0 %v2401
          %v2509 = vpop.f32.mrb[0].mxu0
          %v2510 = vadd.f32 0.0, %v2509
          %v2511 = vpop.f32.mrb[0].mxu0
          %2512 = vmatprep.mubr.f32.mxu0 0.0
          %2513 = vmatmul.mubr.f32.gmra.mrb[0].mxu0 %v2403
          %v2514 = vpop.f32.mrb[0].mxu0
          %v2515 = vadd.f32 0.0, %v2514
          %v2516 = vpop.f32.mrb[0].mxu0
          %2517 = vdwg.mxu0
          %v2518 = vadd.f32 %v2425, %v2510
          %v2519 = vadd.f32 %v2426, %v2515
          %v2520 = vxor.u32 %v2518, 2147483648
          %v2521 = vxor.u32 %v2519, 2147483648
          %v2522 = vmul.f32 %v2520, 1.442695
          %v2523 = vpow.pop %v2522
          %v2524 = vmul.f32 %v2521, 1.442695
          %v2525 = vpow.pop %v2524
          %v2526 = vadd.f32 %v2523, 1.0
          %v2527 = vadd.f32 %v2525, 1.0
          %v2528 = vrcp.pop %v2526
          %v2529 = vmul.f32 1.0, %v2528
          %v2530 = vrcp.pop %v2527
          %v2531 = vmul.f32 1.0, %v2530
          %v2532 = vmul.f32 %v2518, %v2529
          %v2533 = vmul.f32 %v2519, %v2531
          %v2534 = vld [vmem:[#allocation12] sm:$0xff]
          %v2535 = vld [vmem:[#allocation12 + $0x8] sm:$0xff]
          %v2536 = vld [vmem:[#allocation12 + $0x10] sm:$0xff]
          %v2537 = vld [vmem:[#allocation12 + $0x18] sm:$0xff]
          %v2538 = vld [vmem:[#allocation12 + $0x20] sm:$0xff]
          %v2539 = vld [vmem:[#allocation12 + $0x28] sm:$0xff]
          %v2540 = vld [vmem:[#allocation12 + $0x30] sm:$0xff]
          %v2541 = vld [vmem:[#allocation12 + $0x38] sm:$0xff]
          %v2542 = vld [vmem:[#allocation12 + $0x40] sm:$0xff]
          %v2543 = vld [vmem:[#allocation12 + $0x48] sm:$0xff]
          %v2544 = vld [vmem:[#allocation12 + $0x50] sm:$0xff]
          %v2545 = vld [vmem:[#allocation12 + $0x58] sm:$0xff]
          %v2546 = vld [vmem:[#allocation12 + $0x60] sm:$0xff]
          %v2547 = vld [vmem:[#allocation12 + $0x68] sm:$0xff]
          %v2548 = vld [vmem:[#allocation12 + $0x70] sm:$0xff]
          %v2549 = vld [vmem:[#allocation12 + $0x78] sm:$0xff]
          %v2550 = vld [vmem:[%s14] sm:$0x1]
          %v2552 = vlaneseq
          %v2553 = vshrl.u32 %v2552, 7
          %v2554 = vsub.s32 0, %v2553
          %v2555 = vrot.slane %v2550, %v2554
          %2557 = vmatprep.subr.mxu0 0.0
          %2558 = vmatpush1.msra.mxu0 %v2534
          %2559 = vmatprep.subr.mxu0 0.0
          %2560 = vmatpush1.msra.mxu0 %v2535
          %2561 = vmatprep.subr.mxu0 0.0
          %2562 = vmatpush1.msra.mxu0 %v2536
          %2563 = vmatprep.subr.mxu0 0.0
          %2564 = vmatpush1.msra.mxu0 %v2537
          %2565 = vmatprep.subr.mxu0 0.0
          %2566 = vmatpush1.msra.mxu0 %v2538
          %2567 = vmatprep.subr.mxu0 0.0
          %2568 = vmatpush1.msra.mxu0 %v2539
          %2569 = vmatprep.subr.mxu0 0.0
          %2570 = vmatpush1.msra.mxu0 %v2540
          %2571 = vmatprep.subr.mxu0 0.0
          %2572 = vmatpush1.msra.mxu0 %v2541
          %2573 = vmatprep.subr.mxu0 0.0
          %2574 = vmatpush1.msra.mxu0 %v2542
          %2575 = vmatprep.subr.mxu0 0.0
          %2576 = vmatpush1.msra.mxu0 %v2543
          %2577 = vmatprep.subr.mxu0 0.0
          %2578 = vmatpush1.msra.mxu0 %v2544
          %2579 = vmatprep.subr.mxu0 0.0
          %2580 = vmatpush1.msra.mxu0 %v2545
          %2581 = vmatprep.subr.mxu0 0.0
          %2582 = vmatpush1.msra.mxu0 %v2546
          %2583 = vmatprep.subr.mxu0 0.0
          %2584 = vmatpush1.msra.mxu0 %v2547
          %2585 = vmatprep.subr.mxu0 0.0
          %2586 = vmatpush1.msra.mxu0 %v2548
          %2587 = vmatprep.subr.mxu0 0.0
          %2588 = vmatpush1.msra.mxu0 %v2549
          %2589 = vmatprep.subr.mxu0 0.0
          %2590 = vmatpush1.msra.mxu0 0.0
          %2591 = vmatprep.subr.mxu0 0.0
          %2592 = vmatpush1.msra.mxu0 0.0
          %2593 = vmatprep.subr.mxu0 0.0
          %2594 = vmatpush1.msra.mxu0 0.0
          %2595 = vmatprep.subr.mxu0 0.0
          %2596 = vmatpush1.msra.mxu0 0.0
          %2597 = vmatprep.subr.mxu0 0.0
          %2598 = vmatpush1.msra.mxu0 0.0
          %2599 = vmatprep.subr.mxu0 0.0
          %2600 = vmatpush1.msra.mxu0 0.0
          %2601 = vmatprep.subr.mxu0 0.0
          %2602 = vmatpush1.msra.mxu0 0.0
          %2603 = vmatprep.subr.mxu0 0.0
          %2604 = vmatpush1.msra.mxu0 0.0
          %2605 = vmatprep.subr.mxu0 0.0
          %2606 = vmatpush1.msra.mxu0 0.0
          %2607 = vmatprep.subr.mxu0 0.0
          %2608 = vmatpush1.msra.mxu0 0.0
          %2609 = vmatprep.subr.mxu0 0.0
          %2610 = vmatpush1.msra.mxu0 0.0
          %2611 = vmatprep.subr.mxu0 0.0
          %2612 = vmatpush1.msra.mxu0 0.0
          %2613 = vmatprep.subr.mxu0 0.0
          %2614 = vmatpush1.msra.mxu0 0.0
          %2615 = vmatprep.subr.mxu0 0.0
          %2616 = vmatpush1.msra.mxu0 0.0
          %2617 = vmatprep.subr.mxu0 0.0
          %2618 = vmatpush1.msra.mxu0 0.0
          %2619 = vmatprep.subr.mxu0 0.0
          %2620 = vmatpush1.msra.mxu0 0.0
          %2621 = vmatprep.mubr.f32.mxu0 0.0
          %2622 = vmatmul.mubr.f32.gmra.mrb[0].mxu0 %v2532
          %v2623 = vpop.f32.mrb[0].mxu0
          %v2624 = vadd.f32 %v2555, %v2623
          %v2625 = vpop.f32.mrb[0].mxu0
          %2626 = vmatprep.mubr.f32.mxu0 0.0
          %2627 = vmatmul.mubr.f32.gmra.mrb[0].mxu0 %v2533
          %v2628 = vpop.f32.mrb[0].mxu0
          %v2629 = vadd.f32 %v2555, %v2628
          %v2630 = vpop.f32.mrb[0].mxu0
          %2631 = vdwg.mxu0
          %v2632 = vld [vmem:[%s1] sm:$0xff]
          %v2633 = vld [vmem:[%s1 + $0x8] sm:$0xff]
          %v2634 = vadd.f32 %v2632, %v2624
          %v2635 = vadd.f32 %v2633, %v2629
          %2636 = vst [vmem:[#allocation14] sm:$0xff] %v2634
          %2637 = vst [vmem:[#allocation14 + $0x8] sm:$0xff] %v2635
        $region104: #{tpu_custom_call.1} parent=79 // pred_fallthru
          _
        // Predicated region
        $region105: #{tpu_custom_call.1} parent=79 // pred_check
          %p2638 = pneg %p366
        $region106: #{tpu_custom_call.1} parent=79 // pred_check_branch
          %2640 = sbr.rel (%p2638) target = $region108
        $region107: #{tpu_custom_call.1} parent=79 // pred_region
          %s2642 = ssub.s32 256, 256
          %2643 = vsyncadd [#allocation8], %s2642
          %s2644 = sshll.u32 [#allocation14], 4
          %s2645 = int_to_ptr.vmem [resolvable:$true] %s2644
          %2650 = dma.vmem_to_hbm [thread:$0]  %s2645, 256, %s15, [#allocation8], 128, 128, 8
        $region108: #{tpu_custom_call.1} parent=79 // pred_fallthru
          _
        // Predicated region
        $region109: #{tpu_custom_call.1} parent=79 // pred_check
          %p2651 = pneg %p387
        $region110: #{tpu_custom_call.1} parent=79 // pred_check_branch
          %2653 = sbr.rel (%p2651) target = $region112
        $region111: #{tpu_custom_call.1} parent=79 // pred_region
          %s2655 = ssub.s32 256, 256
          %2656 = vsyncadd [#allocation16], %s2655
          %s2657 = sshll.u32 [#allocation15], 4
          %s2658 = int_to_ptr.vmem [resolvable:$true] %s2657
          %2663 = dma.vmem_to_hbm [thread:$0]  %s2658, 256, %s16, [#allocation16], 128, 128, 8
        $region112: #{tpu_custom_call.1} parent=79 // pred_fallthru
          _
        // Predicated region
        $region113: #{tpu_custom_call.1} parent=79 // pred_check
          %p2664 = pneg %p366
        $region114: #{tpu_custom_call.1} parent=79 // pred_check_branch
          %2666 = sbr.rel (%p2664) target = $region116
        $region115: #{tpu_custom_call.1} parent=79 // pred_region
          %2667 = dma.done [#allocation8], 256
        $region116: #{tpu_custom_call.1} parent=79 // pred_fallthru
          _
        // Predicated region
        $region117: #{tpu_custom_call.1} parent=79 // pred_check
          %p2668 = pneg %p387
        $region118: #{tpu_custom_call.1} parent=79 // pred_check_branch
          %2670 = sbr.rel (%p2668) target = $region120
        $region119: #{tpu_custom_call.1} parent=79 // pred_region
          %2671 = dma.done [#allocation16], 256
        $region120: #{tpu_custom_call.1} parent=79 // pred_fallthru
          _
      $region80: #{tpu_custom_call.1} parent=5 // pred_fallthru
        _
      %p2672 = scmp.le.s32.totalorder 2, %s28
      // Predicated region
      $region121: #{tpu_custom_call.1} parent=5 // pred_check
        %p2673 = pneg %p2672
      $region122: #{tpu_custom_call.1} parent=5 // pred_check_branch
        %2675 = sbr.rel (%p2673) target = $region124
      $region123: #{tpu_custom_call.1} parent=5 // pred_region
        %s2676 = ssub.s32 %s28, 2
      $region124: #{tpu_custom_call.1} parent=5 // pred_fallthru
        _
    $region6: #{tpu_custom_call.1} parent=1 // loop_footer
      %s32 = sadd.s32 1, %s28
    $region7: #{tpu_custom_call.1} parent=1 // loop_footer_branch
      %27 = sbr.rel target = $region3
    $region8: #{tpu_custom_call.1} parent=1 // loop_exit
      _
    %2677 = vsyncpa [#allocation7], 1
    %s2678 = scalar_lea.sflag [#allocation7], 1
    %2679 = vsyncpa %s2678, 1
    %2680 = vsyncpa [#allocation10], 1
    %2681 = vsyncpa [#allocation13], 1
    %2682 = vsyncpa [#allocation8], 1
    %s2683 = scalar_lea.sflag [#allocation8], 1
    %2684 = vsyncpa %s2683, 1
    %2685 = vsyncpa [#allocation16], 1

// kernel: tpu_custom_call.1
$region0: #{tpu_custom_call.1}
  #allocation0 [shape = 'u32[]', space=smem, size = 0x4, offset = 0x4, fixed_abs, tag = 'smem constant byte address 0x4 - core index']
  #allocation1 [shape = 'u32[144,128]{1,0:T(1,128)}', space=vmem, size = 0x12000, scoped, tag = 'internal scratch']
  #allocation2 [shape = 'f32[16,256]{1,0:T(8,128)}', space=vmem, size = 0x4000, scoped, tag = 'scratch operand']
  #allocation3 [shape = 'f32[16,256]{1,0:T(8,128)}', space=vmem, size = 0x4000, scoped, tag = 'scratch operand']
  #allocation4 [shape = 'f32[16,128]{1,0:T(8,128)}', space=vmem, size = 0x2000, scoped, tag = 'scratch operand']
  #allocation5 [shape = 'f32[16,256]{1,0:T(8,128)}', space=vmem, size = 0x4000, scoped, tag = 'scratch operand']
  %s0 = inlined_call_operand.vmem [shape: s32[256,2], index: 0, kind: input, shape index: {}]
  %s1 = inlined_call_operand.vmem [shape: f32[16,128], index: 1, kind: input, shape index: {}]
  %s2 = inlined_call_operand.hbm [shape: f32[16,128], index: 2, kind: input, shape index: {}]
  %s3 = inlined_call_operand.vmem [shape: f32[16,1], index: 3, kind: input, shape index: {}]
  %s4 = inlined_call_operand.hbm [shape: f32[128,384], index: 4, kind: input, shape index: {}]
  %s5 = inlined_call_operand.vmem [shape: f32[1,384], index: 5, kind: input, shape index: {}]
  %s6 = inlined_call_operand.vmem [shape: f32[1,128], index: 6, kind: input, shape index: {}]
  %s7 = inlined_call_operand.vmem [shape: f32[128,128], index: 7, kind: input, shape index: {}]
  %s8 = inlined_call_operand.vmem [shape: f32[1,128], index: 8, kind: input, shape index: {}]
  %s9 = inlined_call_operand.vmem [shape: f32[128,128], index: 9, kind: input, shape index: {}]
  %s10 = inlined_call_operand.vmem [shape: f32[1,128], index: 10, kind: input, shape index: {}]
  %s11 = inlined_call_operand.vmem [shape: f32[1,128], index: 11, kind: input, shape index: {}]
  %s12 = inlined_call_operand.hbm [shape: f32[128,128], index: 12, kind: input, shape index: {}]
  %s13 = inlined_call_operand.hbm [shape: f32[128,128], index: 13, kind: input, shape index: {}]
  %s14 = inlined_call_operand.vmem [shape: f32[1,128], index: 14, kind: input, shape index: {}]
  %s15 = inlined_call_operand.hbm [shape: f32[16,128], index: 15, kind: output, shape index: {0}]
  %s16 = inlined_call_operand.hbm [shape: f32[16,128], index: 16, kind: output, shape index: {1}]
  %17 = xla_tuple %s15, %s16
  %s18 = sld [smem:[#allocation0]]
  $region125: #{tpu_custom_call.1} parent=0
    _
  %s20 = ssub.s32 1, %s18
  %s21 = scalar_select 0, %s20, %s18
  $region1: #{tpu_custom_call.1} parent=0
    #allocation6 [shape = 'u8[8192]{0}', space=vmem, size = 0x2000, scoped, tag = 'input window, operand 2, single buffered']
    #allocation7 [shape = 's32[2]{0}', space=sflag, size = 0x8, scoped, tag = 'scoped memory for tpu_custom_call.1']
    #allocation8 [shape = 's32[2]{0}', space=sflag, size = 0x8, scoped, tag = 'scoped memory for tpu_custom_call.1']
    #allocation9 [shape = 'u8[196608]{0}', space=vmem, size = 0x30000, scoped, tag = 'input window, operand 4, single buffered']
    #allocation10 [shape = 's32[1]{0}', space=sflag, size = 0x4, scoped, tag = 'scoped memory for tpu_custom_call.1']
    #allocation11 [shape = 'u8[65536]{0}', space=vmem, size = 0x10000, scoped, tag = 'input window, operand 12, single buffered']
    #allocation12 [shape = 'u8[65536]{0}', space=vmem, size = 0x10000, scoped, tag = 'input window, operand 13, single buffered']
    #allocation13 [shape = 's32[1]{0}', space=sflag, size = 0x4, scoped, tag = 'scoped memory for tpu_custom_call.1']
    #allocation14 [shape = 'u8[8192]{0}', space=vmem, size = 0x2000, scoped, tag = 'output window, operand 0, single buffered']
    #allocation15 [shape = 'u8[8192]{0}', space=vmem, size = 0x2000, scoped, tag = 'output window, operand 1, single buffered']
    #allocation16 [shape = 's32[1]{0}', space=sflag, size = 0x4, scoped, tag = 'scoped memory for tpu_custom_call.1']
    %22 = vsyncpa [#allocation7], 0
    %23 = vsyncpa [#allocation10], 0
    %24 = vsyncpa [#allocation13], 0
    %25 = vsyncpa [#allocation8], 0
    %26 = vsyncpa [#allocation16], 0
    loop: start=0, step=1, limit=4
    $region2: #{tpu_custom_call.1} parent=1 // loop_pre_header
      _
    $region3: #{tpu_custom_call.1} parent=1 // loop_header
      %s28 = sphi 0, %s32
      %p29 = scmp.ge.s32.totalorder %s28, 4
      %s38 = sphi 0, %s40
      %s41 = sphi 0, %s38
      %s42 = sphi 0, %s41
      %s58 = sphi 0, %s42
      %s62 = sphi 0, %s62
      %s64 = sphi 0, %s62
      %s65 = sphi 0, %s64
      %s79 = sphi 0, %s65
      %s83 = sphi 0, %s83
      %s85 = sphi 0, %s83
      %s86 = sphi 0, %s85
      %s100 = sphi 0, %s86
      %s104 = sphi 0, %s104
      %s106 = sphi 0, %s104
      %s107 = sphi 0, %s106
      %s121 = sphi 0, %s107
      %s125 = sphi 0, %s125
      %s127 = sphi 0, %s125
      %s128 = sphi 0, %s127
      %s142 = sphi 0, %s128
      %s146 = sphi 0, %s146
      %s148 = sphi 0, %s146
      %s149 = sphi 0, %s148
      %s163 = sphi 0, %s149
      %s167 = sphi 0, %s167
      %s169 = sphi 0, %s167
      %s170 = sphi 0, %s169
      %s184 = sphi 0, %s170
      %s188 = sphi 0, %s188
      %s190 = sphi 0, %s188
      %s191 = sphi 0, %s190
      %s205 = sphi 0, %s191
      %s209 = sphi 0, %s209
      %s211 = sphi 0, %s209
      %s212 = sphi 0, %s211
      %s226 = sphi 0, %s212
      %s230 = sphi 0, %s230
      %s232 = sphi 0, %s230
      %s233 = sphi 0, %s232
      %s247 = sphi 0, %s233
      %s251 = sphi 0, %s251
      %s253 = sphi 0, %s251
      %s254 = sphi 0, %s253
      %s268 = sphi 0, %s254
      %s272 = sphi 0, %s272
      %s274 = sphi 0, %s272
      %s275 = sphi 0, %s274
      %s289 = sphi 0, %s275
      %s293 = sphi 0, %s293
      %s295 = sphi 0, %s293
      %s296 = sphi 0, %s295
      %s310 = sphi 0, %s296
      %s314 = sphi 0, %s314
      %s316 = sphi 0, %s314
      %s317 = sphi 0, %s316
      %s331 = sphi 0, %s317
      %s335 = sphi 0, %s335
      %s337 = sphi 0, %s335
      %s338 = sphi 0, %s337
      %s352 = sphi 0, %s338
      %s356 = sphi 0, %s356
      %s358 = sphi 0, %s356
      %s359 = sphi 0, %s358
      %s373 = sphi 0, %s359
      %s377 = sphi 0, %s377
      %s379 = sphi 0, %s377
      %s380 = sphi 0, %s379
      %s394 = sphi 0, %s380
    $region4: #{tpu_custom_call.1} parent=1 // loop_header_branch
      %31 = sbr.rel (%p29) target = $region8
    $region5: #{tpu_custom_call.1} parent=1 // loop_body
      %s33 = ssub.s32 %s28, 1
      %s34 = ssub.s32 %s28, 2
      %s35 = sadd.s32 %s28, 1
      %s36 = ssub.s32 %s28, %s35
      %p37 = scmp.eq.s32.totalorder %s36, 0
      %s39 = sadd.s32 %s38, 1
      %s40 = scalar_select %p37, %s38, %s39
      %p43 = pneg %p37
      %p44 = scmp.eq.s32.totalorder %s28, 1
      %p45 = por %p43, %p44
      %p46 = scmp.ne.s32.totalorder %s38, %s41
      %p47 = scmp.eq.s32.totalorder %s28, 0
      %p48 = por %p46, %p47
      %p49 = scmp.ne.s32.totalorder %s38, %s41
      %p50 = scmp.eq.s32.totalorder %s33, 1
      %p51 = por %p49, %p50
      %p52 = scmp.ne.s32.totalorder %s41, %s42
      %p53 = scmp.eq.s32.totalorder %s33, 0
      %p54 = por %p52, %p53
      %p55 = scmp.ne.s32.totalorder %s41, %s42
      %p56 = scmp.eq.s32.totalorder %s34, 1
      %p57 = por %p55, %p56
      %p59 = scmp.ne.s32.totalorder %s42, %s58
      %p60 = scmp.eq.s32.totalorder %s34, 0
      %p61 = por %p59, %p60
      %s63 = sadd.s32 %s62, 1
      %p66 = scmp.eq.s32.totalorder %s28, 1
      %p67 = scmp.ne.s32.totalorder %s62, %s64
      %p68 = scmp.eq.s32.totalorder %s28, 0
      %p69 = por %p67, %p68
      %p70 = scmp.ne.s32.totalorder %s62, %s64
      %p71 = scmp.eq.s32.totalorder %s33, 1
      %p72 = por %p70, %p71
      %p73 = scmp.ne.s32.totalorder %s64, %s65
      %p74 = scmp.eq.s32.totalorder %s33, 0
      %p75 = por %p73, %p74
      %p76 = scmp.ne.s32.totalorder %s64, %s65
      %p77 = scmp.eq.s32.totalorder %s34, 1
      %p78 = por %p76, %p77
      %p80 = scmp.ne.s32.totalorder %s65, %s79
      %p81 = scmp.eq.s32.totalorder %s34, 0
      %p82 = por %p80, %p81
      %s84 = sadd.s32 %s83, 1
      %p87 = scmp.eq.s32.totalorder %s28, 1
      %p88 = scmp.ne.s32.totalorder %s83, %s85
      %p89 = scmp.eq.s32.totalorder %s28, 0
      %p90 = por %p88, %p89
      %p91 = scmp.ne.s32.totalorder %s83, %s85
      %p92 = scmp.eq.s32.totalorder %s33, 1
      %p93 = por %p91, %p92
      %p94 = scmp.ne.s32.totalorder %s85, %s86
      %p95 = scmp.eq.s32.totalorder %s33, 0
      %p96 = por %p94, %p95
      %p97 = scmp.ne.s32.totalorder %s85, %s86
      %p98 = scmp.eq.s32.totalorder %s34, 1
      %p99 = por %p97, %p98
      %p101 = scmp.ne.s32.totalorder %s86, %s100
      %p102 = scmp.eq.s32.totalorder %s34, 0
      %p103 = por %p101, %p102
      %s105 = sadd.s32 %s104, 1
      %p108 = scmp.eq.s32.totalorder %s28, 1
      %p109 = scmp.ne.s32.totalorder %s104, %s106
      %p110 = scmp.eq.s32.totalorder %s28, 0
      %p111 = por %p109, %p110
      %p112 = scmp.ne.s32.totalorder %s104, %s106
      %p113 = scmp.eq.s32.totalorder %s33, 1
      %p114 = por %p112, %p113
      %p115 = scmp.ne.s32.totalorder %s106, %s107
      %p116 = scmp.eq.s32.totalorder %s33, 0
      %p117 = por %p115, %p116
      %p118 = scmp.ne.s32.totalorder %s106, %s107
      %p119 = scmp.eq.s32.totalorder %s34, 1
      %p120 = por %p118, %p119
      %p122 = scmp.ne.s32.totalorder %s107, %s121
      %p123 = scmp.eq.s32.totalorder %s34, 0
      %p124 = por %p122, %p123
      %s126 = sadd.s32 %s125, 1
      %p129 = scmp.eq.s32.totalorder %s28, 1
      %p130 = scmp.ne.s32.totalorder %s125, %s127
      %p131 = scmp.eq.s32.totalorder %s28, 0
      %p132 = por %p130, %p131
      %p133 = scmp.ne.s32.totalorder %s125, %s127
      %p134 = scmp.eq.s32.totalorder %s33, 1
      %p135 = por %p133, %p134
      %p136 = scmp.ne.s32.totalorder %s127, %s128
      %p137 = scmp.eq.s32.totalorder %s33, 0
      %p138 = por %p136, %p137
      %p139 = scmp.ne.s32.totalorder %s127, %s128
      %p140 = scmp.eq.s32.totalorder %s34, 1
      %p141 = por %p139, %p140
      %p143 = scmp.ne.s32.totalorder %s128, %s142
      %p144 = scmp.eq.s32.totalorder %s34, 0
      %p145 = por %p143, %p144
      %s147 = sadd.s32 %s146, 1
      %p150 = scmp.eq.s32.totalorder %s28, 1
      %p151 = scmp.ne.s32.totalorder %s146, %s148
      %p152 = scmp.eq.s32.totalorder %s28, 0
      %p153 = por %p151, %p152
      %p154 = scmp.ne.s32.totalorder %s146, %s148
      %p155 = scmp.eq.s32.totalorder %s33, 1
      %p156 = por %p154, %p155
      %p157 = scmp.ne.s32.totalorder %s148, %s149
      %p158 = scmp.eq.s32.totalorder %s33, 0
      %p159 = por %p157, %p158
      %p160 = scmp.ne.s32.totalorder %s148, %s149
      %p161 = scmp.eq.s32.totalorder %s34, 1
      %p162 = por %p160, %p161
      %p164 = scmp.ne.s32.totalorder %s149, %s163
      %p165 = scmp.eq.s32.totalorder %s34, 0
      %p166 = por %p164, %p165
      %s168 = sadd.s32 %s167, 1
      %p171 = scmp.eq.s32.totalorder %s28, 1
      %p172 = scmp.ne.s32.totalorder %s167, %s169
      %p173 = scmp.eq.s32.totalorder %s28, 0
      %p174 = por %p172, %p173
      %p175 = scmp.ne.s32.totalorder %s167, %s169
      %p176 = scmp.eq.s32.totalorder %s33, 1
      %p177 = por %p175, %p176
      %p178 = scmp.ne.s32.totalorder %s169, %s170
      %p179 = scmp.eq.s32.totalorder %s33, 0
      %p180 = por %p178, %p179
      %p181 = scmp.ne.s32.totalorder %s169, %s170
      %p182 = scmp.eq.s32.totalorder %s34, 1
      %p183 = por %p181, %p182
      %p185 = scmp.ne.s32.totalorder %s170, %s184
      %p186 = scmp.eq.s32.totalorder %s34, 0
      %p187 = por %p185, %p186
      %s189 = sadd.s32 %s188, 1
      %p192 = scmp.eq.s32.totalorder %s28, 1
      %p193 = scmp.ne.s32.totalorder %s188, %s190
      %p194 = scmp.eq.s32.totalorder %s28, 0
      %p195 = por %p193, %p194
      %p196 = scmp.ne.s32.totalorder %s188, %s190
      %p197 = scmp.eq.s32.totalorder %s33, 1
      %p198 = por %p196, %p197
      %p199 = scmp.ne.s32.totalorder %s190, %s191
      %p200 = scmp.eq.s32.totalorder %s33, 0
      %p201 = por %p199, %p200
      %p202 = scmp.ne.s32.totalorder %s190, %s191
      %p203 = scmp.eq.s32.totalorder %s34, 1
      %p204 = por %p202, %p203
      %p206 = scmp.ne.s32.totalorder %s191, %s205
      %p207 = scmp.eq.s32.totalorder %s34, 0
      %p208 = por %p206, %p207
      %s210 = sadd.s32 %s209, 1
      %p213 = scmp.eq.s32.totalorder %s28, 1
      %p214 = scmp.ne.s32.totalorder %s209, %s211
      %p215 = scmp.eq.s32.totalorder %s28, 0
      %p216 = por %p214, %p215
      %p217 = scmp.ne.s32.totalorder %s209, %s211
      %p218 = scmp.eq.s32.totalorder %s33, 1
      %p219 = por %p217, %p218
      %p220 = scmp.ne.s32.totalorder %s211, %s212
      %p221 = scmp.eq.s32.totalorder %s33, 0
      %p222 = por %p220, %p221
      %p223 = scmp.ne.s32.totalorder %s211, %s212
      %p224 = scmp.eq.s32.totalorder %s34, 1
      %p225 = por %p223, %p224
      %p227 = scmp.ne.s32.totalorder %s212, %s226
      %p228 = scmp.eq.s32.totalorder %s34, 0
      %p229 = por %p227, %p228
      %s231 = sadd.s32 %s230, 1
      %p234 = scmp.eq.s32.totalorder %s28, 1
      %p235 = scmp.ne.s32.totalorder %s230, %s232
      %p236 = scmp.eq.s32.totalorder %s28, 0
      %p237 = por %p235, %p236
      %p238 = scmp.ne.s32.totalorder %s230, %s232
      %p239 = scmp.eq.s32.totalorder %s33, 1
      %p240 = por %p238, %p239
      %p241 = scmp.ne.s32.totalorder %s232, %s233
      %p242 = scmp.eq.s32.totalorder %s33, 0
      %p243 = por %p241, %p242
      %p244 = scmp.ne.s32.totalorder %s232, %s233
      %p245 = scmp.eq.s32.totalorder %s34, 1
      %p246 = por %p244, %p245
      %p248 = scmp.ne.s32.totalorder %s233, %s247
      %p249 = scmp.eq.s32.totalorder %s34, 0
      %p250 = por %p248, %p249
      %s252 = sadd.s32 %s251, 1
      %p255 = scmp.eq.s32.totalorder %s28, 1
      %p256 = scmp.ne.s32.totalorder %s251, %s253
      %p257 = scmp.eq.s32.totalorder %s28, 0
      %p258 = por %p256, %p257
      %p259 = scmp.ne.s32.totalorder %s251, %s253
      %p260 = scmp.eq.s32.totalorder %s33, 1
      %p261 = por %p259, %p260
      %p262 = scmp.ne.s32.totalorder %s253, %s254
      %p263 = scmp.eq.s32.totalorder %s33, 0
      %p264 = por %p262, %p263
      %p265 = scmp.ne.s32.totalorder %s253, %s254
      %p266 = scmp.eq.s32.totalorder %s34, 1
      %p267 = por %p265, %p266
      %p269 = scmp.ne.s32.totalorder %s254, %s268
      %p270 = scmp.eq.s32.totalorder %s34, 0
      %p271 = por %p269, %p270
      %s273 = sadd.s32 %s272, 1
      %p276 = scmp.eq.s32.totalorder %s28, 1
      %p277 = scmp.ne.s32.totalorder %s272, %s274
      %p278 = scmp.eq.s32.totalorder %s28, 0
      %p279 = por %p277, %p278
      %p280 = scmp.ne.s32.totalorder %s272, %s274
      %p281 = scmp.eq.s32.totalorder %s33, 1
      %p282 = por %p280, %p281
      %p283 = scmp.ne.s32.totalorder %s274, %s275
      %p284 = scmp.eq.s32.totalorder %s33, 0
      %p285 = por %p283, %p284
      %p286 = scmp.ne.s32.totalorder %s274, %s275
      %p287 = scmp.eq.s32.totalorder %s34, 1
      %p288 = por %p286, %p287
      %p290 = scmp.ne.s32.totalorder %s275, %s289
      %p291 = scmp.eq.s32.totalorder %s34, 0
      %p292 = por %p290, %p291
      %s294 = sadd.s32 %s293, 1
      %p297 = scmp.eq.s32.totalorder %s28, 1
      %p298 = scmp.ne.s32.totalorder %s293, %s295
      %p299 = scmp.eq.s32.totalorder %s28, 0
      %p300 = por %p298, %p299
      %p301 = scmp.ne.s32.totalorder %s293, %s295
      %p302 = scmp.eq.s32.totalorder %s33, 1
      %p303 = por %p301, %p302
      %p304 = scmp.ne.s32.totalorder %s295, %s296
      %p305 = scmp.eq.s32.totalorder %s33, 0
      %p306 = por %p304, %p305
      %p307 = scmp.ne.s32.totalorder %s295, %s296
      %p308 = scmp.eq.s32.totalorder %s34, 1
      %p309 = por %p307, %p308
      %p311 = scmp.ne.s32.totalorder %s296, %s310
      %p312 = scmp.eq.s32.totalorder %s34, 0
      %p313 = por %p311, %p312
      %s315 = sadd.s32 %s314, 1
      %p318 = scmp.eq.s32.totalorder %s28, 1
      %p319 = scmp.ne.s32.totalorder %s314, %s316
      %p320 = scmp.eq.s32.totalorder %s28, 0
      %p321 = por %p319, %p320
      %p322 = scmp.ne.s32.totalorder %s314, %s316
      %p323 = scmp.eq.s32.totalorder %s33, 1
      %p324 = por %p322, %p323
      %p325 = scmp.ne.s32.totalorder %s316, %s317
      %p326 = scmp.eq.s32.totalorder %s33, 0
      %p327 = por %p325, %p326
      %p328 = scmp.ne.s32.totalorder %s316, %s317
      %p329 = scmp.eq.s32.totalorder %s34, 1
      %p330 = por %p328, %p329
      %p332 = scmp.ne.s32.totalorder %s317, %s331
      %p333 = scmp.eq.s32.totalorder %s34, 0
      %p334 = por %p332, %p333
      %s336 = sadd.s32 %s335, 1
      %p339 = scmp.eq.s32.totalorder %s28, 1
      %p340 = scmp.ne.s32.totalorder %s335, %s337
      %p341 = scmp.eq.s32.totalorder %s28, 0
      %p342 = por %p340, %p341
      %p343 = scmp.ne.s32.totalorder %s335, %s337
      %p344 = scmp.eq.s32.totalorder %s33, 1
      %p345 = por %p343, %p344
      %p346 = scmp.ne.s32.totalorder %s337, %s338
      %p347 = scmp.eq.s32.totalorder %s33, 0
      %p348 = por %p346, %p347
      %p349 = scmp.ne.s32.totalorder %s337, %s338
      %p350 = scmp.eq.s32.totalorder %s34, 1
      %p351 = por %p349, %p350
      %p353 = scmp.ne.s32.totalorder %s338, %s352
      %p354 = scmp.eq.s32.totalorder %s34, 0
      %p355 = por %p353, %p354
      %s357 = sadd.s32 %s356, 1
      %p360 = scmp.eq.s32.totalorder %s28, 1
      %p361 = scmp.ne.s32.totalorder %s356, %s358
      %p362 = scmp.eq.s32.totalorder %s28, 0
      %p363 = por %p361, %p362
      %p364 = scmp.ne.s32.totalorder %s356, %s358
      %p365 = scmp.eq.s32.totalorder %s33, 1
      %p366 = por %p364, %p365
      %p367 = scmp.ne.s32.totalorder %s358, %s359
      %p368 = scmp.eq.s32.totalorder %s33, 0
      %p369 = por %p367, %p368
      %p370 = scmp.ne.s32.totalorder %s358, %s359
      %p371 = scmp.eq.s32.totalorder %s34, 1
      %p372 = por %p370, %p371
      %p374 = scmp.ne.s32.totalorder %s359, %s373
      %p375 = scmp.eq.s32.totalorder %s34, 0
      %p376 = por %p374, %p375
      %s378 = sadd.s32 %s377, 1
      %p381 = scmp.eq.s32.totalorder %s28, 1
      %p382 = scmp.ne.s32.totalorder %s377, %s379
      %p383 = scmp.eq.s32.totalorder %s28, 0
      %p384 = por %p382, %p383
      %p385 = scmp.ne.s32.totalorder %s377, %s379
      %p386 = scmp.eq.s32.totalorder %s33, 1
      %p387 = por %p385, %p386
      %p388 = scmp.ne.s32.totalorder %s379, %s380
      %p389 = scmp.eq.s32.totalorder %s33, 0
      %p390 = por %p388, %p389
      %p391 = scmp.ne.s32.totalorder %s379, %s380
      %p392 = scmp.eq.s32.totalorder %s34, 1
      %p393 = por %p391, %p392
      %p395 = scmp.ne.s32.totalorder %s380, %s394
      %p396 = scmp.eq.s32.totalorder %s34, 0
      %p397 = por %p395, %p396
      %p398 = scmp.le.s32.totalorder 1, %s28
      %p399 = scmp.lt.s32.totalorder %s28, 3
      %p400 = pnand %p398, %p399
      %p401 = pneg %p400
      // Predicated region
      $region9: #{tpu_custom_call.1} parent=5 // pred_check
        _
      $region10: #{tpu_custom_call.1} parent=5 // pred_check_branch
        %403 = sbr.rel (%p400) target = $region12
      $region11: #{tpu_custom_call.1} parent=5 // pred_region
        %s404 = ssub.s32 %s28, 1
        // Predicated region
        $region13: #{tpu_custom_call.1} parent=11 // pred_check
          %p405 = pneg %p75
        $region14: #{tpu_custom_call.1} parent=11 // pred_check_branch
          %407 = sbr.rel (%p405) target = $region16
        $region15: #{tpu_custom_call.1} parent=11 // pred_region
          _
        $region16: #{tpu_custom_call.1} parent=11 // pred_fallthru
          _
        // Predicated region
        $region17: #{tpu_custom_call.1} parent=11 // pred_check
          %p408 = pneg %p96
        $region18: #{tpu_custom_call.1} parent=11 // pred_check_branch
          %410 = sbr.rel (%p408) target = $region20
        $region19: #{tpu_custom_call.1} parent=11 // pred_region
          %s412 = ssub.s32 256, 256
          %413 = vsyncadd [#allocation7], %s412
          %s414 = sshll.u32 [#allocation6], 4
          %s415 = int_to_ptr.vmem [resolvable:$true] %s414
          %420 = dma.hbm_to_vmem [thread:$0]  %s2, 256, %s415, [#allocation7], 128, 128, 8
        $region20: #{tpu_custom_call.1} parent=11 // pred_fallthru
          _
        // Predicated region
        $region21: #{tpu_custom_call.1} parent=11 // pred_check
          %p421 = pneg %p117
        $region22: #{tpu_custom_call.1} parent=11 // pred_check_branch
          %423 = sbr.rel (%p421) target = $region24
        $region23: #{tpu_custom_call.1} parent=11 // pred_region
          _
        $region24: #{tpu_custom_call.1} parent=11 // pred_fallthru
          _
        // Predicated region
        $region25: #{tpu_custom_call.1} parent=11 // pred_check
          %p424 = pneg %p138
        $region26: #{tpu_custom_call.1} parent=11 // pred_check_branch
          %426 = sbr.rel (%p424) target = $region28
        $region27: #{tpu_custom_call.1} parent=11 // pred_region
          %s428 = ssub.s32 6144, 6144
          %429 = vsyncadd [#allocation10], %s428
          %s430 = sshll.u32 [#allocation9], 4
          %s431 = int_to_ptr.vmem [resolvable:$true] %s430
          %436 = dma.hbm_to_vmem [thread:$0]  %s4, 6144, %s431, [#allocation10], 384, 384, 24
        $region28: #{tpu_custom_call.1} parent=11 // pred_fallthru
          _
        // Predicated region
        $region29: #{tpu_custom_call.1} parent=11 // pred_check
          %p437 = pneg %p159
        $region30: #{tpu_custom_call.1} parent=11 // pred_check_branch
          %439 = sbr.rel (%p437) target = $region32
        $region31: #{tpu_custom_call.1} parent=11 // pred_region
          _
        $region32: #{tpu_custom_call.1} parent=11 // pred_fallthru
          _
        // Predicated region
        $region33: #{tpu_custom_call.1} parent=11 // pred_check
          %p440 = pneg %p180
        $region34: #{tpu_custom_call.1} parent=11 // pred_check_branch
          %442 = sbr.rel (%p440) target = $region36
        $region35: #{tpu_custom_call.1} parent=11 // pred_region
          _
        $region36: #{tpu_custom_call.1} parent=11 // pred_fallthru
          _
        // Predicated region
        $region37: #{tpu_custom_call.1} parent=11 // pred_check
          %p443 = pneg %p201
        $region38: #{tpu_custom_call.1} parent=11 // pred_check_branch
          %445 = sbr.rel (%p443) target = $region40
        $region39: #{tpu_custom_call.1} parent=11 // pred_region
          _
        $region40: #{tpu_custom_call.1} parent=11 // pred_fallthru
          _
        // Predicated region
        $region41: #{tpu_custom_call.1} parent=11 // pred_check
          %p446 = pneg %p222
        $region42: #{tpu_custom_call.1} parent=11 // pred_check_branch
          %448 = sbr.rel (%p446) target = $region44
        $region43: #{tpu_custom_call.1} parent=11 // pred_region
          _
        $region44: #{tpu_custom_call.1} parent=11 // pred_fallthru
          _
        // Predicated region
        $region45: #{tpu_custom_call.1} parent=11 // pred_check
          %p449 = pneg %p243
        $region46: #{tpu_custom_call.1} parent=11 // pred_check_branch
          %451 = sbr.rel (%p449) target = $region48
        $region47: #{tpu_custom_call.1} parent=11 // pred_region
          _
        $region48: #{tpu_custom_call.1} parent=11 // pred_fallthru
          _
        // Predicated region
        $region49: #{tpu_custom_call.1} parent=11 // pred_check
          %p452 = pneg %p264
        $region50: #{tpu_custom_call.1} parent=11 // pred_check_branch
          %454 = sbr.rel (%p452) target = $region52
        $region51: #{tpu_custom_call.1} parent=11 // pred_region
          _
        $region52: #{tpu_custom_call.1} parent=11 // pred_fallthru
          _
        // Predicated region
        $region53: #{tpu_custom_call.1} parent=11 // pred_check
          %p455 = pneg %p285
        $region54: #{tpu_custom_call.1} parent=11 // pred_check_branch
          %457 = sbr.rel (%p455) target = $region56
        $region55: #{tpu_custom_call.1} parent=11 // pred_region
          _
        $region56: #{tpu_custom_call.1} parent=11 // pred_fallthru
          _
        // Predicated region
        $region57: #{tpu_custom_call.1} parent=11 // pred_check
          %p458 = pneg %p306
        $region58: #{tpu_custom_call.1} parent=11 // pred_check_branch
          %460 = sbr.rel (%p458) target = $region60
        $region59: #{tpu_custom_call.1} parent=11 // pred_region
          %s462 = ssub.s32 2048, 2048
          %463 = vsyncadd [#allocation10], %s462
          %s464 = sshll.u32 [#allocation11], 4
          %s465 = int_to_ptr.vmem [resolvable:$true] %s464
          %470 = dma.hbm_to_vmem [thread:$0]  %s12, 2048, %s465, [#allocation10], 128, 128, 8
        $region60: #{tpu_custom_call.1} parent=11 // pred_fallthru
          _
        // Predicated region
        $region61: #{tpu_custom_call.1} parent=11 // pred_check
          %p471 = pneg %p327
        $region62: #{tpu_custom_call.1} parent=11 // pred_check_branch
          %473 = sbr.rel (%p471) target = $region64
        $region63: #{tpu_custom_call.1} parent=11 // pred_region
          %s475 = ssub.s32 2048, 2048
          %476 = vsyncadd [#allocation13], %s475
          %s477 = sshll.u32 [#allocation12], 4
          %s478 = int_to_ptr.vmem [resolvable:$true] %s477
          %483 = dma.hbm_to_vmem [thread:$0]  %s13, 2048, %s478, [#allocation13], 128, 128, 8
        $region64: #{tpu_custom_call.1} parent=11 // pred_fallthru
          _
        // Predicated region
        $region65: #{tpu_custom_call.1} parent=11 // pred_check
          %p484 = pneg %p348
        $region66: #{tpu_custom_call.1} parent=11 // pred_check_branch
          %486 = sbr.rel (%p484) target = $region68
        $region67: #{tpu_custom_call.1} parent=11 // pred_region
          _
        $region68: #{tpu_custom_call.1} parent=11 // pred_fallthru
          _
      $region12: #{tpu_custom_call.1} parent=5 // pred_fallthru
        _
      %p487 = scmp.lt.s32.totalorder %s28, 2
      // Predicated region
      $region69: #{tpu_custom_call.1} parent=5 // pred_check
        %p488 = pneg %p487
      $region70: #{tpu_custom_call.1} parent=5 // pred_check_branch
        %490 = sbr.rel (%p488) target = $region72
      $region71: #{tpu_custom_call.1} parent=5 // pred_region
        // Predicated region
        $region73: #{tpu_custom_call.1} parent=71 // pred_check
          %p491 = pneg %p48
        $region74: #{tpu_custom_call.1} parent=71 // pred_check_branch
          %493 = sbr.rel (%p491) target = $region76
        $region75: #{tpu_custom_call.1} parent=71 // pred_region
          %s494 = smul.u32 16, %s28
          %p495 = scmp.lt.s32.totalorder %s494, 31
          %s496 = scalar_select %p495, %s494, 31
          %s497 = smul.addr %s496, 8
          %s498 = scalar_lea.vmem %s0, %s497
          %s499 = smul.u32 16, %s28
        $region76: #{tpu_custom_call.1} parent=71 // pred_fallthru
          _
      $region72: #{tpu_custom_call.1} parent=5 // pred_fallthru
        _
      %p500 = scmp.le.s32.totalorder 1, %s28
      %p501 = scmp.lt.s32.totalorder %s28, 3
      %p502 = pnand %p500, %p501
      %p503 = pneg %p502
      // Predicated region
      $region77: #{tpu_custom_call.1} parent=5 // pred_check
        _
      $region78: #{tpu_custom_call.1} parent=5 // pred_check_branch
        %505 = sbr.rel (%p502) target = $region80
      $region79: #{tpu_custom_call.1} parent=5 // pred_region
        %s506 = ssub.s32 %s28, 1
        // Predicated region
        $region81: #{tpu_custom_call.1} parent=79 // pred_check
          %p507 = pneg %p96
        $region82: #{tpu_custom_call.1} parent=79 // pred_check_branch
          %509 = sbr.rel (%p507) target = $region84
        $region83: #{tpu_custom_call.1} parent=79 // pred_region
          %510 = dma.done [#allocation7], 256
        $region84: #{tpu_custom_call.1} parent=79 // pred_fallthru
          _
        // Predicated region
        $region85: #{tpu_custom_call.1} parent=79 // pred_check
          %p511 = pneg %p138
        $region86: #{tpu_custom_call.1} parent=79 // pred_check_branch
          %513 = sbr.rel (%p511) target = $region88
        $region87: #{tpu_custom_call.1} parent=79 // pred_region
          %514 = dma.done [#allocation10], 6144
        $region88: #{tpu_custom_call.1} parent=79 // pred_fallthru
          _
        // Predicated region
        $region89: #{tpu_custom_call.1} parent=79 // pred_check
          %p515 = pneg %p306
        $region90: #{tpu_custom_call.1} parent=79 // pred_check_branch
          %517 = sbr.rel (%p515) target = $region92
        $region91: #{tpu_custom_call.1} parent=79 // pred_region
          %518 = dma.done [#allocation10], 2048
        $region92: #{tpu_custom_call.1} parent=79 // pred_fallthru
          _
        // Predicated region
        $region93: #{tpu_custom_call.1} parent=79 // pred_check
          %p519 = pneg %p327
        $region94: #{tpu_custom_call.1} parent=79 // pred_check_branch
          %521 = sbr.rel (%p519) target = $region96
        $region95: #{tpu_custom_call.1} parent=79 // pred_region
          %522 = dma.done [#allocation13], 2048
        $region96: #{tpu_custom_call.1} parent=79 // pred_fallthru
          _
        %s523 = smul.u32 16, %s33
        %p524 = scmp.lt.s32.totalorder %s523, 31
        %s525 = scalar_select %p524, %s523, 31
        %s526 = smul.addr %s525, 8
        %s527 = scalar_lea.vmem %s0, %s526
        %p528 = pneg %p54
        %p529 = pneg %p51
        %p530 = pneg %p75
        %p531 = pneg %p72
        %p532 = pneg %p96
        %p533 = pneg %p93
        %p534 = pneg %p117
        %p535 = pneg %p114
        %p536 = pneg %p138
        %p537 = pneg %p135
        %p538 = pneg %p159
        %p539 = pneg %p156
        %p540 = pneg %p180
        %p541 = pneg %p177
        %p542 = pneg %p201
        %p543 = pneg %p198
        %p544 = pneg %p222
        %p545 = pneg %p219
        %p546 = pneg %p243
        %p547 = pneg %p240
        %p548 = pneg %p264
        %p549 = pneg %p261
        %p550 = pneg %p285
        %p551 = pneg %p282
        %p552 = pneg %p306
        %p553 = pneg %p303
        %p554 = pneg %p327
        %p555 = pneg %p324
        %p556 = pneg %p348
        %p557 = pneg %p345
        %p558 = pneg %p369
        %p559 = pneg %p366
        %p560 = pneg %p390
        %p561 = pneg %p387
        %s562 = smul.u32 16, %s33
        %p563 = scmp.lt.s32.totalorder %s562, 31
        %s564 = scalar_select %p563, %s562, 31
        %s565 = smul.addr %s564, 8
        %s566 = scalar_lea.vmem %s0, %s565
        %s567 = smul.u32 16, %s33
        %p568 = scmp.eq.s32.totalorder %s33, 0
        // Predicated region
        $region97: #{tpu_custom_call.1} parent=79 // pred_check
          %p569 = pneg %p568
        $region98: #{tpu_custom_call.1} parent=79 // pred_check_branch
          %571 = sbr.rel (%p569) target = $region100
        $region99: #{tpu_custom_call.1} parent=79 // pred_region
          %v572 = vld [vmem:[%s1] sm:$0xff]
          %v573 = vld [vmem:[%s1 + $0x8] sm:$0xff]
          %v574 = vld [vmem:[#allocation6] sm:$0xff]
          %v575 = vld [vmem:[#allocation6 + $0x8] sm:$0xff]
          %v576 = vld [vmem:[#allocation9] sm:$0xff]
          %v577 = vld [vmem:[#allocation9 + $0x8] sm:$0xff]
          %v578 = vld [vmem:[#allocation9 + $0x10] sm:$0xff]
          %v579 = vld [vmem:[#allocation9 + $0x18] sm:$0xff]
          %v580 = vld [vmem:[#allocation9 + $0x20] sm:$0xff]
          %v581 = vld [vmem:[#allocation9 + $0x28] sm:$0xff]
          %v582 = vld [vmem:[#allocation9 + $0x30] sm:$0xff]
          %v583 = vld [vmem:[#allocation9 + $0x38] sm:$0xff]
          %v584 = vld [vmem:[#allocation9 + $0x40] sm:$0xff]
          %v585 = vld [vmem:[#allocation9 + $0x48] sm:$0xff]
          %v586 = vld [vmem:[#allocation9 + $0x50] sm:$0xff]
          %v587 = vld [vmem:[#allocation9 + $0x58] sm:$0xff]
          %v588 = vld [vmem:[#allocation9 + $0x60] sm:$0xff]
          %v589 = vld [vmem:[#allocation9 + $0x68] sm:$0xff]
          %v590 = vld [vmem:[#allocation9 + $0x70] sm:$0xff]
          %v591 = vld [vmem:[#allocation9 + $0x78] sm:$0xff]
          %v592 = vld [vmem:[#allocation9 + $0x80] sm:$0xff]
          %v593 = vld [vmem:[#allocation9 + $0x88] sm:$0xff]
          %v594 = vld [vmem:[#allocation9 + $0x90] sm:$0xff]
          %v595 = vld [vmem:[#allocation9 + $0x98] sm:$0xff]
          %v596 = vld [vmem:[#allocation9 + $0xa0] sm:$0xff]
          %v597 = vld [vmem:[#allocation9 + $0xa8] sm:$0xff]
          %v598 = vld [vmem:[#allocation9 + $0xb0] sm:$0xff]
          %v599 = vld [vmem:[#allocation9 + $0xb8] sm:$0xff]
          %v600 = vld [vmem:[#allocation9 + $0xc0] sm:$0xff]
          %v601 = vld [vmem:[#allocation9 + $0xc8] sm:$0xff]
          %v602 = vld [vmem:[#allocation9 + $0xd0] sm:$0xff]
          %v603 = vld [vmem:[#allocation9 + $0xd8] sm:$0xff]
          %v604 = vld [vmem:[#allocation9 + $0xe0] sm:$0xff]
          %v605 = vld [vmem:[#allocation9 + $0xe8] sm:$0xff]
          %v606 = vld [vmem:[#allocation9 + $0xf0] sm:$0xff]
          %v607 = vld [vmem:[#allocation9 + $0xf8] sm:$0xff]
          %v608 = vld [vmem:[#allocation9 + $0x100] sm:$0xff]
          %v609 = vld [vmem:[#allocation9 + $0x108] sm:$0xff]
          %v610 = vld [vmem:[#allocation9 + $0x110] sm:$0xff]
          %v611 = vld [vmem:[#allocation9 + $0x118] sm:$0xff]
          %v612 = vld [vmem:[#allocation9 + $0x120] sm:$0xff]
          %v613 = vld [vmem:[#allocation9 + $0x128] sm:$0xff]
          %v614 = vld [vmem:[#allocation9 + $0x130] sm:$0xff]
          %v615 = vld [vmem:[#allocation9 + $0x138] sm:$0xff]
          %v616 = vld [vmem:[#allocation9 + $0x140] sm:$0xff]
          %v617 = vld [vmem:[#allocation9 + $0x148] sm:$0xff]
          %v618 = vld [vmem:[#allocation9 + $0x150] sm:$0xff]
          %v619 = vld [vmem:[#allocation9 + $0x158] sm:$0xff]
          %v620 = vld [vmem:[#allocation9 + $0x160] sm:$0xff]
          %v621 = vld [vmem:[#allocation9 + $0x168] sm:$0xff]
          %v622 = vld [vmem:[#allocation9 + $0x170] sm:$0xff]
          %v623 = vld [vmem:[#allocation9 + $0x178] sm:$0xff]
          %v624 = vld [vmem:[%s5] sm:$0x7]
          %v626 = vlaneseq
          %v627 = vshrl.u32 %v626, 7
          %v628 = vsub.s32 0, %v627
          %v629 = vrot.slane %v624, %v628
          %v630 = vlaneseq
          %v631 = vshrl.u32 %v630, 7
          %v632 = vsub.s32 1, %v631
          %v633 = vrot.slane %v624, %v632
          %v634 = vlaneseq
          %v635 = vshrl.u32 %v634, 7
          %v636 = vsub.s32 2, %v635
          %v637 = vrot.slane %v624, %v636
          %641 = vmatprep.subr.mxu0 %v577
          %642 = vmatpush1.msra.mxu0 %v576
          %643 = vmatprep.subr.mxu0 %v580
          %644 = vmatpush1.msra.mxu0 %v579
          %645 = vmatprep.subr.mxu0 %v583
          %646 = vmatpush1.msra.mxu0 %v582
          %647 = vmatprep.subr.mxu0 %v586
          %648 = vmatpush1.msra.mxu0 %v585
          %649 = vmatprep.subr.mxu0 %v589
          %650 = vmatpush1.msra.mxu0 %v588
          %651 = vmatprep.subr.mxu0 %v592
          %652 = vmatpush1.msra.mxu0 %v591
          %653 = vmatprep.subr.mxu0 %v595
          %654 = vmatpush1.msra.mxu0 %v594
          %655 = vmatprep.subr.mxu0 %v598
          %656 = vmatpush1.msra.mxu0 %v597
          %657 = vmatprep.subr.mxu0 %v601
          %658 = vmatpush1.msra.mxu0 %v600
          %659 = vmatprep.subr.mxu0 %v604
          %660 = vmatpush1.msra.mxu0 %v603
          %661 = vmatprep.subr.mxu0 %v607
          %662 = vmatpush1.msra.mxu0 %v606
          %663 = vmatprep.subr.mxu0 %v610
          %664 = vmatpush1.msra.mxu0 %v609
          %665 = vmatprep.subr.mxu0 %v613
          %666 = vmatpush1.msra.mxu0 %v612
          %667 = vmatprep.subr.mxu0 %v616
          %668 = vmatpush1.msra.mxu0 %v615
          %669 = vmatprep.subr.mxu0 %v619
          %670 = vmatpush1.msra.mxu0 %v618
          %671 = vmatprep.subr.mxu0 %v622
          %672 = vmatpush1.msra.mxu0 %v621
          %673 = vmatprep.subr.mxu0 0.0
          %674 = vmatpush1.msra.mxu0 0.0
          %675 = vmatprep.subr.mxu0 0.0
          %676 = vmatpush1.msra.mxu0 0.0
          %677 = vmatprep.subr.mxu0 0.0
          %678 = vmatpush1.msra.mxu0 0.0
          %679 = vmatprep.subr.mxu0 0.0
          %680 = vmatpush1.msra.mxu0 0.0
          %681 = vmatprep.subr.mxu0 0.0
          %682 = vmatpush1.msra.mxu0 0.0
          %683 = vmatprep.subr.mxu0 0.0
          %684 = vmatpush1.msra.mxu0 0.0
          %685 = vmatprep.subr.mxu0 0.0
          %686 = vmatpush1.msra.mxu0 0.0
          %687 = vmatprep.subr.mxu0 0.0
          %688 = vmatpush1.msra.mxu0 0.0
          %689 = vmatprep.subr.mxu0 0.0
          %690 = vmatpush1.msra.mxu0 0.0
          %691 = vmatprep.subr.mxu0 0.0
          %692 = vmatpush1.msra.mxu0 0.0
          %693 = vmatprep.subr.mxu0 0.0
          %694 = vmatpush1.msra.mxu0 0.0
          %695 = vmatprep.subr.mxu0 0.0
          %696 = vmatpush1.msra.mxu0 0.0
          %697 = vmatprep.subr.mxu0 0.0
          %698 = vmatpush1.msra.mxu0 0.0
          %699 = vmatprep.subr.mxu0 0.0
          %700 = vmatpush1.msra.mxu0 0.0
          %701 = vmatprep.subr.mxu0 0.0
          %702 = vmatpush1.msra.mxu0 0.0
          %703 = vmatprep.subr.mxu0 0.0
          %704 = vmatpush1.msra.mxu0 0.0
          %705 = vmatprep.mubr.f32.mxu0 0.0
          %706 = vmatmul.mubr.f32.gmra.mrb[0].mxu0 %v572
          %v707 = vpop.f32.mrb[0].mxu0
          %v708 = vadd.f32 %v629, %v707
          %v709 = vpop.f32.mrb[0].mxu0
          %v710 = vadd.f32 %v633, %v709
          %711 = vmatprep.mubr.f32.mxu0 0.0
          %712 = vmatmul.mubr.f32.gmra.mrb[0].mxu0 %v573
          %v713 = vpop.f32.mrb[0].mxu0
          %v714 = vadd.f32 %v629, %v713
          %v715 = vpop.f32.mrb[0].mxu0
          %v716 = vadd.f32 %v633, %v715
          %717 = vdwg.mxu0
          %718 = vmatprep.subr.mxu0 0.0
          %719 = vmatpush1.msra.mxu0 %v578
          %720 = vmatprep.subr.mxu0 0.0
          %721 = vmatpush1.msra.mxu0 %v581
          %722 = vmatprep.subr.mxu0 0.0
          %723 = vmatpush1.msra.mxu0 %v584
          %724 = vmatprep.subr.mxu0 0.0
          %725 = vmatpush1.msra.mxu0 %v587
          %726 = vmatprep.subr.mxu0 0.0
          %727 = vmatpush1.msra.mxu0 %v590
          %728 = vmatprep.subr.mxu0 0.0
          %729 = vmatpush1.msra.mxu0 %v593
          %730 = vmatprep.subr.mxu0 0.0
          %731 = vmatpush1.msra.mxu0 %v596
          %732 = vmatprep.subr.mxu0 0.0
          %733 = vmatpush1.msra.mxu0 %v599
          %734 = vmatprep.subr.mxu0 0.0
          %735 = vmatpush1.msra.mxu0 %v602
          %736 = vmatprep.subr.mxu0 0.0
          %737 = vmatpush1.msra.mxu0 %v605
          %738 = vmatprep.subr.mxu0 0.0
          %739 = vmatpush1.msra.mxu0 %v608
          %740 = vmatprep.subr.mxu0 0.0
          %741 = vmatpush1.msra.mxu0 %v611
          %742 = vmatprep.subr.mxu0 0.0
          %743 = vmatpush1.msra.mxu0 %v614
          %744 = vmatprep.subr.mxu0 0.0
          %745 = vmatpush1.msra.mxu0 %v617
          %746 = vmatprep.subr.mxu0 0.0
          %747 = vmatpush1.msra.mxu0 %v620
          %748 = vmatprep.subr.mxu0 0.0
          %749 = vmatpush1.msra.mxu0 %v623
          %750 = vmatprep.subr.mxu0 0.0
          %751 = vmatpush1.msra.mxu0 0.0
          %752 = vmatprep.subr.mxu0 0.0
          %753 = vmatpush1.msra.mxu0 0.0
          %754 = vmatprep.subr.mxu0 0.0
          %755 = vmatpush1.msra.mxu0 0.0
          %756 = vmatprep.subr.mxu0 0.0
          %757 = vmatpush1.msra.mxu0 0.0
          %758 = vmatprep.subr.mxu0 0.0
          %759 = vmatpush1.msra.mxu0 0.0
          %760 = vmatprep.subr.mxu0 0.0
          %761 = vmatpush1.msra.mxu0 0.0
          %762 = vmatprep.subr.mxu0 0.0
          %763 = vmatpush1.msra.mxu0 0.0
          %764 = vmatprep.subr.mxu0 0.0
          %765 = vmatpush1.msra.mxu0 0.0
          %766 = vmatprep.subr.mxu0 0.0
          %767 = vmatpush1.msra.mxu0 0.0
          %768 = vmatprep.subr.mxu0 0.0
          %769 = vmatpush1.msra.mxu0 0.0
          %770 = vmatprep.subr.mxu0 0.0
          %771 = vmatpush1.msra.mxu0 0.0
          %772 = vmatprep.subr.mxu0 0.0
          %773 = vmatpush1.msra.mxu0 0.0
          %774 = vmatprep.subr.mxu0 0.0
          %775 = vmatpush1.msra.mxu0 0.0
          %776 = vmatprep.subr.mxu0 0.0
          %777 = vmatpush1.msra.mxu0 0.0
          %778 = vmatprep.subr.mxu0 0.0
          %779 = vmatpush1.msra.mxu0 0.0
          %780 = vmatprep.subr.mxu0 0.0
          %781 = vmatpush1.msra.mxu0 0.0
          %782 = vmatprep.mubr.f32.mxu0 0.0
          %783 = vmatmul.mubr.f32.gmra.mrb[0].mxu0 %v572
          %v784 = vpop.f32.mrb[0].mxu0
          %v785 = vadd.f32 %v637, %v784
          %v786 = vpop.f32.mrb[0].mxu0
          %787 = vmatprep.mubr.f32.mxu0 0.0
          %788 = vmatmul.mubr.f32.gmra.mrb[0].mxu0 %v573
          %v789 = vpop.f32.mrb[0].mxu0
          %v790 = vadd.f32 %v637, %v789
          %v791 = vpop.f32.mrb[0].mxu0
          %792 = vdwg.mxu0
          %793 = vst [vmem:[#allocation2] sm:$0xff] %v708
          %794 = vst [vmem:[#allocation2 + $0x8] sm:$0xff] %v574
          %795 = vst [vmem:[#allocation2 + $0x10] sm:$0xff] %v714
          %796 = vst [vmem:[#allocation2 + $0x18] sm:$0xff] %v575
          %v797 = vsub.f32 0.0, %v574
          %v798 = vsub.f32 0.0, %v575
          %799 = vst [vmem:[#allocation3] sm:$0xff] %v710
          %800 = vst [vmem:[#allocation3 + $0x8] sm:$0xff] %v797
          %801 = vst [vmem:[#allocation3 + $0x10] sm:$0xff] %v716
          %802 = vst [vmem:[#allocation3 + $0x18] sm:$0xff] %v798
          %803 = vst [vmem:[#allocation4] sm:$0xff] %v785
          %804 = vst [vmem:[#allocation4 + $0x8] sm:$0xff] %v790
          %805 = vst [vmem:[#allocation5] sm:$0xff] 0.0
          %806 = vst [vmem:[#allocation5 + $0x8] sm:$0xff] 0.0
          %807 = vst [vmem:[#allocation5 + $0x10] sm:$0xff] 0.0
          %808 = vst [vmem:[#allocation5 + $0x18] sm:$0xff] 0.0
        $region100: #{tpu_custom_call.1} parent=79 // pred_fallthru
          _
        %v809 = vlaneseq
        %v810 = vand.u32 %v809, 127
        %v811 = vld [vmem:[%s566] sm:$0xff]
        %v812 = vld [vmem:[%s566 + $0x8] sm:$0xff]
        %v813 = vld [vmem:[%s566 + $0x10] sm:$0xff]
        %v814 = vld [vmem:[%s566 + $0x18] sm:$0xff]
        %v815 = vld [vmem:[%s566 + $0x20] sm:$0xff]
        %v816 = vld [vmem:[%s566 + $0x28] sm:$0xff]
        %v817 = vld [vmem:[%s566 + $0x30] sm:$0xff]
        %v818 = vld [vmem:[%s566 + $0x38] sm:$0xff]
        %v819 = vld [vmem:[%s566 + $0x40] sm:$0xff]
        %v820 = vld [vmem:[%s566 + $0x48] sm:$0xff]
        %v821 = vld [vmem:[%s566 + $0x50] sm:$0xff]
        %v822 = vld [vmem:[%s566 + $0x58] sm:$0xff]
        %v823 = vld [vmem:[%s566 + $0x60] sm:$0xff]
        %v824 = vld [vmem:[%s566 + $0x68] sm:$0xff]
        %v825 = vld [vmem:[%s566 + $0x70] sm:$0xff]
        %v826 = vld [vmem:[%s566 + $0x78] sm:$0xff]
        %827 = vset.pattern.permute.xlu0 0
        %828 = vperm.xlu0 %827, %v811
        %v829 = vpop.permute.xlu0 %828
        %830 = vset.pattern.permute.xlu0 0
        %831 = vperm.xlu0 %830, %v812
        %v832 = vpop.permute.xlu0 %831
        %833 = vset.pattern.permute.xlu0 0
        %834 = vperm.xlu0 %833, %v813
        %v835 = vpop.permute.xlu0 %834
        %836 = vset.pattern.permute.xlu0 0
        %837 = vperm.xlu0 %836, %v814
        %v838 = vpop.permute.xlu0 %837
        %839 = vset.pattern.permute.xlu0 0
        %840 = vperm.xlu0 %839, %v815
        %v841 = vpop.permute.xlu0 %840
        %842 = vset.pattern.permute.xlu0 0
        %843 = vperm.xlu0 %842, %v816
        %v844 = vpop.permute.xlu0 %843
        %845 = vset.pattern.permute.xlu0 0
        %846 = vperm.xlu0 %845, %v817
        %v847 = vpop.permute.xlu0 %846
        %848 = vset.pattern.permute.xlu0 0
        %849 = vperm.xlu0 %848, %v818
        %v850 = vpop.permute.xlu0 %849
        %851 = vset.pattern.permute.xlu0 0
        %852 = vperm.xlu0 %851, %v819
        %v853 = vpop.permute.xlu0 %852
        %854 = vset.pattern.permute.xlu0 0
        %855 = vperm.xlu0 %854, %v820
        %v856 = vpop.permute.xlu0 %855
        %857 = vset.pattern.permute.xlu0 0
        %858 = vperm.xlu0 %857, %v821
        %v859 = vpop.permute.xlu0 %858
        %860 = vset.pattern.permute.xlu0 0
        %861 = vperm.xlu0 %860, %v822
        %v862 = vpop.permute.xlu0 %861
        %863 = vset.pattern.permute.xlu0 0
        %864 = vperm.xlu0 %863, %v823
        %v865 = vpop.permute.xlu0 %864
        %866 = vset.pattern.permute.xlu0 0
        %867 = vperm.xlu0 %866, %v824
        %v868 = vpop.permute.xlu0 %867
        %869 = vset.pattern.permute.xlu0 0
        %870 = vperm.xlu0 %869, %v825
        %v871 = vpop.permute.xlu0 %870
        %872 = vset.pattern.permute.xlu0 0
        %873 = vperm.xlu0 %872, %v826
        %v874 = vpop.permute.xlu0 %873
        %vm875 = vcmp.eq.s32.totalorder %v829, %v810
        %vm876 = vcmp.eq.s32.totalorder %v832, %v810
        %vm877 = vcmp.eq.s32.totalorder %v835, %v810
        %vm878 = vcmp.eq.s32.totalorder %v838, %v810
        %vm879 = vcmp.eq.s32.totalorder %v841, %v810
        %vm880 = vcmp.eq.s32.totalorder %v844, %v810
        %vm881 = vcmp.eq.s32.totalorder %v847, %v810
        %vm882 = vcmp.eq.s32.totalorder %v850, %v810
        %vm883 = vcmp.eq.s32.totalorder %v853, %v810
        %vm884 = vcmp.eq.s32.totalorder %v856, %v810
        %vm885 = vcmp.eq.s32.totalorder %v859, %v810
        %vm886 = vcmp.eq.s32.totalorder %v862, %v810
        %vm887 = vcmp.eq.s32.totalorder %v865, %v810
        %vm888 = vcmp.eq.s32.totalorder %v868, %v810
        %vm889 = vcmp.eq.s32.totalorder %v871, %v810
        %vm890 = vcmp.eq.s32.totalorder %v874, %v810
        %v891 = vsel %vm875, 1, 0
        %v892 = vsel %vm876, 1, 0
        %v893 = vsel %vm877, 1, 0
        %v894 = vsel %vm878, 1, 0
        %v895 = vsel %vm879, 1, 0
        %v896 = vsel %vm880, 1, 0
        %v897 = vsel %vm881, 1, 0
        %v898 = vsel %vm882, 1, 0
        %v899 = vsel %vm883, 1, 0
        %v900 = vsel %vm884, 1, 0
        %v901 = vsel %vm885, 1, 0
        %v902 = vsel %vm886, 1, 0
        %v903 = vsel %vm887, 1, 0
        %v904 = vsel %vm888, 1, 0
        %v905 = vsel %vm889, 1, 0
        %v906 = vsel %vm890, 1, 0
        %v907 = vcvt.s32.f32 %v891
        %v908 = vcvt.s32.f32 %v892
        %v909 = vcvt.s32.f32 %v893
        %v910 = vcvt.s32.f32 %v894
        %v911 = vcvt.s32.f32 %v895
        %v912 = vcvt.s32.f32 %v896
        %v913 = vcvt.s32.f32 %v897
        %v914 = vcvt.s32.f32 %v898
        %v915 = vcvt.s32.f32 %v899
        %v916 = vcvt.s32.f32 %v900
        %v917 = vcvt.s32.f32 %v901
        %v918 = vcvt.s32.f32 %v902
        %v919 = vcvt.s32.f32 %v903
        %v920 = vcvt.s32.f32 %v904
        %v921 = vcvt.s32.f32 %v905
        %v922 = vcvt.s32.f32 %v906
        %923 = vset.pattern.permute.xlu0 1
        %924 = vperm.xlu0 %923, %v811
        %v925 = vpop.permute.xlu0 %924
        %926 = vset.pattern.permute.xlu0 1
        %927 = vperm.xlu0 %926, %v812
        %v928 = vpop.permute.xlu0 %927
        %929 = vset.pattern.permute.xlu0 1
        %930 = vperm.xlu0 %929, %v813
        %v931 = vpop.permute.xlu0 %930
        %932 = vset.pattern.permute.xlu0 1
        %933 = vperm.xlu0 %932, %v814
        %v934 = vpop.permute.xlu0 %933
        %935 = vset.pattern.permute.xlu0 1
        %936 = vperm.xlu0 %935, %v815
        %v937 = vpop.permute.xlu0 %936
        %938 = vset.pattern.permute.xlu0 1
        %939 = vperm.xlu0 %938, %v816
        %v940 = vpop.permute.xlu0 %939
        %941 = vset.pattern.permute.xlu0 1
        %942 = vperm.xlu0 %941, %v817
        %v943 = vpop.permute.xlu0 %942
        %944 = vset.pattern.permute.xlu0 1
        %945 = vperm.xlu0 %944, %v818
        %v946 = vpop.permute.xlu0 %945
        %947 = vset.pattern.permute.xlu0 1
        %948 = vperm.xlu0 %947, %v819
        %v949 = vpop.permute.xlu0 %948
        %950 = vset.pattern.permute.xlu0 1
        %951 = vperm.xlu0 %950, %v820
        %v952 = vpop.permute.xlu0 %951
        %953 = vset.pattern.permute.xlu0 1
        %954 = vperm.xlu0 %953, %v821
        %v955 = vpop.permute.xlu0 %954
        %956 = vset.pattern.permute.xlu0 1
        %957 = vperm.xlu0 %956, %v822
        %v958 = vpop.permute.xlu0 %957
        %959 = vset.pattern.permute.xlu0 1
        %960 = vperm.xlu0 %959, %v823
        %v961 = vpop.permute.xlu0 %960
        %962 = vset.pattern.permute.xlu0 1
        %963 = vperm.xlu0 %962, %v824
        %v964 = vpop.permute.xlu0 %963
        %965 = vset.pattern.permute.xlu0 1
        %966 = vperm.xlu0 %965, %v825
        %v967 = vpop.permute.xlu0 %966
        %968 = vset.pattern.permute.xlu0 1
        %969 = vperm.xlu0 %968, %v826
        %v970 = vpop.permute.xlu0 %969
        %vm971 = vcmp.eq.s32.totalorder %v925, %v810
        %vm972 = vcmp.eq.s32.totalorder %v928, %v810
        %vm973 = vcmp.eq.s32.totalorder %v931, %v810
        %vm974 = vcmp.eq.s32.totalorder %v934, %v810
        %vm975 = vcmp.eq.s32.totalorder %v937, %v810
        %vm976 = vcmp.eq.s32.totalorder %v940, %v810
        %vm977 = vcmp.eq.s32.totalorder %v943, %v810
        %vm978 = vcmp.eq.s32.totalorder %v946, %v810
        %vm979 = vcmp.eq.s32.totalorder %v949, %v810
        %vm980 = vcmp.eq.s32.totalorder %v952, %v810
        %vm981 = vcmp.eq.s32.totalorder %v955, %v810
        %vm982 = vcmp.eq.s32.totalorder %v958, %v810
        %vm983 = vcmp.eq.s32.totalorder %v961, %v810
        %vm984 = vcmp.eq.s32.totalorder %v964, %v810
        %vm985 = vcmp.eq.s32.totalorder %v967, %v810
        %vm986 = vcmp.eq.s32.totalorder %v970, %v810
        %v987 = vsel %vm971, 1, 0
        %v988 = vsel %vm972, 1, 0
        %v989 = vsel %vm973, 1, 0
        %v990 = vsel %vm974, 1, 0
        %v991 = vsel %vm975, 1, 0
        %v992 = vsel %vm976, 1, 0
        %v993 = vsel %vm977, 1, 0
        %v994 = vsel %vm978, 1, 0
        %v995 = vsel %vm979, 1, 0
        %v996 = vsel %vm980, 1, 0
        %v997 = vsel %vm981, 1, 0
        %v998 = vsel %vm982, 1, 0
        %v999 = vsel %vm983, 1, 0
        %v1000 = vsel %vm984, 1, 0
        %v1001 = vsel %vm985, 1, 0
        %v1002 = vsel %vm986, 1, 0
        %v1003 = vcvt.s32.f32 %v987
        %v1004 = vcvt.s32.f32 %v988
        %v1005 = vcvt.s32.f32 %v989
        %v1006 = vcvt.s32.f32 %v990
        %v1007 = vcvt.s32.f32 %v991
        %v1008 = vcvt.s32.f32 %v992
        %v1009 = vcvt.s32.f32 %v993
        %v1010 = vcvt.s32.f32 %v994
        %v1011 = vcvt.s32.f32 %v995
        %v1012 = vcvt.s32.f32 %v996
        %v1013 = vcvt.s32.f32 %v997
        %v1014 = vcvt.s32.f32 %v998
        %v1015 = vcvt.s32.f32 %v999
        %v1016 = vcvt.s32.f32 %v1000
        %v1017 = vcvt.s32.f32 %v1001
        %v1018 = vcvt.s32.f32 %v1002
        %v1019 = vld [vmem:[#allocation2] sm:$0xff]
        %v1020 = vld [vmem:[#allocation2 + $0x8] sm:$0xff]
        %v1021 = vld [vmem:[#allocation2 + $0x10] sm:$0xff]
        %v1022 = vld [vmem:[#allocation2 + $0x18] sm:$0xff]
        %v1023 = vld [vmem:[#allocation3] sm:$0xff]
        %v1024 = vld [vmem:[#allocation3 + $0x8] sm:$0xff]
        %v1025 = vld [vmem:[#allocation3 + $0x10] sm:$0xff]
        %v1026 = vld [vmem:[#allocation3 + $0x18] sm:$0xff]
        %vm1027 = vcmask 130048
        %v1029 = vsel %vm1027, %v1003, 0
        %v1032 = vsel %vm1027, %v1004, 0
        %v1035 = vsel %vm1027, %v1005, 0
        %v1038 = vsel %vm1027, %v1006, 0
        %v1041 = vsel %vm1027, %v1007, 0
        %v1044 = vsel %vm1027, %v1008, 0
        %v1047 = vsel %vm1027, %v1009, 0
        %v1050 = vsel %vm1027, %v1010, 0
        %v1053 = vsel %vm1027, %v1011, 0
        %v1056 = vsel %vm1027, %v1012, 0
        %v1059 = vsel %vm1027, %v1013, 0
        %v1062 = vsel %vm1027, %v1014, 0
        %v1065 = vsel %vm1027, %v1015, 0
        %v1068 = vsel %vm1027, %v1016, 0
        %v1071 = vsel %vm1027, %v1017, 0
        %v1074 = vsel %vm1027, %v1018, 0
        %1076 = vmatprep.subr.mxu0 %v1024
        %1077 = vmatpush1.msra.mxu0 %v1023
        %1078 = vmatprep.subr.mxu0 %v1026
        %1079 = vmatpush1.msra.mxu0 %v1025
        %1080 = vmatprep.subr.mxu0 0.0
        %1081 = vmatpush1.msra.mxu0 0.0
        %1082 = vmatprep.subr.mxu0 0.0
        %1083 = vmatpush1.msra.mxu0 0.0
        %1084 = vmatprep.subr.mxu0 0.0
        %1085 = vmatpush1.msra.mxu0 0.0
        %1086 = vmatprep.subr.mxu0 0.0
        %1087 = vmatpush1.msra.mxu0 0.0
        %1088 = vmatprep.subr.mxu0 0.0
        %1089 = vmatpush1.msra.mxu0 0.0
        %1090 = vmatprep.subr.mxu0 0.0
        %1091 = vmatpush1.msra.mxu0 0.0
        %1092 = vmatprep.subr.mxu0 0.0
        %1093 = vmatpush1.msra.mxu0 0.0
        %1094 = vmatprep.subr.mxu0 0.0
        %1095 = vmatpush1.msra.mxu0 0.0
        %1096 = vmatprep.subr.mxu0 0.0
        %1097 = vmatpush1.msra.mxu0 0.0
        %1098 = vmatprep.subr.mxu0 0.0
        %1099 = vmatpush1.msra.mxu0 0.0
        %1100 = vmatprep.subr.mxu0 0.0
        %1101 = vmatpush1.msra.mxu0 0.0
        %1102 = vmatprep.subr.mxu0 0.0
        %1103 = vmatpush1.msra.mxu0 0.0
        %1104 = vmatprep.subr.mxu0 0.0
        %1105 = vmatpush1.msra.mxu0 0.0
        %1106 = vmatprep.subr.mxu0 0.0
        %1107 = vmatpush1.msra.mxu0 0.0
        %1108 = vmatprep.subr.mxu0 0.0
        %1109 = vmatpush1.msra.mxu0 0.0
        %1110 = vmatprep.subr.mxu0 0.0
        %1111 = vmatpush1.msra.mxu0 0.0
        %1112 = vmatprep.subr.mxu0 0.0
        %1113 = vmatpush1.msra.mxu0 0.0
        %1114 = vmatprep.subr.mxu0 0.0
        %1115 = vmatpush1.msra.mxu0 0.0
        %1116 = vmatprep.subr.mxu0 0.0
        %1117 = vmatpush1.msra.mxu0 0.0
        %1118 = vmatprep.subr.mxu0 0.0
        %1119 = vmatpush1.msra.mxu0 0.0
        %1120 = vmatprep.subr.mxu0 0.0
        %1121 = vmatpush1.msra.mxu0 0.0
        %1122 = vmatprep.subr.mxu0 0.0
        %1123 = vmatpush1.msra.mxu0 0.0
        %1124 = vmatprep.subr.mxu0 0.0
        %1125 = vmatpush1.msra.mxu0 0.0
        %1126 = vmatprep.subr.mxu0 0.0
        %1127 = vmatpush1.msra.mxu0 0.0
        %1128 = vmatprep.subr.mxu0 0.0
        %1129 = vmatpush1.msra.mxu0 0.0
        %1130 = vmatprep.subr.mxu0 0.0
        %1131 = vmatpush1.msra.mxu0 0.0
        %1132 = vmatprep.subr.mxu0 0.0
        %1133 = vmatpush1.msra.mxu0 0.0
        %1134 = vmatprep.subr.mxu0 0.0
        %1135 = vmatpush1.msra.mxu0 0.0
        %1136 = vmatprep.subr.mxu0 0.0
        %1137 = vmatpush1.msra.mxu0 0.0
        %1138 = vmatprep.subr.mxu0 0.0
        %1139 = vmatpush1.msra.mxu0 0.0
        %1140 = vmatprep.mubr.f32.mxu0 0.0
        %1141 = vmatmul.mubr.f32.gmra.mrb[0].mxu0 %v1029
        %v1142 = vpop.f32.mrb[0].mxu0
        %v1143 = vadd.f32 0.0, %v1142
        %v1144 = vpop.f32.mrb[0].mxu0
        %v1145 = vadd.f32 0.0, %v1144
        %1146 = vmatprep.mubr.f32.mxu0 0.0
        %1147 = vmatmul.mubr.f32.gmra.mrb[0].mxu0 %v1032
        %v1148 = vpop.f32.mrb[0].mxu0
        %v1149 = vadd.f32 0.0, %v1148
        %v1150 = vpop.f32.mrb[0].mxu0
        %v1151 = vadd.f32 0.0, %v1150
        %1152 = vmatprep.mubr.f32.mxu0 0.0
        %1153 = vmatmul.mubr.f32.gmra.mrb[0].mxu0 %v1035
        %v1154 = vpop.f32.mrb[0].mxu0
        %v1155 = vadd.f32 0.0, %v1154
        %v1156 = vpop.f32.mrb[0].mxu0
        %v1157 = vadd.f32 0.0, %v1156
        %1158 = vmatprep.mubr.f32.mxu0 0.0
        %1159 = vmatmul.mubr.f32.gmra.mrb[0].mxu0 %v1038
        %v1160 = vpop.f32.mrb[0].mxu0
        %v1161 = vadd.f32 0.0, %v1160
        %v1162 = vpop.f32.mrb[0].mxu0
        %v1163 = vadd.f32 0.0, %v1162
        %1164 = vmatprep.mubr.f32.mxu0 0.0
        %1165 = vmatmul.mubr.f32.gmra.mrb[0].mxu0 %v1041
        %v1166 = vpop.f32.mrb[0].mxu0
        %v1167 = vadd.f32 0.0, %v1166
        %v1168 = vpop.f32.mrb[0].mxu0
        %v1169 = vadd.f32 0.0, %v1168
        %1170 = vmatprep.mubr.f32.mxu0 0.0
        %1171 = vmatmul.mubr.f32.gmra.mrb[0].mxu0 %v1044
        %v1172 = vpop.f32.mrb[0].mxu0
        %v1173 = vadd.f32 0.0, %v1172
        %v1174 = vpop.f32.mrb[0].mxu0
        %v1175 = vadd.f32 0.0, %v1174
        %1176 = vmatprep.mubr.f32.mxu0 0.0
        %1177 = vmatmul.mubr.f32.gmra.mrb[0].mxu0 %v1047
        %v1178 = vpop.f32.mrb[0].mxu0
        %v1179 = vadd.f32 0.0, %v1178
        %v1180 = vpop.f32.mrb[0].mxu0
        %v1181 = vadd.f32 0.0, %v1180
        %1182 = vmatprep.mubr.f32.mxu0 0.0
        %1183 = vmatmul.mubr.f32.gmra.mrb[0].mxu0 %v1050
        %v1184 = vpop.f32.mrb[0].mxu0
        %v1185 = vadd.f32 0.0, %v1184
        %v1186 = vpop.f32.mrb[0].mxu0
        %v1187 = vadd.f32 0.0, %v1186
        %1188 = vmatprep.mubr.f32.mxu0 0.0
        %1189 = vmatmul.mubr.f32.gmra.mrb[0].mxu0 %v1053
        %v1190 = vpop.f32.mrb[0].mxu0
        %v1191 = vadd.f32 0.0, %v1190
        %v1192 = vpop.f32.mrb[0].mxu0
        %v1193 = vadd.f32 0.0, %v1192
        %1194 = vmatprep.mubr.f32.mxu0 0.0
        %1195 = vmatmul.mubr.f32.gmra.mrb[0].mxu0 %v1056
        %v1196 = vpop.f32.mrb[0].mxu0
        %v1197 = vadd.f32 0.0, %v1196
        %v1198 = vpop.f32.mrb[0].mxu0
        %v1199 = vadd.f32 0.0, %v1198
        %1200 = vmatprep.mubr.f32.mxu0 0.0
        %1201 = vmatmul.mubr.f32.gmra.mrb[0].mxu0 %v1059
        %v1202 = vpop.f32.mrb[0].mxu0
        %v1203 = vadd.f32 0.0, %v1202
        %v1204 = vpop.f32.mrb[0].mxu0
        %v1205 = vadd.f32 0.0, %v1204
        %1206 = vmatprep.mubr.f32.mxu0 0.0
        %1207 = vmatmul.mubr.f32.gmra.mrb[0].mxu0 %v1062
        %v1208 = vpop.f32.mrb[0].mxu0
        %v1209 = vadd.f32 0.0, %v1208
        %v1210 = vpop.f32.mrb[0].mxu0
        %v1211 = vadd.f32 0.0, %v1210
        %1212 = vmatprep.mubr.f32.mxu0 0.0
        %1213 = vmatmul.mubr.f32.gmra.mrb[0].mxu0 %v1065
        %v1214 = vpop.f32.mrb[0].mxu0
        %v1215 = vadd.f32 0.0, %v1214
        %v1216 = vpop.f32.mrb[0].mxu0
        %v1217 = vadd.f32 0.0, %v1216
        %1218 = vmatprep.mubr.f32.mxu0 0.0
        %1219 = vmatmul.mubr.f32.gmra.mrb[0].mxu0 %v1068
        %v1220 = vpop.f32.mrb[0].mxu0
        %v1221 = vadd.f32 0.0, %v1220
        %v1222 = vpop.f32.mrb[0].mxu0
        %v1223 = vadd.f32 0.0, %v1222
        %1224 = vmatprep.mubr.f32.mxu0 0.0
        %1225 = vmatmul.mubr.f32.gmra.mrb[0].mxu0 %v1071
        %v1226 = vpop.f32.mrb[0].mxu0
        %v1227 = vadd.f32 0.0, %v1226
        %v1228 = vpop.f32.mrb[0].mxu0
        %v1229 = vadd.f32 0.0, %v1228
        %1230 = vmatprep.mubr.f32.mxu0 0.0
        %1231 = vmatmul.mubr.f32.gmra.mrb[0].mxu0 %v1074
        %v1232 = vpop.f32.mrb[0].mxu0
        %v1233 = vadd.f32 0.0, %v1232
        %v1234 = vpop.f32.mrb[0].mxu0
        %v1235 = vadd.f32 0.0, %v1234
        %1236 = vdwg.mxu0
        %v1238 = vsel %vm1027, %v907, 0
        %v1241 = vsel %vm1027, %v908, 0
        %v1244 = vsel %vm1027, %v909, 0
        %v1247 = vsel %vm1027, %v910, 0
        %v1250 = vsel %vm1027, %v911, 0
        %v1253 = vsel %vm1027, %v912, 0
        %v1256 = vsel %vm1027, %v913, 0
        %v1259 = vsel %vm1027, %v914, 0
        %v1262 = vsel %vm1027, %v915, 0
        %v1265 = vsel %vm1027, %v916, 0
        %v1268 = vsel %vm1027, %v917, 0
        %v1271 = vsel %vm1027, %v918, 0
        %v1274 = vsel %vm1027, %v919, 0
        %v1277 = vsel %vm1027, %v920, 0
        %v1280 = vsel %vm1027, %v921, 0
        %v1283 = vsel %vm1027, %v922, 0
        %1285 = vmatprep.subr.mxu0 %v1020
        %1286 = vmatpush1.msra.mxu0 %v1019
        %1287 = vmatprep.subr.mxu0 %v1022
        %1288 = vmatpush1.msra.mxu0 %v1021
        %1289 = vmatprep.subr.mxu0 0.0
        %1290 = vmatpush1.msra.mxu0 0.0
        %1291 = vmatprep.subr.mxu0 0.0
        %1292 = vmatpush1.msra.mxu0 0.0
        %1293 = vmatprep.subr.mxu0 0.0
        %1294 = vmatpush1.msra.mxu0 0.0
        %1295 = vmatprep.subr.mxu0 0.0
        %1296 = vmatpush1.msra.mxu0 0.0
        %1297 = vmatprep.subr.mxu0 0.0
        %1298 = vmatpush1.msra.mxu0 0.0
        %1299 = vmatprep.subr.mxu0 0.0
        %1300 = vmatpush1.msra.mxu0 0.0
        %1301 = vmatprep.subr.mxu0 0.0
        %1302 = vmatpush1.msra.mxu0 0.0
        %1303 = vmatprep.subr.mxu0 0.0
        %1304 = vmatpush1.msra.mxu0 0.0
        %1305 = vmatprep.subr.mxu0 0.0
        %1306 = vmatpush1.msra.mxu0 0.0
        %1307 = vmatprep.subr.mxu0 0.0
        %1308 = vmatpush1.msra.mxu0 0.0
        %1309 = vmatprep.subr.mxu0 0.0
        %1310 = vmatpush1.msra.mxu0 0.0
        %1311 = vmatprep.subr.mxu0 0.0
        %1312 = vmatpush1.msra.mxu0 0.0
        %1313 = vmatprep.subr.mxu0 0.0
        %1314 = vmatpush1.msra.mxu0 0.0
        %1315 = vmatprep.subr.mxu0 0.0
        %1316 = vmatpush1.msra.mxu0 0.0
        %1317 = vmatprep.subr.mxu0 0.0
        %1318 = vmatpush1.msra.mxu0 0.0
        %1319 = vmatprep.subr.mxu0 0.0
        %1320 = vmatpush1.msra.mxu0 0.0
        %1321 = vmatprep.subr.mxu0 0.0
        %1322 = vmatpush1.msra.mxu0 0.0
        %1323 = vmatprep.subr.mxu0 0.0
        %1324 = vmatpush1.msra.mxu0 0.0
        %1325 = vmatprep.subr.mxu0 0.0
        %1326 = vmatpush1.msra.mxu0 0.0
        %1327 = vmatprep.subr.mxu0 0.0
        %1328 = vmatpush1.msra.mxu0 0.0
        %1329 = vmatprep.subr.mxu0 0.0
        %1330 = vmatpush1.msra.mxu0 0.0
        %1331 = vmatprep.subr.mxu0 0.0
        %1332 = vmatpush1.msra.mxu0 0.0
        %1333 = vmatprep.subr.mxu0 0.0
        %1334 = vmatpush1.msra.mxu0 0.0
        %1335 = vmatprep.subr.mxu0 0.0
        %1336 = vmatpush1.msra.mxu0 0.0
        %1337 = vmatprep.subr.mxu0 0.0
        %1338 = vmatpush1.msra.mxu0 0.0
        %1339 = vmatprep.subr.mxu0 0.0
        %1340 = vmatpush1.msra.mxu0 0.0
        %1341 = vmatprep.subr.mxu0 0.0
        %1342 = vmatpush1.msra.mxu0 0.0
        %1343 = vmatprep.subr.mxu0 0.0
        %1344 = vmatpush1.msra.mxu0 0.0
        %1345 = vmatprep.subr.mxu0 0.0
        %1346 = vmatpush1.msra.mxu0 0.0
        %1347 = vmatprep.subr.mxu0 0.0
        %1348 = vmatpush1.msra.mxu0 0.0
        %1349 = vmatprep.mubr.f32.mxu0 0.0
        %1350 = vmatmul.mubr.f32.gmra.mrb[0].mxu0 %v1238
        %v1351 = vpop.f32.mrb[0].mxu0
        %v1352 = vadd.f32 %v1143, %v1351
        %v1353 = vpop.f32.mrb[0].mxu0
        %v1354 = vadd.f32 %v1145, %v1353
        %1355 = vmatprep.mubr.f32.mxu0 0.0
        %1356 = vmatmul.mubr.f32.gmra.mrb[0].mxu0 %v1241
        %v1357 = vpop.f32.mrb[0].mxu0
        %v1358 = vadd.f32 %v1149, %v1357
        %v1359 = vpop.f32.mrb[0].mxu0
        %v1360 = vadd.f32 %v1151, %v1359
        %1361 = vmatprep.mubr.f32.mxu0 0.0
        %1362 = vmatmul.mubr.f32.gmra.mrb[0].mxu0 %v1244
        %v1363 = vpop.f32.mrb[0].mxu0
        %v1364 = vadd.f32 %v1155, %v1363
        %v1365 = vpop.f32.mrb[0].mxu0
        %v1366 = vadd.f32 %v1157, %v1365
        %1367 = vmatprep.mubr.f32.mxu0 0.0
        %1368 = vmatmul.mubr.f32.gmra.mrb[0].mxu0 %v1247
        %v1369 = vpop.f32.mrb[0].mxu0
        %v1370 = vadd.f32 %v1161, %v1369
        %v1371 = vpop.f32.mrb[0].mxu0
        %v1372 = vadd.f32 %v1163, %v1371
        %1373 = vmatprep.mubr.f32.mxu0 0.0
        %1374 = vmatmul.mubr.f32.gmra.mrb[0].mxu0 %v1250
        %v1375 = vpop.f32.mrb[0].mxu0
        %v1376 = vadd.f32 %v1167, %v1375
        %v1377 = vpop.f32.mrb[0].mxu0
        %v1378 = vadd.f32 %v1169, %v1377
        %1379 = vmatprep.mubr.f32.mxu0 0.0
        %1380 = vmatmul.mubr.f32.gmra.mrb[0].mxu0 %v1253
        %v1381 = vpop.f32.mrb[0].mxu0
        %v1382 = vadd.f32 %v1173, %v1381
        %v1383 = vpop.f32.mrb[0].mxu0
        %v1384 = vadd.f32 %v1175, %v1383
        %1385 = vmatprep.mubr.f32.mxu0 0.0
        %1386 = vmatmul.mubr.f32.gmra.mrb[0].mxu0 %v1256
        %v1387 = vpop.f32.mrb[0].mxu0
        %v1388 = vadd.f32 %v1179, %v1387
        %v1389 = vpop.f32.mrb[0].mxu0
        %v1390 = vadd.f32 %v1181, %v1389
        %1391 = vmatprep.mubr.f32.mxu0 0.0
        %1392 = vmatmul.mubr.f32.gmra.mrb[0].mxu0 %v1259
        %v1393 = vpop.f32.mrb[0].mxu0
        %v1394 = vadd.f32 %v1185, %v1393
        %v1395 = vpop.f32.mrb[0].mxu0
        %v1396 = vadd.f32 %v1187, %v1395
        %1397 = vmatprep.mubr.f32.mxu0 0.0
        %1398 = vmatmul.mubr.f32.gmra.mrb[0].mxu0 %v1262
        %v1399 = vpop.f32.mrb[0].mxu0
        %v1400 = vadd.f32 %v1191, %v1399
        %v1401 = vpop.f32.mrb[0].mxu0
        %v1402 = vadd.f32 %v1193, %v1401
        %1403 = vmatprep.mubr.f32.mxu0 0.0
        %1404 = vmatmul.mubr.f32.gmra.mrb[0].mxu0 %v1265
        %v1405 = vpop.f32.mrb[0].mxu0
        %v1406 = vadd.f32 %v1197, %v1405
        %v1407 = vpop.f32.mrb[0].mxu0
        %v1408 = vadd.f32 %v1199, %v1407
        %1409 = vmatprep.mubr.f32.mxu0 0.0
        %1410 = vmatmul.mubr.f32.gmra.mrb[0].mxu0 %v1268
        %v1411 = vpop.f32.mrb[0].mxu0
        %v1412 = vadd.f32 %v1203, %v1411
        %v1413 = vpop.f32.mrb[0].mxu0
        %v1414 = vadd.f32 %v1205, %v1413
        %1415 = vmatprep.mubr.f32.mxu0 0.0
        %1416 = vmatmul.mubr.f32.gmra.mrb[0].mxu0 %v1271
        %v1417 = vpop.f32.mrb[0].mxu0
        %v1418 = vadd.f32 %v1209, %v1417
        %v1419 = vpop.f32.mrb[0].mxu0
        %v1420 = vadd.f32 %v1211, %v1419
        %1421 = vmatprep.mubr.f32.mxu0 0.0
        %1422 = vmatmul.mubr.f32.gmra.mrb[0].mxu0 %v1274
        %v1423 = vpop.f32.mrb[0].mxu0
        %v1424 = vadd.f32 %v1215, %v1423
        %v1425 = vpop.f32.mrb[0].mxu0
        %v1426 = vadd.f32 %v1217, %v1425
        %1427 = vmatprep.mubr.f32.mxu0 0.0
        %1428 = vmatmul.mubr.f32.gmra.mrb[0].mxu0 %v1277
        %v1429 = vpop.f32.mrb[0].mxu0
        %v1430 = vadd.f32 %v1221, %v1429
        %v1431 = vpop.f32.mrb[0].mxu0
        %v1432 = vadd.f32 %v1223, %v1431
        %1433 = vmatprep.mubr.f32.mxu0 0.0
        %1434 = vmatmul.mubr.f32.gmra.mrb[0].mxu0 %v1280
        %v1435 = vpop.f32.mrb[0].mxu0
        %v1436 = vadd.f32 %v1227, %v1435
        %v1437 = vpop.f32.mrb[0].mxu0
        %v1438 = vadd.f32 %v1229, %v1437
        %1439 = vmatprep.mubr.f32.mxu0 0.0
        %1440 = vmatmul.mubr.f32.gmra.mrb[0].mxu0 %v1283
        %v1441 = vpop.f32.mrb[0].mxu0
        %v1442 = vadd.f32 %v1233, %v1441
        %v1443 = vpop.f32.mrb[0].mxu0
        %v1444 = vadd.f32 %v1235, %v1443
        %1445 = vdwg.mxu0
        %v1446 = vmul.f32 %v1354, %v1354
        %v1447 = vmul.f32 %v1360, %v1360
        %v1448 = vmul.f32 %v1366, %v1366
        %v1449 = vmul.f32 %v1372, %v1372
        %v1450 = vmul.f32 %v1378, %v1378
        %v1451 = vmul.f32 %v1384, %v1384
        %v1452 = vmul.f32 %v1390, %v1390
        %v1453 = vmul.f32 %v1396, %v1396
        %v1454 = vmul.f32 %v1402, %v1402
        %v1455 = vmul.f32 %v1408, %v1408
        %v1456 = vmul.f32 %v1414, %v1414
        %v1457 = vmul.f32 %v1420, %v1420
        %v1458 = vmul.f32 %v1426, %v1426
        %v1459 = vmul.f32 %v1432, %v1432
        %v1460 = vmul.f32 %v1438, %v1438
        %v1461 = vmul.f32 %v1444, %v1444
        %1462 = vadd.xlane.f32.xlu0 %v1446
        %v1463 = vpop.xlane.xlu0 %1462
        %1464 = vadd.xlane.f32.xlu0 %v1447
        %v1465 = vpop.xlane.xlu0 %1464
        %1466 = vadd.xlane.f32.xlu0 %v1448
        %v1467 = vpop.xlane.xlu0 %1466
        %1468 = vadd.xlane.f32.xlu0 %v1449
        %v1469 = vpop.xlane.xlu0 %1468
        %1470 = vadd.xlane.f32.xlu0 %v1450
        %v1471 = vpop.xlane.xlu0 %1470
        %1472 = vadd.xlane.f32.xlu0 %v1451
        %v1473 = vpop.xlane.xlu0 %1472
        %1474 = vadd.xlane.f32.xlu0 %v1452
        %v1475 = vpop.xlane.xlu0 %1474
        %1476 = vadd.xlane.f32.xlu0 %v1453
        %v1477 = vpop.xlane.xlu0 %1476
        %1478 = vadd.xlane.f32.xlu0 %v1454
        %v1479 = vpop.xlane.xlu0 %1478
        %1480 = vadd.xlane.f32.xlu0 %v1455
        %v1481 = vpop.xlane.xlu0 %1480
        %1482 = vadd.xlane.f32.xlu0 %v1456
        %v1483 = vpop.xlane.xlu0 %1482
        %1484 = vadd.xlane.f32.xlu0 %v1457
        %v1485 = vpop.xlane.xlu0 %1484
        %1486 = vadd.xlane.f32.xlu0 %v1458
        %v1487 = vpop.xlane.xlu0 %1486
        %1488 = vadd.xlane.f32.xlu0 %v1459
        %v1489 = vpop.xlane.xlu0 %1488
        %1490 = vadd.xlane.f32.xlu0 %v1460
        %v1491 = vpop.xlane.xlu0 %1490
        %1492 = vadd.xlane.f32.xlu0 %v1461
        %v1493 = vpop.xlane.xlu0 %1492
        %v1494 = vld [vmem:[%s6] sm:$0x1]
        %v1496 = vlaneseq
        %v1497 = vshrl.u32 %v1496, 7
        %v1498 = vsub.s32 0, %v1497
        %v1499 = vrot.slane %v1494, %v1498
        %v1501 = vmul.f32 %v1463, %v1499
        %v1502 = vmul.f32 %v1465, %v1499
        %v1503 = vmul.f32 %v1467, %v1499
        %v1504 = vmul.f32 %v1469, %v1499
        %v1505 = vmul.f32 %v1471, %v1499
        %v1506 = vmul.f32 %v1473, %v1499
        %v1507 = vmul.f32 %v1475, %v1499
        %v1508 = vmul.f32 %v1477, %v1499
        %v1509 = vmul.f32 %v1479, %v1499
        %v1510 = vmul.f32 %v1481, %v1499
        %v1511 = vmul.f32 %v1483, %v1499
        %v1512 = vmul.f32 %v1485, %v1499
        %v1513 = vmul.f32 %v1487, %v1499
        %v1514 = vmul.f32 %v1489, %v1499
        %v1515 = vmul.f32 %v1491, %v1499
        %v1516 = vmul.f32 %v1493, %v1499
        %v1517 = vadd.f32 %v1352, %v1501
        %v1518 = vadd.f32 %v1358, %v1502
        %v1519 = vadd.f32 %v1364, %v1503
        %v1520 = vadd.f32 %v1370, %v1504
        %v1521 = vadd.f32 %v1376, %v1505
        %v1522 = vadd.f32 %v1382, %v1506
        %v1523 = vadd.f32 %v1388, %v1507
        %v1524 = vadd.f32 %v1394, %v1508
        %v1525 = vadd.f32 %v1400, %v1509
        %v1526 = vadd.f32 %v1406, %v1510
        %v1527 = vadd.f32 %v1412, %v1511
        %v1528 = vadd.f32 %v1418, %v1512
        %v1529 = vadd.f32 %v1424, %v1513
        %v1530 = vadd.f32 %v1430, %v1514
        %v1531 = vadd.f32 %v1436, %v1515
        %v1532 = vadd.f32 %v1442, %v1516
        %v1533 = vxor.u32 %v1517, 2147483648
        %v1534 = vxor.u32 %v1518, 2147483648
        %v1535 = vxor.u32 %v1519, 2147483648
        %v1536 = vxor.u32 %v1520, 2147483648
        %v1537 = vxor.u32 %v1521, 2147483648
        %v1538 = vxor.u32 %v1522, 2147483648
        %v1539 = vxor.u32 %v1523, 2147483648
        %v1540 = vxor.u32 %v1524, 2147483648
        %v1541 = vxor.u32 %v1525, 2147483648
        %v1542 = vxor.u32 %v1526, 2147483648
        %v1543 = vxor.u32 %v1527, 2147483648
        %v1544 = vxor.u32 %v1528, 2147483648
        %v1545 = vxor.u32 %v1529, 2147483648
        %v1546 = vxor.u32 %v1530, 2147483648
        %v1547 = vxor.u32 %v1531, 2147483648
        %v1548 = vxor.u32 %v1532, 2147483648
        %v1549 = vmul.f32 %v1533, 1.442695
        %v1550 = vpow.pop %v1549
        %v1551 = vmul.f32 %v1534, 1.442695
        %v1552 = vpow.pop %v1551
        %v1553 = vmul.f32 %v1535, 1.442695
        %v1554 = vpow.pop %v1553
        %v1555 = vmul.f32 %v1536, 1.442695
        %v1556 = vpow.pop %v1555
        %v1557 = vmul.f32 %v1537, 1.442695
        %v1558 = vpow.pop %v1557
        %v1559 = vmul.f32 %v1538, 1.442695
        %v1560 = vpow.pop %v1559
        %v1561 = vmul.f32 %v1539, 1.442695
        %v1562 = vpow.pop %v1561
        %v1563 = vmul.f32 %v1540, 1.442695
        %v1564 = vpow.pop %v1563
        %v1565 = vmul.f32 %v1541, 1.442695
        %v1566 = vpow.pop %v1565
        %v1567 = vmul.f32 %v1542, 1.442695
        %v1568 = vpow.pop %v1567
        %v1569 = vmul.f32 %v1543, 1.442695
        %v1570 = vpow.pop %v1569
        %v1571 = vmul.f32 %v1544, 1.442695
        %v1572 = vpow.pop %v1571
        %v1573 = vmul.f32 %v1545, 1.442695
        %v1574 = vpow.pop %v1573
        %v1575 = vmul.f32 %v1546, 1.442695
        %v1576 = vpow.pop %v1575
        %v1577 = vmul.f32 %v1547, 1.442695
        %v1578 = vpow.pop %v1577
        %v1579 = vmul.f32 %v1548, 1.442695
        %v1580 = vpow.pop %v1579
        %v1581 = vadd.f32 %v1550, 1.0
        %v1582 = vadd.f32 %v1552, 1.0
        %v1583 = vadd.f32 %v1554, 1.0
        %v1584 = vadd.f32 %v1556, 1.0
        %v1585 = vadd.f32 %v1558, 1.0
        %v1586 = vadd.f32 %v1560, 1.0
        %v1587 = vadd.f32 %v1562, 1.0
        %v1588 = vadd.f32 %v1564, 1.0
        %v1589 = vadd.f32 %v1566, 1.0
        %v1590 = vadd.f32 %v1568, 1.0
        %v1591 = vadd.f32 %v1570, 1.0
        %v1592 = vadd.f32 %v1572, 1.0
        %v1593 = vadd.f32 %v1574, 1.0
        %v1594 = vadd.f32 %v1576, 1.0
        %v1595 = vadd.f32 %v1578, 1.0
        %v1596 = vadd.f32 %v1580, 1.0
        %v1597 = vrcp.pop %v1581
        %v1598 = vmul.f32 1.0, %v1597
        %v1599 = vrcp.pop %v1582
        %v1600 = vmul.f32 1.0, %v1599
        %v1601 = vrcp.pop %v1583
        %v1602 = vmul.f32 1.0, %v1601
        %v1603 = vrcp.pop %v1584
        %v1604 = vmul.f32 1.0, %v1603
        %v1605 = vrcp.pop %v1585
        %v1606 = vmul.f32 1.0, %v1605
        %v1607 = vrcp.pop %v1586
        %v1608 = vmul.f32 1.0, %v1607
        %v1609 = vrcp.pop %v1587
        %v1610 = vmul.f32 1.0, %v1609
        %v1611 = vrcp.pop %v1588
        %v1612 = vmul.f32 1.0, %v1611
        %v1613 = vrcp.pop %v1589
        %v1614 = vmul.f32 1.0, %v1613
        %v1615 = vrcp.pop %v1590
        %v1616 = vmul.f32 1.0, %v1615
        %v1617 = vrcp.pop %v1591
        %v1618 = vmul.f32 1.0, %v1617
        %v1619 = vrcp.pop %v1592
        %v1620 = vmul.f32 1.0, %v1619
        %v1621 = vrcp.pop %v1593
        %v1622 = vmul.f32 1.0, %v1621
        %v1623 = vrcp.pop %v1594
        %v1624 = vmul.f32 1.0, %v1623
        %v1625 = vrcp.pop %v1595
        %v1626 = vmul.f32 1.0, %v1625
        %v1627 = vrcp.pop %v1596
        %v1628 = vmul.f32 1.0, %v1627
        %v1629 = vmul.f32 %v1517, %v1598
        %v1630 = vmul.f32 %v1518, %v1600
        %v1631 = vmul.f32 %v1519, %v1602
        %v1632 = vmul.f32 %v1520, %v1604
        %v1633 = vmul.f32 %v1521, %v1606
        %v1634 = vmul.f32 %v1522, %v1608
        %v1635 = vmul.f32 %v1523, %v1610
        %v1636 = vmul.f32 %v1524, %v1612
        %v1637 = vmul.f32 %v1525, %v1614
        %v1638 = vmul.f32 %v1526, %v1616
        %v1639 = vmul.f32 %v1527, %v1618
        %v1640 = vmul.f32 %v1528, %v1620
        %v1641 = vmul.f32 %v1529, %v1622
        %v1642 = vmul.f32 %v1530, %v1624
        %v1643 = vmul.f32 %v1531, %v1626
        %v1644 = vmul.f32 %v1532, %v1628
        %v1645 = vld [vmem:[%s7] sm:$0xff]
        %v1646 = vld [vmem:[%s7 + $0x8] sm:$0xff]
        %v1647 = vld [vmem:[%s7 + $0x10] sm:$0xff]
        %v1648 = vld [vmem:[%s7 + $0x18] sm:$0xff]
        %v1649 = vld [vmem:[%s7 + $0x20] sm:$0xff]
        %v1650 = vld [vmem:[%s7 + $0x28] sm:$0xff]
        %v1651 = vld [vmem:[%s7 + $0x30] sm:$0xff]
        %v1652 = vld [vmem:[%s7 + $0x38] sm:$0xff]
        %v1653 = vld [vmem:[%s7 + $0x40] sm:$0xff]
        %v1654 = vld [vmem:[%s7 + $0x48] sm:$0xff]
        %v1655 = vld [vmem:[%s7 + $0x50] sm:$0xff]
        %v1656 = vld [vmem:[%s7 + $0x58] sm:$0xff]
        %v1657 = vld [vmem:[%s7 + $0x60] sm:$0xff]
        %v1658 = vld [vmem:[%s7 + $0x68] sm:$0xff]
        %v1659 = vld [vmem:[%s7 + $0x70] sm:$0xff]
        %v1660 = vld [vmem:[%s7 + $0x78] sm:$0xff]
        %v1661 = vld [vmem:[%s8] sm:$0x1]
        %v1663 = vlaneseq
        %v1664 = vshrl.u32 %v1663, 7
        %v1665 = vsub.s32 0, %v1664
        %v1666 = vrot.slane %v1661, %v1665
        %1668 = vmatprep.subr.mxu0 0.0
        %1669 = vmatpush1.msra.mxu0 %v1645
        %1670 = vmatprep.subr.mxu0 0.0
        %1671 = vmatpush1.msra.mxu0 %v1646
        %1672 = vmatprep.subr.mxu0 0.0
        %1673 = vmatpush1.msra.mxu0 %v1647
        %1674 = vmatprep.subr.mxu0 0.0
        %1675 = vmatpush1.msra.mxu0 %v1648
        %1676 = vmatprep.subr.mxu0 0.0
        %1677 = vmatpush1.msra.mxu0 %v1649
        %1678 = vmatprep.subr.mxu0 0.0
        %1679 = vmatpush1.msra.mxu0 %v1650
        %1680 = vmatprep.subr.mxu0 0.0
        %1681 = vmatpush1.msra.mxu0 %v1651
        %1682 = vmatprep.subr.mxu0 0.0
        %1683 = vmatpush1.msra.mxu0 %v1652
        %1684 = vmatprep.subr.mxu0 0.0
        %1685 = vmatpush1.msra.mxu0 %v1653
        %1686 = vmatprep.subr.mxu0 0.0
        %1687 = vmatpush1.msra.mxu0 %v1654
        %1688 = vmatprep.subr.mxu0 0.0
        %1689 = vmatpush1.msra.mxu0 %v1655
        %1690 = vmatprep.subr.mxu0 0.0
        %1691 = vmatpush1.msra.mxu0 %v1656
        %1692 = vmatprep.subr.mxu0 0.0
        %1693 = vmatpush1.msra.mxu0 %v1657
        %1694 = vmatprep.subr.mxu0 0.0
        %1695 = vmatpush1.msra.mxu0 %v1658
        %1696 = vmatprep.subr.mxu0 0.0
        %1697 = vmatpush1.msra.mxu0 %v1659
        %1698 = vmatprep.subr.mxu0 0.0
        %1699 = vmatpush1.msra.mxu0 %v1660
        %1700 = vmatprep.subr.mxu0 0.0
        %1701 = vmatpush1.msra.mxu0 0.0
        %1702 = vmatprep.subr.mxu0 0.0
        %1703 = vmatpush1.msra.mxu0 0.0
        %1704 = vmatprep.subr.mxu0 0.0
        %1705 = vmatpush1.msra.mxu0 0.0
        %1706 = vmatprep.subr.mxu0 0.0
        %1707 = vmatpush1.msra.mxu0 0.0
        %1708 = vmatprep.subr.mxu0 0.0
        %1709 = vmatpush1.msra.mxu0 0.0
        %1710 = vmatprep.subr.mxu0 0.0
        %1711 = vmatpush1.msra.mxu0 0.0
        %1712 = vmatprep.subr.mxu0 0.0
        %1713 = vmatpush1.msra.mxu0 0.0
        %1714 = vmatprep.subr.mxu0 0.0
        %1715 = vmatpush1.msra.mxu0 0.0
        %1716 = vmatprep.subr.mxu0 0.0
        %1717 = vmatpush1.msra.mxu0 0.0
        %1718 = vmatprep.subr.mxu0 0.0
        %1719 = vmatpush1.msra.mxu0 0.0
        %1720 = vmatprep.subr.mxu0 0.0
        %1721 = vmatpush1.msra.mxu0 0.0
        %1722 = vmatprep.subr.mxu0 0.0
        %1723 = vmatpush1.msra.mxu0 0.0
        %1724 = vmatprep.subr.mxu0 0.0
        %1725 = vmatpush1.msra.mxu0 0.0
        %1726 = vmatprep.subr.mxu0 0.0
        %1727 = vmatpush1.msra.mxu0 0.0
        %1728 = vmatprep.subr.mxu0 0.0
        %1729 = vmatpush1.msra.mxu0 0.0
        %1730 = vmatprep.subr.mxu0 0.0
        %1731 = vmatpush1.msra.mxu0 0.0
        %1732 = vmatprep.mubr.f32.mxu0 0.0
        %1733 = vmatmul.mubr.f32.gmra.mrb[0].mxu0 %v1629
        %v1734 = vpop.f32.mrb[0].mxu0
        %v1735 = vadd.f32 %v1666, %v1734
        %v1736 = vpop.f32.mrb[0].mxu0
        %1737 = vmatprep.mubr.f32.mxu0 0.0
        %1738 = vmatmul.mubr.f32.gmra.mrb[0].mxu0 %v1630
        %v1739 = vpop.f32.mrb[0].mxu0
        %v1740 = vadd.f32 %v1666, %v1739
        %v1741 = vpop.f32.mrb[0].mxu0
        %1742 = vmatprep.mubr.f32.mxu0 0.0
        %1743 = vmatmul.mubr.f32.gmra.mrb[0].mxu0 %v1631
        %v1744 = vpop.f32.mrb[0].mxu0
        %v1745 = vadd.f32 %v1666, %v1744
        %v1746 = vpop.f32.mrb[0].mxu0
        %1747 = vmatprep.mubr.f32.mxu0 0.0
        %1748 = vmatmul.mubr.f32.gmra.mrb[0].mxu0 %v1632
        %v1749 = vpop.f32.mrb[0].mxu0
        %v1750 = vadd.f32 %v1666, %v1749
        %v1751 = vpop.f32.mrb[0].mxu0
        %1752 = vmatprep.mubr.f32.mxu0 0.0
        %1753 = vmatmul.mubr.f32.gmra.mrb[0].mxu0 %v1633
        %v1754 = vpop.f32.mrb[0].mxu0
        %v1755 = vadd.f32 %v1666, %v1754
        %v1756 = vpop.f32.mrb[0].mxu0
        %1757 = vmatprep.mubr.f32.mxu0 0.0
        %1758 = vmatmul.mubr.f32.gmra.mrb[0].mxu0 %v1634
        %v1759 = vpop.f32.mrb[0].mxu0
        %v1760 = vadd.f32 %v1666, %v1759
        %v1761 = vpop.f32.mrb[0].mxu0
        %1762 = vmatprep.mubr.f32.mxu0 0.0
        %1763 = vmatmul.mubr.f32.gmra.mrb[0].mxu0 %v1635
        %v1764 = vpop.f32.mrb[0].mxu0
        %v1765 = vadd.f32 %v1666, %v1764
        %v1766 = vpop.f32.mrb[0].mxu0
        %1767 = vmatprep.mubr.f32.mxu0 0.0
        %1768 = vmatmul.mubr.f32.gmra.mrb[0].mxu0 %v1636
        %v1769 = vpop.f32.mrb[0].mxu0
        %v1770 = vadd.f32 %v1666, %v1769
        %v1771 = vpop.f32.mrb[0].mxu0
        %1772 = vmatprep.mubr.f32.mxu0 0.0
        %1773 = vmatmul.mubr.f32.gmra.mrb[0].mxu0 %v1637
        %v1774 = vpop.f32.mrb[0].mxu0
        %v1775 = vadd.f32 %v1666, %v1774
        %v1776 = vpop.f32.mrb[0].mxu0
        %1777 = vmatprep.mubr.f32.mxu0 0.0
        %1778 = vmatmul.mubr.f32.gmra.mrb[0].mxu0 %v1638
        %v1779 = vpop.f32.mrb[0].mxu0
        %v1780 = vadd.f32 %v1666, %v1779
        %v1781 = vpop.f32.mrb[0].mxu0
        %1782 = vmatprep.mubr.f32.mxu0 0.0
        %1783 = vmatmul.mubr.f32.gmra.mrb[0].mxu0 %v1639
        %v1784 = vpop.f32.mrb[0].mxu0
        %v1785 = vadd.f32 %v1666, %v1784
        %v1786 = vpop.f32.mrb[0].mxu0
        %1787 = vmatprep.mubr.f32.mxu0 0.0
        %1788 = vmatmul.mubr.f32.gmra.mrb[0].mxu0 %v1640
        %v1789 = vpop.f32.mrb[0].mxu0
        %v1790 = vadd.f32 %v1666, %v1789
        %v1791 = vpop.f32.mrb[0].mxu0
        %1792 = vmatprep.mubr.f32.mxu0 0.0
        %1793 = vmatmul.mubr.f32.gmra.mrb[0].mxu0 %v1641
        %v1794 = vpop.f32.mrb[0].mxu0
        %v1795 = vadd.f32 %v1666, %v1794
        %v1796 = vpop.f32.mrb[0].mxu0
        %1797 = vmatprep.mubr.f32.mxu0 0.0
        %1798 = vmatmul.mubr.f32.gmra.mrb[0].mxu0 %v1642
        %v1799 = vpop.f32.mrb[0].mxu0
        %v1800 = vadd.f32 %v1666, %v1799
        %v1801 = vpop.f32.mrb[0].mxu0
        %1802 = vmatprep.mubr.f32.mxu0 0.0
        %1803 = vmatmul.mubr.f32.gmra.mrb[0].mxu0 %v1643
        %v1804 = vpop.f32.mrb[0].mxu0
        %v1805 = vadd.f32 %v1666, %v1804
        %v1806 = vpop.f32.mrb[0].mxu0
        %1807 = vmatprep.mubr.f32.mxu0 0.0
        %1808 = vmatmul.mubr.f32.gmra.mrb[0].mxu0 %v1644
        %v1809 = vpop.f32.mrb[0].mxu0
        %v1810 = vadd.f32 %v1666, %v1809
        %v1811 = vpop.f32.mrb[0].mxu0
        %1812 = vdwg.mxu0
        %v1813 = vxor.u32 %v1735, 2147483648
        %v1814 = vxor.u32 %v1740, 2147483648
        %v1815 = vxor.u32 %v1745, 2147483648
        %v1816 = vxor.u32 %v1750, 2147483648
        %v1817 = vxor.u32 %v1755, 2147483648
        %v1818 = vxor.u32 %v1760, 2147483648
        %v1819 = vxor.u32 %v1765, 2147483648
        %v1820 = vxor.u32 %v1770, 2147483648
        %v1821 = vxor.u32 %v1775, 2147483648
        %v1822 = vxor.u32 %v1780, 2147483648
        %v1823 = vxor.u32 %v1785, 2147483648
        %v1824 = vxor.u32 %v1790, 2147483648
        %v1825 = vxor.u32 %v1795, 2147483648
        %v1826 = vxor.u32 %v1800, 2147483648
        %v1827 = vxor.u32 %v1805, 2147483648
        %v1828 = vxor.u32 %v1810, 2147483648
        %v1829 = vmul.f32 %v1813, 1.442695
        %v1830 = vpow.pop %v1829
        %v1831 = vmul.f32 %v1814, 1.442695
        %v1832 = vpow.pop %v1831
        %v1833 = vmul.f32 %v1815, 1.442695
        %v1834 = vpow.pop %v1833
        %v1835 = vmul.f32 %v1816, 1.442695
        %v1836 = vpow.pop %v1835
        %v1837 = vmul.f32 %v1817, 1.442695
        %v1838 = vpow.pop %v1837
        %v1839 = vmul.f32 %v1818, 1.442695
        %v1840 = vpow.pop %v1839
        %v1841 = vmul.f32 %v1819, 1.442695
        %v1842 = vpow.pop %v1841
        %v1843 = vmul.f32 %v1820, 1.442695
        %v1844 = vpow.pop %v1843
        %v1845 = vmul.f32 %v1821, 1.442695
        %v1846 = vpow.pop %v1845
        %v1847 = vmul.f32 %v1822, 1.442695
        %v1848 = vpow.pop %v1847
        %v1849 = vmul.f32 %v1823, 1.442695
        %v1850 = vpow.pop %v1849
        %v1851 = vmul.f32 %v1824, 1.442695
        %v1852 = vpow.pop %v1851
        %v1853 = vmul.f32 %v1825, 1.442695
        %v1854 = vpow.pop %v1853
        %v1855 = vmul.f32 %v1826, 1.442695
        %v1856 = vpow.pop %v1855
        %v1857 = vmul.f32 %v1827, 1.442695
        %v1858 = vpow.pop %v1857
        %v1859 = vmul.f32 %v1828, 1.442695
        %v1860 = vpow.pop %v1859
        %v1861 = vadd.f32 %v1830, 1.0
        %v1862 = vadd.f32 %v1832, 1.0
        %v1863 = vadd.f32 %v1834, 1.0
        %v1864 = vadd.f32 %v1836, 1.0
        %v1865 = vadd.f32 %v1838, 1.0
        %v1866 = vadd.f32 %v1840, 1.0
        %v1867 = vadd.f32 %v1842, 1.0
        %v1868 = vadd.f32 %v1844, 1.0
        %v1869 = vadd.f32 %v1846, 1.0
        %v1870 = vadd.f32 %v1848, 1.0
        %v1871 = vadd.f32 %v1850, 1.0
        %v1872 = vadd.f32 %v1852, 1.0
        %v1873 = vadd.f32 %v1854, 1.0
        %v1874 = vadd.f32 %v1856, 1.0
        %v1875 = vadd.f32 %v1858, 1.0
        %v1876 = vadd.f32 %v1860, 1.0
        %v1877 = vrcp.pop %v1861
        %v1878 = vmul.f32 1.0, %v1877
        %v1879 = vrcp.pop %v1862
        %v1880 = vmul.f32 1.0, %v1879
        %v1881 = vrcp.pop %v1863
        %v1882 = vmul.f32 1.0, %v1881
        %v1883 = vrcp.pop %v1864
        %v1884 = vmul.f32 1.0, %v1883
        %v1885 = vrcp.pop %v1865
        %v1886 = vmul.f32 1.0, %v1885
        %v1887 = vrcp.pop %v1866
        %v1888 = vmul.f32 1.0, %v1887
        %v1889 = vrcp.pop %v1867
        %v1890 = vmul.f32 1.0, %v1889
        %v1891 = vrcp.pop %v1868
        %v1892 = vmul.f32 1.0, %v1891
        %v1893 = vrcp.pop %v1869
        %v1894 = vmul.f32 1.0, %v1893
        %v1895 = vrcp.pop %v1870
        %v1896 = vmul.f32 1.0, %v1895
        %v1897 = vrcp.pop %v1871
        %v1898 = vmul.f32 1.0, %v1897
        %v1899 = vrcp.pop %v1872
        %v1900 = vmul.f32 1.0, %v1899
        %v1901 = vrcp.pop %v1873
        %v1902 = vmul.f32 1.0, %v1901
        %v1903 = vrcp.pop %v1874
        %v1904 = vmul.f32 1.0, %v1903
        %v1905 = vrcp.pop %v1875
        %v1906 = vmul.f32 1.0, %v1905
        %v1907 = vrcp.pop %v1876
        %v1908 = vmul.f32 1.0, %v1907
        %v1909 = vmul.f32 %v1735, %v1878
        %v1910 = vmul.f32 %v1740, %v1880
        %v1911 = vmul.f32 %v1745, %v1882
        %v1912 = vmul.f32 %v1750, %v1884
        %v1913 = vmul.f32 %v1755, %v1886
        %v1914 = vmul.f32 %v1760, %v1888
        %v1915 = vmul.f32 %v1765, %v1890
        %v1916 = vmul.f32 %v1770, %v1892
        %v1917 = vmul.f32 %v1775, %v1894
        %v1918 = vmul.f32 %v1780, %v1896
        %v1919 = vmul.f32 %v1785, %v1898
        %v1920 = vmul.f32 %v1790, %v1900
        %v1921 = vmul.f32 %v1795, %v1902
        %v1922 = vmul.f32 %v1800, %v1904
        %v1923 = vmul.f32 %v1805, %v1906
        %v1924 = vmul.f32 %v1810, %v1908
        %v1925 = vld [vmem:[%s9] sm:$0xff]
        %v1926 = vld [vmem:[%s9 + $0x8] sm:$0xff]
        %v1927 = vld [vmem:[%s9 + $0x10] sm:$0xff]
        %v1928 = vld [vmem:[%s9 + $0x18] sm:$0xff]
        %v1929 = vld [vmem:[%s9 + $0x20] sm:$0xff]
        %v1930 = vld [vmem:[%s9 + $0x28] sm:$0xff]
        %v1931 = vld [vmem:[%s9 + $0x30] sm:$0xff]
        %v1932 = vld [vmem:[%s9 + $0x38] sm:$0xff]
        %v1933 = vld [vmem:[%s9 + $0x40] sm:$0xff]
        %v1934 = vld [vmem:[%s9 + $0x48] sm:$0xff]
        %v1935 = vld [vmem:[%s9 + $0x50] sm:$0xff]
        %v1936 = vld [vmem:[%s9 + $0x58] sm:$0xff]
        %v1937 = vld [vmem:[%s9 + $0x60] sm:$0xff]
        %v1938 = vld [vmem:[%s9 + $0x68] sm:$0xff]
        %v1939 = vld [vmem:[%s9 + $0x70] sm:$0xff]
        %v1940 = vld [vmem:[%s9 + $0x78] sm:$0xff]
        %v1941 = vld [vmem:[%s10] sm:$0x1]
        %v1943 = vlaneseq
        %v1944 = vshrl.u32 %v1943, 7
        %v1945 = vsub.s32 0, %v1944
        %v1946 = vrot.slane %v1941, %v1945
        %1948 = vmatprep.subr.mxu0 0.0
        %1949 = vmatpush1.msra.mxu0 %v1925
        %1950 = vmatprep.subr.mxu0 0.0
        %1951 = vmatpush1.msra.mxu0 %v1926
        %1952 = vmatprep.subr.mxu0 0.0
        %1953 = vmatpush1.msra.mxu0 %v1927
        %1954 = vmatprep.subr.mxu0 0.0
        %1955 = vmatpush1.msra.mxu0 %v1928
        %1956 = vmatprep.subr.mxu0 0.0
        %1957 = vmatpush1.msra.mxu0 %v1929
        %1958 = vmatprep.subr.mxu0 0.0
        %1959 = vmatpush1.msra.mxu0 %v1930
        %1960 = vmatprep.subr.mxu0 0.0
        %1961 = vmatpush1.msra.mxu0 %v1931
        %1962 = vmatprep.subr.mxu0 0.0
        %1963 = vmatpush1.msra.mxu0 %v1932
        %1964 = vmatprep.subr.mxu0 0.0
        %1965 = vmatpush1.msra.mxu0 %v1933
        %1966 = vmatprep.subr.mxu0 0.0
        %1967 = vmatpush1.msra.mxu0 %v1934
        %1968 = vmatprep.subr.mxu0 0.0
        %1969 = vmatpush1.msra.mxu0 %v1935
        %1970 = vmatprep.subr.mxu0 0.0
        %1971 = vmatpush1.msra.mxu0 %v1936
        %1972 = vmatprep.subr.mxu0 0.0
        %1973 = vmatpush1.msra.mxu0 %v1937
        %1974 = vmatprep.subr.mxu0 0.0
        %1975 = vmatpush1.msra.mxu0 %v1938
        %1976 = vmatprep.subr.mxu0 0.0
        %1977 = vmatpush1.msra.mxu0 %v1939
        %1978 = vmatprep.subr.mxu0 0.0
        %1979 = vmatpush1.msra.mxu0 %v1940
        %1980 = vmatprep.subr.mxu0 0.0
        %1981 = vmatpush1.msra.mxu0 0.0
        %1982 = vmatprep.subr.mxu0 0.0
        %1983 = vmatpush1.msra.mxu0 0.0
        %1984 = vmatprep.subr.mxu0 0.0
        %1985 = vmatpush1.msra.mxu0 0.0
        %1986 = vmatprep.subr.mxu0 0.0
        %1987 = vmatpush1.msra.mxu0 0.0
        %1988 = vmatprep.subr.mxu0 0.0
        %1989 = vmatpush1.msra.mxu0 0.0
        %1990 = vmatprep.subr.mxu0 0.0
        %1991 = vmatpush1.msra.mxu0 0.0
        %1992 = vmatprep.subr.mxu0 0.0
        %1993 = vmatpush1.msra.mxu0 0.0
        %1994 = vmatprep.subr.mxu0 0.0
        %1995 = vmatpush1.msra.mxu0 0.0
        %1996 = vmatprep.subr.mxu0 0.0
        %1997 = vmatpush1.msra.mxu0 0.0
        %1998 = vmatprep.subr.mxu0 0.0
        %1999 = vmatpush1.msra.mxu0 0.0
        %2000 = vmatprep.subr.mxu0 0.0
        %2001 = vmatpush1.msra.mxu0 0.0
        %2002 = vmatprep.subr.mxu0 0.0
        %2003 = vmatpush1.msra.mxu0 0.0
        %2004 = vmatprep.subr.mxu0 0.0
        %2005 = vmatpush1.msra.mxu0 0.0
        %2006 = vmatprep.subr.mxu0 0.0
        %2007 = vmatpush1.msra.mxu0 0.0
        %2008 = vmatprep.subr.mxu0 0.0
        %2009 = vmatpush1.msra.mxu0 0.0
        %2010 = vmatprep.subr.mxu0 0.0
        %2011 = vmatpush1.msra.mxu0 0.0
        %2012 = vmatprep.mubr.f32.mxu0 0.0
        %2013 = vmatmul.mubr.f32.gmra.mrb[0].mxu0 %v1909
        %v2014 = vpop.f32.mrb[0].mxu0
        %v2015 = vadd.f32 %v1946, %v2014
        %v2016 = vpop.f32.mrb[0].mxu0
        %2017 = vmatprep.mubr.f32.mxu0 0.0
        %2018 = vmatmul.mubr.f32.gmra.mrb[0].mxu0 %v1910
        %v2019 = vpop.f32.mrb[0].mxu0
        %v2020 = vadd.f32 %v1946, %v2019
        %v2021 = vpop.f32.mrb[0].mxu0
        %2022 = vmatprep.mubr.f32.mxu0 0.0
        %2023 = vmatmul.mubr.f32.gmra.mrb[0].mxu0 %v1911
        %v2024 = vpop.f32.mrb[0].mxu0
        %v2025 = vadd.f32 %v1946, %v2024
        %v2026 = vpop.f32.mrb[0].mxu0
        %2027 = vmatprep.mubr.f32.mxu0 0.0
        %2028 = vmatmul.mubr.f32.gmra.mrb[0].mxu0 %v1912
        %v2029 = vpop.f32.mrb[0].mxu0
        %v2030 = vadd.f32 %v1946, %v2029
        %v2031 = vpop.f32.mrb[0].mxu0
        %2032 = vmatprep.mubr.f32.mxu0 0.0
        %2033 = vmatmul.mubr.f32.gmra.mrb[0].mxu0 %v1913
        %v2034 = vpop.f32.mrb[0].mxu0
        %v2035 = vadd.f32 %v1946, %v2034
        %v2036 = vpop.f32.mrb[0].mxu0
        %2037 = vmatprep.mubr.f32.mxu0 0.0
        %2038 = vmatmul.mubr.f32.gmra.mrb[0].mxu0 %v1914
        %v2039 = vpop.f32.mrb[0].mxu0
        %v2040 = vadd.f32 %v1946, %v2039
        %v2041 = vpop.f32.mrb[0].mxu0
        %2042 = vmatprep.mubr.f32.mxu0 0.0
        %2043 = vmatmul.mubr.f32.gmra.mrb[0].mxu0 %v1915
        %v2044 = vpop.f32.mrb[0].mxu0
        %v2045 = vadd.f32 %v1946, %v2044
        %v2046 = vpop.f32.mrb[0].mxu0
        %2047 = vmatprep.mubr.f32.mxu0 0.0
        %2048 = vmatmul.mubr.f32.gmra.mrb[0].mxu0 %v1916
        %v2049 = vpop.f32.mrb[0].mxu0
        %v2050 = vadd.f32 %v1946, %v2049
        %v2051 = vpop.f32.mrb[0].mxu0
        %2052 = vmatprep.mubr.f32.mxu0 0.0
        %2053 = vmatmul.mubr.f32.gmra.mrb[0].mxu0 %v1917
        %v2054 = vpop.f32.mrb[0].mxu0
        %v2055 = vadd.f32 %v1946, %v2054
        %v2056 = vpop.f32.mrb[0].mxu0
        %2057 = vmatprep.mubr.f32.mxu0 0.0
        %2058 = vmatmul.mubr.f32.gmra.mrb[0].mxu0 %v1918
        %v2059 = vpop.f32.mrb[0].mxu0
        %v2060 = vadd.f32 %v1946, %v2059
        %v2061 = vpop.f32.mrb[0].mxu0
        %2062 = vmatprep.mubr.f32.mxu0 0.0
        %2063 = vmatmul.mubr.f32.gmra.mrb[0].mxu0 %v1919
        %v2064 = vpop.f32.mrb[0].mxu0
        %v2065 = vadd.f32 %v1946, %v2064
        %v2066 = vpop.f32.mrb[0].mxu0
        %2067 = vmatprep.mubr.f32.mxu0 0.0
        %2068 = vmatmul.mubr.f32.gmra.mrb[0].mxu0 %v1920
        %v2069 = vpop.f32.mrb[0].mxu0
        %v2070 = vadd.f32 %v1946, %v2069
        %v2071 = vpop.f32.mrb[0].mxu0
        %2072 = vmatprep.mubr.f32.mxu0 0.0
        %2073 = vmatmul.mubr.f32.gmra.mrb[0].mxu0 %v1921
        %v2074 = vpop.f32.mrb[0].mxu0
        %v2075 = vadd.f32 %v1946, %v2074
        %v2076 = vpop.f32.mrb[0].mxu0
        %2077 = vmatprep.mubr.f32.mxu0 0.0
        %2078 = vmatmul.mubr.f32.gmra.mrb[0].mxu0 %v1922
        %v2079 = vpop.f32.mrb[0].mxu0
        %v2080 = vadd.f32 %v1946, %v2079
        %v2081 = vpop.f32.mrb[0].mxu0
        %2082 = vmatprep.mubr.f32.mxu0 0.0
        %2083 = vmatmul.mubr.f32.gmra.mrb[0].mxu0 %v1923
        %v2084 = vpop.f32.mrb[0].mxu0
        %v2085 = vadd.f32 %v1946, %v2084
        %v2086 = vpop.f32.mrb[0].mxu0
        %2087 = vmatprep.mubr.f32.mxu0 0.0
        %2088 = vmatmul.mubr.f32.gmra.mrb[0].mxu0 %v1924
        %v2089 = vpop.f32.mrb[0].mxu0
        %v2090 = vadd.f32 %v1946, %v2089
        %v2091 = vpop.f32.mrb[0].mxu0
        %2092 = vdwg.mxu0
        %v2093 = vxor.u32 %v2015, 2147483648
        %v2094 = vxor.u32 %v2020, 2147483648
        %v2095 = vxor.u32 %v2025, 2147483648
        %v2096 = vxor.u32 %v2030, 2147483648
        %v2097 = vxor.u32 %v2035, 2147483648
        %v2098 = vxor.u32 %v2040, 2147483648
        %v2099 = vxor.u32 %v2045, 2147483648
        %v2100 = vxor.u32 %v2050, 2147483648
        %v2101 = vxor.u32 %v2055, 2147483648
        %v2102 = vxor.u32 %v2060, 2147483648
        %v2103 = vxor.u32 %v2065, 2147483648
        %v2104 = vxor.u32 %v2070, 2147483648
        %v2105 = vxor.u32 %v2075, 2147483648
        %v2106 = vxor.u32 %v2080, 2147483648
        %v2107 = vxor.u32 %v2085, 2147483648
        %v2108 = vxor.u32 %v2090, 2147483648
        %v2109 = vmul.f32 %v2093, 1.442695
        %v2110 = vpow.pop %v2109
        %v2111 = vmul.f32 %v2094, 1.442695
        %v2112 = vpow.pop %v2111
        %v2113 = vmul.f32 %v2095, 1.442695
        %v2114 = vpow.pop %v2113
        %v2115 = vmul.f32 %v2096, 1.442695
        %v2116 = vpow.pop %v2115
        %v2117 = vmul.f32 %v2097, 1.442695
        %v2118 = vpow.pop %v2117
        %v2119 = vmul.f32 %v2098, 1.442695
        %v2120 = vpow.pop %v2119
        %v2121 = vmul.f32 %v2099, 1.442695
        %v2122 = vpow.pop %v2121
        %v2123 = vmul.f32 %v2100, 1.442695
        %v2124 = vpow.pop %v2123
        %v2125 = vmul.f32 %v2101, 1.442695
        %v2126 = vpow.pop %v2125
        %v2127 = vmul.f32 %v2102, 1.442695
        %v2128 = vpow.pop %v2127
        %v2129 = vmul.f32 %v2103, 1.442695
        %v2130 = vpow.pop %v2129
        %v2131 = vmul.f32 %v2104, 1.442695
        %v2132 = vpow.pop %v2131
        %v2133 = vmul.f32 %v2105, 1.442695
        %v2134 = vpow.pop %v2133
        %v2135 = vmul.f32 %v2106, 1.442695
        %v2136 = vpow.pop %v2135
        %v2137 = vmul.f32 %v2107, 1.442695
        %v2138 = vpow.pop %v2137
        %v2139 = vmul.f32 %v2108, 1.442695
        %v2140 = vpow.pop %v2139
        %v2141 = vadd.f32 %v2110, 1.0
        %v2142 = vadd.f32 %v2112, 1.0
        %v2143 = vadd.f32 %v2114, 1.0
        %v2144 = vadd.f32 %v2116, 1.0
        %v2145 = vadd.f32 %v2118, 1.0
        %v2146 = vadd.f32 %v2120, 1.0
        %v2147 = vadd.f32 %v2122, 1.0
        %v2148 = vadd.f32 %v2124, 1.0
        %v2149 = vadd.f32 %v2126, 1.0
        %v2150 = vadd.f32 %v2128, 1.0
        %v2151 = vadd.f32 %v2130, 1.0
        %v2152 = vadd.f32 %v2132, 1.0
        %v2153 = vadd.f32 %v2134, 1.0
        %v2154 = vadd.f32 %v2136, 1.0
        %v2155 = vadd.f32 %v2138, 1.0
        %v2156 = vadd.f32 %v2140, 1.0
        %v2157 = vrcp.pop %v2141
        %v2158 = vmul.f32 1.0, %v2157
        %v2159 = vrcp.pop %v2142
        %v2160 = vmul.f32 1.0, %v2159
        %v2161 = vrcp.pop %v2143
        %v2162 = vmul.f32 1.0, %v2161
        %v2163 = vrcp.pop %v2144
        %v2164 = vmul.f32 1.0, %v2163
        %v2165 = vrcp.pop %v2145
        %v2166 = vmul.f32 1.0, %v2165
        %v2167 = vrcp.pop %v2146
        %v2168 = vmul.f32 1.0, %v2167
        %v2169 = vrcp.pop %v2147
        %v2170 = vmul.f32 1.0, %v2169
        %v2171 = vrcp.pop %v2148
        %v2172 = vmul.f32 1.0, %v2171
        %v2173 = vrcp.pop %v2149
        %v2174 = vmul.f32 1.0, %v2173
        %v2175 = vrcp.pop %v2150
        %v2176 = vmul.f32 1.0, %v2175
        %v2177 = vrcp.pop %v2151
        %v2178 = vmul.f32 1.0, %v2177
        %v2179 = vrcp.pop %v2152
        %v2180 = vmul.f32 1.0, %v2179
        %v2181 = vrcp.pop %v2153
        %v2182 = vmul.f32 1.0, %v2181
        %v2183 = vrcp.pop %v2154
        %v2184 = vmul.f32 1.0, %v2183
        %v2185 = vrcp.pop %v2155
        %v2186 = vmul.f32 1.0, %v2185
        %v2187 = vrcp.pop %v2156
        %v2188 = vmul.f32 1.0, %v2187
        %v2189 = vmul.f32 %v2015, %v2158
        %v2190 = vmul.f32 %v2020, %v2160
        %v2191 = vmul.f32 %v2025, %v2162
        %v2192 = vmul.f32 %v2030, %v2164
        %v2193 = vmul.f32 %v2035, %v2166
        %v2194 = vmul.f32 %v2040, %v2168
        %v2195 = vmul.f32 %v2045, %v2170
        %v2196 = vmul.f32 %v2050, %v2172
        %v2197 = vmul.f32 %v2055, %v2174
        %v2198 = vmul.f32 %v2060, %v2176
        %v2199 = vmul.f32 %v2065, %v2178
        %v2200 = vmul.f32 %v2070, %v2180
        %v2201 = vmul.f32 %v2075, %v2182
        %v2202 = vmul.f32 %v2080, %v2184
        %v2203 = vmul.f32 %v2085, %v2186
        %v2204 = vmul.f32 %v2090, %v2188
        %v2205 = vld [vmem:[%s11] sm:$0x1]
        %v2207 = vlaneseq
        %v2208 = vshrl.u32 %v2207, 7
        %v2209 = vsub.s32 0, %v2208
        %v2210 = vrot.slane %v2205, %v2209
        %v2212 = vmul.f32 %v2189, %v2210
        %v2213 = vmul.f32 %v2190, %v2210
        %v2214 = vmul.f32 %v2191, %v2210
        %v2215 = vmul.f32 %v2192, %v2210
        %v2216 = vmul.f32 %v2193, %v2210
        %v2217 = vmul.f32 %v2194, %v2210
        %v2218 = vmul.f32 %v2195, %v2210
        %v2219 = vmul.f32 %v2196, %v2210
        %v2220 = vmul.f32 %v2197, %v2210
        %v2221 = vmul.f32 %v2198, %v2210
        %v2222 = vmul.f32 %v2199, %v2210
        %v2223 = vmul.f32 %v2200, %v2210
        %v2224 = vmul.f32 %v2201, %v2210
        %v2225 = vmul.f32 %v2202, %v2210
        %v2226 = vmul.f32 %v2203, %v2210
        %v2227 = vmul.f32 %v2204, %v2210
        %2228 = vadd.xlane.f32.xlu0 %v2212
        %v2229 = vpop.xlane.xlu0 %2228
        %2230 = vadd.xlane.f32.xlu0 %v2213
        %v2231 = vpop.xlane.xlu0 %2230
        %2232 = vadd.xlane.f32.xlu0 %v2214
        %v2233 = vpop.xlane.xlu0 %2232
        %2234 = vadd.xlane.f32.xlu0 %v2215
        %v2235 = vpop.xlane.xlu0 %2234
        %2236 = vadd.xlane.f32.xlu0 %v2216
        %v2237 = vpop.xlane.xlu0 %2236
        %2238 = vadd.xlane.f32.xlu0 %v2217
        %v2239 = vpop.xlane.xlu0 %2238
        %2240 = vadd.xlane.f32.xlu0 %v2218
        %v2241 = vpop.xlane.xlu0 %2240
        %2242 = vadd.xlane.f32.xlu0 %v2219
        %v2243 = vpop.xlane.xlu0 %2242
        %2244 = vadd.xlane.f32.xlu0 %v2220
        %v2245 = vpop.xlane.xlu0 %2244
        %2246 = vadd.xlane.f32.xlu0 %v2221
        %v2247 = vpop.xlane.xlu0 %2246
        %2248 = vadd.xlane.f32.xlu0 %v2222
        %v2249 = vpop.xlane.xlu0 %2248
        %2250 = vadd.xlane.f32.xlu0 %v2223
        %v2251 = vpop.xlane.xlu0 %2250
        %2252 = vadd.xlane.f32.xlu0 %v2224
        %v2253 = vpop.xlane.xlu0 %2252
        %2254 = vadd.xlane.f32.xlu0 %v2225
        %v2255 = vpop.xlane.xlu0 %2254
        %2256 = vadd.xlane.f32.xlu0 %v2226
        %v2257 = vpop.xlane.xlu0 %2256
        %2258 = vadd.xlane.f32.xlu0 %v2227
        %v2259 = vpop.xlane.xlu0 %2258
        %v2260 = vmul.f32 %v1354, %v2229
        %v2261 = vmul.f32 %v1360, %v2231
        %v2262 = vmul.f32 %v1366, %v2233
        %v2263 = vmul.f32 %v1372, %v2235
        %v2264 = vmul.f32 %v1378, %v2237
        %v2265 = vmul.f32 %v1384, %v2239
        %v2266 = vmul.f32 %v1390, %v2241
        %v2267 = vmul.f32 %v1396, %v2243
        %v2268 = vmul.f32 %v1402, %v2245
        %v2269 = vmul.f32 %v1408, %v2247
        %v2270 = vmul.f32 %v1414, %v2249
        %v2271 = vmul.f32 %v1420, %v2251
        %v2272 = vmul.f32 %v1426, %v2253
        %v2273 = vmul.f32 %v1432, %v2255
        %v2274 = vmul.f32 %v1438, %v2257
        %v2275 = vmul.f32 %v1444, %v2259
        %v2276 = vld [vmem:[#allocation5] sm:$0xff]
        %v2277 = vld [vmem:[#allocation5 + $0x8] sm:$0xff]
        %v2278 = vld [vmem:[#allocation5 + $0x10] sm:$0xff]
        %v2279 = vld [vmem:[#allocation5 + $0x18] sm:$0xff]
        %2280 = vxpose.xlu0.b32.start [1/16] %v907, 128
        %2281 = vxpose.xlu0.b32.cont [2/16] %v908, 128
        %2282 = vxpose.xlu0.b32.cont [3/16] %v909, 128
        %2283 = vxpose.xlu0.b32.cont [4/16] %v910, 128
        %2284 = vxpose.xlu0.b32.cont [5/16] %v911, 128
        %2285 = vxpose.xlu0.b32.cont [6/16] %v912, 128
        %2286 = vxpose.xlu0.b32.cont [7/16] %v913, 128
        %2287 = vxpose.xlu0.b32.cont [8/16] %v914, 128
        %2288 = vxpose.xlu0.b32.cont [9/16] %v915, 128
        %2289 = vxpose.xlu0.b32.cont [10/16] %v916, 128
        %2290 = vxpose.xlu0.b32.cont [11/16] %v917, 128
        %2291 = vxpose.xlu0.b32.cont [12/16] %v918, 128
        %2292 = vxpose.xlu0.b32.cont [13/16] %v919, 128
        %2293 = vxpose.xlu0.b32.cont [14/16] %v920, 128
        %2294 = vxpose.xlu0.b32.cont [15/16] %v921, 128
        %2295 = vxpose.xlu0.b32.end [16/16] %v922, 128
        %v2296 = vpop.trf.xlu0
        %v2297 = vpop.trf.xlu0
        %v2298 = vpop.trf.xlu0
        %v2299 = vpop.trf.xlu0
        %v2300 = vpop.trf.xlu0
        %v2301 = vpop.trf.xlu0
        %v2302 = vpop.trf.xlu0
        %v2303 = vpop.trf.xlu0
        %v2304 = vpop.trf.xlu0
        %v2305 = vpop.trf.xlu0
        %v2306 = vpop.trf.xlu0
        %v2307 = vpop.trf.xlu0
        %v2308 = vpop.trf.xlu0
        %v2309 = vpop.trf.xlu0
        %v2310 = vpop.trf.xlu0
        %v2311 = vpop.trf.xlu0
        %2312 = vmatprep.subr.mxu0 %v2260
        %2313 = vmatpush1.msra.mxu0 %v1909
        %2314 = vmatprep.subr.mxu0 %v2261
        %2315 = vmatpush1.msra.mxu0 %v1910
        %2316 = vmatprep.subr.mxu0 %v2262
        %2317 = vmatpush1.msra.mxu0 %v1911
        %2318 = vmatprep.subr.mxu0 %v2263
        %2319 = vmatpush1.msra.mxu0 %v1912
        %2320 = vmatprep.subr.mxu0 %v2264
        %2321 = vmatpush1.msra.mxu0 %v1913
        %2322 = vmatprep.subr.mxu0 %v2265
        %2323 = vmatpush1.msra.mxu0 %v1914
        %2324 = vmatprep.subr.mxu0 %v2266
        %2325 = vmatpush1.msra.mxu0 %v1915
        %2326 = vmatprep.subr.mxu0 %v2267
        %2327 = vmatpush1.msra.mxu0 %v1916
        %2328 = vmatprep.subr.mxu0 %v2268
        %2329 = vmatpush1.msra.mxu0 %v1917
        %2330 = vmatprep.subr.mxu0 %v2269
        %2331 = vmatpush1.msra.mxu0 %v1918
        %2332 = vmatprep.subr.mxu0 %v2270
        %2333 = vmatpush1.msra.mxu0 %v1919
        %2334 = vmatprep.subr.mxu0 %v2271
        %2335 = vmatpush1.msra.mxu0 %v1920
        %2336 = vmatprep.subr.mxu0 %v2272
        %2337 = vmatpush1.msra.mxu0 %v1921
        %2338 = vmatprep.subr.mxu0 %v2273
        %2339 = vmatpush1.msra.mxu0 %v1922
        %2340 = vmatprep.subr.mxu0 %v2274
        %2341 = vmatpush1.msra.mxu0 %v1923
        %2342 = vmatprep.subr.mxu0 %v2275
        %2343 = vmatpush1.msra.mxu0 %v1924
        %2344 = vmatprep.subr.mxu0 0.0
        %2345 = vmatpush1.msra.mxu0 0.0
        %2346 = vmatprep.subr.mxu0 0.0
        %2347 = vmatpush1.msra.mxu0 0.0
        %2348 = vmatprep.subr.mxu0 0.0
        %2349 = vmatpush1.msra.mxu0 0.0
        %2350 = vmatprep.subr.mxu0 0.0
        %2351 = vmatpush1.msra.mxu0 0.0
        %2352 = vmatprep.subr.mxu0 0.0
        %2353 = vmatpush1.msra.mxu0 0.0
        %2354 = vmatprep.subr.mxu0 0.0
        %2355 = vmatpush1.msra.mxu0 0.0
        %2356 = vmatprep.subr.mxu0 0.0
        %2357 = vmatpush1.msra.mxu0 0.0
        %2358 = vmatprep.subr.mxu0 0.0
        %2359 = vmatpush1.msra.mxu0 0.0
        %2360 = vmatprep.subr.mxu0 0.0
        %2361 = vmatpush1.msra.mxu0 0.0
        %2362 = vmatprep.subr.mxu0 0.0
        %2363 = vmatpush1.msra.mxu0 0.0
        %2364 = vmatprep.subr.mxu0 0.0
        %2365 = vmatpush1.msra.mxu0 0.0
        %2366 = vmatprep.subr.mxu0 0.0
        %2367 = vmatpush1.msra.mxu0 0.0
        %2368 = vmatprep.subr.mxu0 0.0
        %2369 = vmatpush1.msra.mxu0 0.0
        %2370 = vmatprep.subr.mxu0 0.0
        %2371 = vmatpush1.msra.mxu0 0.0
        %2372 = vmatprep.subr.mxu0 0.0
        %2373 = vmatpush1.msra.mxu0 0.0
        %2374 = vmatprep.subr.mxu0 0.0
        %2375 = vmatpush1.msra.mxu0 0.0
        %2376 = vmatprep.mubr.f32.mxu0 0.0
        %2377 = vmatmul.mubr.f32.gmra.mrb[0].mxu0 %v2296
        %v2378 = vpop.f32.mrb[0].mxu0
        %v2379 = vadd.f32 0.0, %v2378
        %v2380 = vpop.f32.mrb[0].mxu0
        %v2381 = vadd.f32 0.0, %v2380
        %2382 = vmatprep.mubr.f32.mxu0 0.0
        %2383 = vmatmul.mubr.f32.gmra.mrb[0].mxu0 %v2297
        %v2384 = vpop.f32.mrb[0].mxu0
        %v2385 = vadd.f32 0.0, %v2384
        %v2386 = vpop.f32.mrb[0].mxu0
        %v2387 = vadd.f32 0.0, %v2386
        %2388 = vdwg.mxu0
        %v2389 = vadd.f32 %v2276, %v2379
        %v2390 = vadd.f32 %v2277, %v2381
        %v2391 = vadd.f32 %v2278, %v2385
        %v2392 = vadd.f32 %v2279, %v2387
        %2393 = vst [vmem:[#allocation5] sm:$0xff] %v2389
        %2394 = vst [vmem:[#allocation5 + $0x8] sm:$0xff] %v2390
        %2395 = vst [vmem:[#allocation5 + $0x10] sm:$0xff] %v2391
        %2396 = vst [vmem:[#allocation5 + $0x18] sm:$0xff] %v2392
        %p2397 = scmp.eq.s32.totalorder %s33, 1
        // Predicated region
        $region101: #{tpu_custom_call.1} parent=79 // pred_check
          %p2398 = pneg %p2397
        $region102: #{tpu_custom_call.1} parent=79 // pred_check_branch
          %2400 = sbr.rel (%p2398) target = $region104
        $region103: #{tpu_custom_call.1} parent=79 // pred_region
          %v2401 = vld [vmem:[#allocation5] sm:$0xff]
          %v2402 = vld [vmem:[#allocation5 + $0x8] sm:$0xff]
          %v2403 = vld [vmem:[#allocation5 + $0x10] sm:$0xff]
          %v2404 = vld [vmem:[#allocation5 + $0x18] sm:$0xff]
          %v2405 = vld [vmem:[#allocation6] sm:$0xff]
          %v2406 = vld [vmem:[#allocation6 + $0x8] sm:$0xff]
          %v2407 = vld [vmem:[%s3] sm:$0xff]
          %v2408 = vld [vmem:[%s3 + $0x8] sm:$0xff]
          %2410 = vset.pattern.permute.xlu0 0
          %2411 = vperm.xlu0 %2410, %v2407
          %v2412 = vpop.permute.xlu0 %2411
          %2415 = vset.pattern.permute.xlu0 0
          %2416 = vperm.xlu0 %2415, %v2408
          %v2417 = vpop.permute.xlu0 %2416
          %v2419 = vmul.f32 %v2402, %v2412
          %v2420 = vmul.f32 %v2404, %v2417
          %v2421 = vadd.f32 %v2405, %v2419
          %v2422 = vadd.f32 %v2406, %v2420
          %2423 = vst [vmem:[#allocation15] sm:$0xff] %v2421
          %2424 = vst [vmem:[#allocation15 + $0x8] sm:$0xff] %v2422
          %v2425 = vld [vmem:[#allocation4] sm:$0xff]
          %v2426 = vld [vmem:[#allocation4 + $0x8] sm:$0xff]
          %v2427 = vld [vmem:[#allocation11] sm:$0xff]
          %v2428 = vld [vmem:[#allocation11 + $0x8] sm:$0xff]
          %v2429 = vld [vmem:[#allocation11 + $0x10] sm:$0xff]
          %v2430 = vld [vmem:[#allocation11 + $0x18] sm:$0xff]
          %v2431 = vld [vmem:[#allocation11 + $0x20] sm:$0xff]
          %v2432 = vld [vmem:[#allocation11 + $0x28] sm:$0xff]
          %v2433 = vld [vmem:[#allocation11 + $0x30] sm:$0xff]
          %v2434 = vld [vmem:[#allocation11 + $0x38] sm:$0xff]
          %v2435 = vld [vmem:[#allocation11 + $0x40] sm:$0xff]
          %v2436 = vld [vmem:[#allocation11 + $0x48] sm:$0xff]
          %v2437 = vld [vmem:[#allocation11 + $0x50] sm:$0xff]
          %v2438 = vld [vmem:[#allocation11 + $0x58] sm:$0xff]
          %v2439 = vld [vmem:[#allocation11 + $0x60] sm:$0xff]
          %v2440 = vld [vmem:[#allocation11 + $0x68] sm:$0xff]
          %v2441 = vld [vmem:[#allocation11 + $0x70] sm:$0xff]
          %v2442 = vld [vmem:[#allocation11 + $0x78] sm:$0xff]
          %2443 = vmatprep.subr.mxu0 0.0
          %2444 = vmatpush1.msra.mxu0 %v2427
          %2445 = vmatprep.subr.mxu0 0.0
          %2446 = vmatpush1.msra.mxu0 %v2428
          %2447 = vmatprep.subr.mxu0 0.0
          %2448 = vmatpush1.msra.mxu0 %v2429
          %2449 = vmatprep.subr.mxu0 0.0
          %2450 = vmatpush1.msra.mxu0 %v2430
          %2451 = vmatprep.subr.mxu0 0.0
          %2452 = vmatpush1.msra.mxu0 %v2431
          %2453 = vmatprep.subr.mxu0 0.0
          %2454 = vmatpush1.msra.mxu0 %v2432
          %2455 = vmatprep.subr.mxu0 0.0
          %2456 = vmatpush1.msra.mxu0 %v2433
          %2457 = vmatprep.subr.mxu0 0.0
          %2458 = vmatpush1.msra.mxu0 %v2434
          %2459 = vmatprep.subr.mxu0 0.0
          %2460 = vmatpush1.msra.mxu0 %v2435
          %2461 = vmatprep.subr.mxu0 0.0
          %2462 = vmatpush1.msra.mxu0 %v2436
          %2463 = vmatprep.subr.mxu0 0.0
          %2464 = vmatpush1.msra.mxu0 %v2437
          %2465 = vmatprep.subr.mxu0 0.0
          %2466 = vmatpush1.msra.mxu0 %v2438
          %2467 = vmatprep.subr.mxu0 0.0
          %2468 = vmatpush1.msra.mxu0 %v2439
          %2469 = vmatprep.subr.mxu0 0.0
          %2470 = vmatpush1.msra.mxu0 %v2440
          %2471 = vmatprep.subr.mxu0 0.0
          %2472 = vmatpush1.msra.mxu0 %v2441
          %2473 = vmatprep.subr.mxu0 0.0
          %2474 = vmatpush1.msra.mxu0 %v2442
          %2475 = vmatprep.subr.mxu0 0.0
          %2476 = vmatpush1.msra.mxu0 0.0
          %2477 = vmatprep.subr.mxu0 0.0
          %2478 = vmatpush1.msra.mxu0 0.0
          %2479 = vmatprep.subr.mxu0 0.0
          %2480 = vmatpush1.msra.mxu0 0.0
          %2481 = vmatprep.subr.mxu0 0.0
          %2482 = vmatpush1.msra.mxu0 0.0
          %2483 = vmatprep.subr.mxu0 0.0
          %2484 = vmatpush1.msra.mxu0 0.0
          %2485 = vmatprep.subr.mxu0 0.0
          %2486 = vmatpush1.msra.mxu0 0.0
          %2487 = vmatprep.subr.mxu0 0.0
          %2488 = vmatpush1.msra.mxu0 0.0
          %2489 = vmatprep.subr.mxu0 0.0
          %2490 = vmatpush1.msra.mxu0 0.0
          %2491 = vmatprep.subr.mxu0 0.0
          %2492 = vmatpush1.msra.mxu0 0.0
          %2493 = vmatprep.subr.mxu0 0.0
          %2494 = vmatpush1.msra.mxu0 0.0
          %2495 = vmatprep.subr.mxu0 0.0
          %2496 = vmatpush1.msra.mxu0 0.0
          %2497 = vmatprep.subr.mxu0 0.0
          %2498 = vmatpush1.msra.mxu0 0.0
          %2499 = vmatprep.subr.mxu0 0.0
          %2500 = vmatpush1.msra.mxu0 0.0
          %2501 = vmatprep.subr.mxu0 0.0
          %2502 = vmatpush1.msra.mxu0 0.0
          %2503 = vmatprep.subr.mxu0 0.0
          %2504 = vmatpush1.msra.mxu0 0.0
          %2505 = vmatprep.subr.mxu0 0.0
          %2506 = vmatpush1.msra.mxu0 0.0
          %2507 = vmatprep.mubr.f32.mxu0 0.0
          %2508 = vmatmul.mubr.f32.gmra.mrb[0].mxu0 %v2401
          %v2509 = vpop.f32.mrb[0].mxu0
          %v2510 = vadd.f32 0.0, %v2509
          %v2511 = vpop.f32.mrb[0].mxu0
          %2512 = vmatprep.mubr.f32.mxu0 0.0
          %2513 = vmatmul.mubr.f32.gmra.mrb[0].mxu0 %v2403
          %v2514 = vpop.f32.mrb[0].mxu0
          %v2515 = vadd.f32 0.0, %v2514
          %v2516 = vpop.f32.mrb[0].mxu0
          %2517 = vdwg.mxu0
          %v2518 = vadd.f32 %v2425, %v2510
          %v2519 = vadd.f32 %v2426, %v2515
          %v2520 = vxor.u32 %v2518, 2147483648
          %v2521 = vxor.u32 %v2519, 2147483648
          %v2522 = vmul.f32 %v2520, 1.442695
          %v2523 = vpow.pop %v2522
          %v2524 = vmul.f32 %v2521, 1.442695
          %v2525 = vpow.pop %v2524
          %v2526 = vadd.f32 %v2523, 1.0
          %v2527 = vadd.f32 %v2525, 1.0
          %v2528 = vrcp.pop %v2526
          %v2529 = vmul.f32 1.0, %v2528
          %v2530 = vrcp.pop %v2527
          %v2531 = vmul.f32 1.0, %v2530
          %v2532 = vmul.f32 %v2518, %v2529
          %v2533 = vmul.f32 %v2519, %v2531
          %v2534 = vld [vmem:[#allocation12] sm:$0xff]
          %v2535 = vld [vmem:[#allocation12 + $0x8] sm:$0xff]
          %v2536 = vld [vmem:[#allocation12 + $0x10] sm:$0xff]
          %v2537 = vld [vmem:[#allocation12 + $0x18] sm:$0xff]
          %v2538 = vld [vmem:[#allocation12 + $0x20] sm:$0xff]
          %v2539 = vld [vmem:[#allocation12 + $0x28] sm:$0xff]
          %v2540 = vld [vmem:[#allocation12 + $0x30] sm:$0xff]
          %v2541 = vld [vmem:[#allocation12 + $0x38] sm:$0xff]
          %v2542 = vld [vmem:[#allocation12 + $0x40] sm:$0xff]
          %v2543 = vld [vmem:[#allocation12 + $0x48] sm:$0xff]
          %v2544 = vld [vmem:[#allocation12 + $0x50] sm:$0xff]
          %v2545 = vld [vmem:[#allocation12 + $0x58] sm:$0xff]
          %v2546 = vld [vmem:[#allocation12 + $0x60] sm:$0xff]
          %v2547 = vld [vmem:[#allocation12 + $0x68] sm:$0xff]
          %v2548 = vld [vmem:[#allocation12 + $0x70] sm:$0xff]
          %v2549 = vld [vmem:[#allocation12 + $0x78] sm:$0xff]
          %v2550 = vld [vmem:[%s14] sm:$0x1]
          %v2552 = vlaneseq
          %v2553 = vshrl.u32 %v2552, 7
          %v2554 = vsub.s32 0, %v2553
          %v2555 = vrot.slane %v2550, %v2554
          %2557 = vmatprep.subr.mxu0 0.0
          %2558 = vmatpush1.msra.mxu0 %v2534
          %2559 = vmatprep.subr.mxu0 0.0
          %2560 = vmatpush1.msra.mxu0 %v2535
          %2561 = vmatprep.subr.mxu0 0.0
          %2562 = vmatpush1.msra.mxu0 %v2536
          %2563 = vmatprep.subr.mxu0 0.0
          %2564 = vmatpush1.msra.mxu0 %v2537
          %2565 = vmatprep.subr.mxu0 0.0
          %2566 = vmatpush1.msra.mxu0 %v2538
          %2567 = vmatprep.subr.mxu0 0.0
          %2568 = vmatpush1.msra.mxu0 %v2539
          %2569 = vmatprep.subr.mxu0 0.0
          %2570 = vmatpush1.msra.mxu0 %v2540
          %2571 = vmatprep.subr.mxu0 0.0
          %2572 = vmatpush1.msra.mxu0 %v2541
          %2573 = vmatprep.subr.mxu0 0.0
          %2574 = vmatpush1.msra.mxu0 %v2542
          %2575 = vmatprep.subr.mxu0 0.0
          %2576 = vmatpush1.msra.mxu0 %v2543
          %2577 = vmatprep.subr.mxu0 0.0
          %2578 = vmatpush1.msra.mxu0 %v2544
          %2579 = vmatprep.subr.mxu0 0.0
          %2580 = vmatpush1.msra.mxu0 %v2545
          %2581 = vmatprep.subr.mxu0 0.0
          %2582 = vmatpush1.msra.mxu0 %v2546
          %2583 = vmatprep.subr.mxu0 0.0
          %2584 = vmatpush1.msra.mxu0 %v2547
          %2585 = vmatprep.subr.mxu0 0.0
          %2586 = vmatpush1.msra.mxu0 %v2548
          %2587 = vmatprep.subr.mxu0 0.0
          %2588 = vmatpush1.msra.mxu0 %v2549
          %2589 = vmatprep.subr.mxu0 0.0
          %2590 = vmatpush1.msra.mxu0 0.0
          %2591 = vmatprep.subr.mxu0 0.0
          %2592 = vmatpush1.msra.mxu0 0.0
          %2593 = vmatprep.subr.mxu0 0.0
          %2594 = vmatpush1.msra.mxu0 0.0
          %2595 = vmatprep.subr.mxu0 0.0
          %2596 = vmatpush1.msra.mxu0 0.0
          %2597 = vmatprep.subr.mxu0 0.0
          %2598 = vmatpush1.msra.mxu0 0.0
          %2599 = vmatprep.subr.mxu0 0.0
          %2600 = vmatpush1.msra.mxu0 0.0
          %2601 = vmatprep.subr.mxu0 0.0
          %2602 = vmatpush1.msra.mxu0 0.0
          %2603 = vmatprep.subr.mxu0 0.0
          %2604 = vmatpush1.msra.mxu0 0.0
          %2605 = vmatprep.subr.mxu0 0.0
          %2606 = vmatpush1.msra.mxu0 0.0
          %2607 = vmatprep.subr.mxu0 0.0
          %2608 = vmatpush1.msra.mxu0 0.0
          %2609 = vmatprep.subr.mxu0 0.0
          %2610 = vmatpush1.msra.mxu0 0.0
          %2611 = vmatprep.subr.mxu0 0.0
          %2612 = vmatpush1.msra.mxu0 0.0
          %2613 = vmatprep.subr.mxu0 0.0
          %2614 = vmatpush1.msra.mxu0 0.0
          %2615 = vmatprep.subr.mxu0 0.0
          %2616 = vmatpush1.msra.mxu0 0.0
          %2617 = vmatprep.subr.mxu0 0.0
          %2618 = vmatpush1.msra.mxu0 0.0
          %2619 = vmatprep.subr.mxu0 0.0
          %2620 = vmatpush1.msra.mxu0 0.0
          %2621 = vmatprep.mubr.f32.mxu0 0.0
          %2622 = vmatmul.mubr.f32.gmra.mrb[0].mxu0 %v2532
          %v2623 = vpop.f32.mrb[0].mxu0
          %v2624 = vadd.f32 %v2555, %v2623
          %v2625 = vpop.f32.mrb[0].mxu0
          %2626 = vmatprep.mubr.f32.mxu0 0.0
          %2627 = vmatmul.mubr.f32.gmra.mrb[0].mxu0 %v2533
          %v2628 = vpop.f32.mrb[0].mxu0
          %v2629 = vadd.f32 %v2555, %v2628
          %v2630 = vpop.f32.mrb[0].mxu0
          %2631 = vdwg.mxu0
          %v2632 = vld [vmem:[%s1] sm:$0xff]
          %v2633 = vld [vmem:[%s1 + $0x8] sm:$0xff]
          %v2634 = vadd.f32 %v2632, %v2624
          %v2635 = vadd.f32 %v2633, %v2629
          %2636 = vst [vmem:[#allocation14] sm:$0xff] %v2634
          %2637 = vst [vmem:[#allocation14 + $0x8] sm:$0xff] %v2635
        $region104: #{tpu_custom_call.1} parent=79 // pred_fallthru
          _
        // Predicated region
        $region105: #{tpu_custom_call.1} parent=79 // pred_check
          %p2638 = pneg %p366
        $region106: #{tpu_custom_call.1} parent=79 // pred_check_branch
          %2640 = sbr.rel (%p2638) target = $region108
        $region107: #{tpu_custom_call.1} parent=79 // pred_region
          %s2642 = ssub.s32 256, 256
          %2643 = vsyncadd [#allocation8], %s2642
          %s2644 = sshll.u32 [#allocation14], 4
          %s2645 = int_to_ptr.vmem [resolvable:$true] %s2644
          %2650 = dma.vmem_to_hbm [thread:$0]  %s2645, 256, %s15, [#allocation8], 128, 128, 8
        $region108: #{tpu_custom_call.1} parent=79 // pred_fallthru
          _
        // Predicated region
        $region109: #{tpu_custom_call.1} parent=79 // pred_check
          %p2651 = pneg %p387
        $region110: #{tpu_custom_call.1} parent=79 // pred_check_branch
          %2653 = sbr.rel (%p2651) target = $region112
        $region111: #{tpu_custom_call.1} parent=79 // pred_region
          %s2655 = ssub.s32 256, 256
          %2656 = vsyncadd [#allocation16], %s2655
          %s2657 = sshll.u32 [#allocation15], 4
          %s2658 = int_to_ptr.vmem [resolvable:$true] %s2657
          %2663 = dma.vmem_to_hbm [thread:$0]  %s2658, 256, %s16, [#allocation16], 128, 128, 8
        $region112: #{tpu_custom_call.1} parent=79 // pred_fallthru
          _
        // Predicated region
        $region113: #{tpu_custom_call.1} parent=79 // pred_check
          %p2664 = pneg %p366
        $region114: #{tpu_custom_call.1} parent=79 // pred_check_branch
          %2666 = sbr.rel (%p2664) target = $region116
        $region115: #{tpu_custom_call.1} parent=79 // pred_region
          %2667 = dma.done [#allocation8], 256
        $region116: #{tpu_custom_call.1} parent=79 // pred_fallthru
          _
        // Predicated region
        $region117: #{tpu_custom_call.1} parent=79 // pred_check
          %p2668 = pneg %p387
        $region118: #{tpu_custom_call.1} parent=79 // pred_check_branch
          %2670 = sbr.rel (%p2668) target = $region120
        $region119: #{tpu_custom_call.1} parent=79 // pred_region
          %2671 = dma.done [#allocation16], 256
        $region120: #{tpu_custom_call.1} parent=79 // pred_fallthru
          _
      $region80: #{tpu_custom_call.1} parent=5 // pred_fallthru
        _
      %p2672 = scmp.le.s32.totalorder 2, %s28
      // Predicated region
      $region121: #{tpu_custom_call.1} parent=5 // pred_check
        %p2673 = pneg %p2672
      $region122: #{tpu_custom_call.1} parent=5 // pred_check_branch
        %2675 = sbr.rel (%p2673) target = $region124
      $region123: #{tpu_custom_call.1} parent=5 // pred_region
        %s2676 = ssub.s32 %s28, 2
      $region124: #{tpu_custom_call.1} parent=5 // pred_fallthru
        _
    $region6: #{tpu_custom_call.1} parent=1 // loop_footer
      %s32 = sadd.s32 1, %s28
    $region7: #{tpu_custom_call.1} parent=1 // loop_footer_branch
      %27 = sbr.rel target = $region3
    $region8: #{tpu_custom_call.1} parent=1 // loop_exit
      _
    %2677 = vsyncpa [#allocation7], 1
    %s2678 = scalar_lea.sflag [#allocation7], 1
    %2679 = vsyncpa %s2678, 1
    %2680 = vsyncpa [#allocation10], 1
    %2681 = vsyncpa [#allocation13], 1
    %2682 = vsyncpa [#allocation8], 1
    %s2683 = scalar_lea.sflag [#allocation8], 1
    %2684 = vsyncpa %s2683, 1
    %2685 = vsyncpa [#allocation16], 1

</llo_original>
